<compile_context>
chip_gen: v7x
topology: tpu7x:2x2x1
jax: 0.10.0
libtpu: 0.0.40
codegen_flags: <defaults>
</compile_context>

<pallas_src>
import jax
import jax.numpy as jnp
from jax.experimental import pallas as pl
from jax.experimental.pallas import tpu as pltpu

# ---------------------------------------------------------------------------
# Model hyper-parameters (small demo sizes; d_model divisible by num_heads=8).
# ---------------------------------------------------------------------------
INPUT_SIZE = 16
OUTPUT_SIZE = 8
OUT_PAD = 128              # lane-dense padded fc2 output width
HIDDEN_SIZE = 128          # d_model
NUM_HEADS = 8              # numerically irrelevant: seq_len == 1 (see header)
FFN_SIZE = 2048            # nn.TransformerDecoderLayer default dim_feedforward
LN_EPS = 1e-5
BATCH = 256


def _layer_norm(x, gamma, beta):
    """PyTorch nn.LayerNorm over the last dim (biased variance, eps=1e-5), f32."""
    mean = jnp.mean(x, axis=-1, keepdims=True)
    var = jnp.mean(jnp.square(x - mean), axis=-1, keepdims=True)
    return (x - mean) * jax.lax.rsqrt(var + LN_EPS) * gamma + beta


def _mxu(a_f32, w_ref):
    """bf16 x bf16 MXU matmul with f32 accumulation."""
    return jnp.dot(a_f32.astype(jnp.bfloat16), w_ref[...],
                   preferred_element_type=jnp.float32)


# ---------------------------------------------------------------------------
# Kernel: one fused pass over a (tile, INPUT_SIZE) batch block.
# ---------------------------------------------------------------------------
def transformer_kernel(
    x_ref,                                   # (TB, I)       f32
    w1_ref,                                  # (I, H)        bf16  fc1
    wsa_ref,                                 # (H, H)        bf16  folded self-attn (Wv@Wo)
    wca_ref,                                 # (H, H)        bf16  folded cross-attn
    ffw1_ref,                                # (H, F)        bf16  linear1
    ffw2_ref,                                # (F, H)        bf16  linear2
    w2_ref,                                  # (H, OUT_PAD)  bf16  fc2 (zero padded)
    hv_ref,                                  # (10, H)       f32   packed bias / LN vectors
    ffb1_ref,                                # (1, F)        f32
    b2_ref,                                  # (1, OUT_PAD)  f32
    o_ref,                                   # (TB, OUT_PAD) f32
):
    hv = hv_ref[...]
    b1, b_sa, b_ca = hv[0:1, :], hv[1:2, :], hv[2:3, :]
    ln1_g, ln1_b = hv[3:4, :], hv[4:5, :]
    ln2_g, ln2_b = hv[5:6, :], hv[6:7, :]
    ff_b2 = hv[7:8, :]
    ln3_g, ln3_b = hv[8:9, :], hv[9:10, :]

    x = x_ref[...]

    # fc1: tgt == memory for the decoder layer
    h = _mxu(x, w1_ref) + b1                                   # (TB, H) f32

    # self-attention block (seq_len==1 => softmax==1; V-proj and out-proj folded)
    sa = _mxu(h, wsa_ref) + b_sa
    h1 = _layer_norm(h + sa, ln1_g, ln1_b)                     # norm1 (post-LN)

    # cross-attention block (memory == h)
    ca = _mxu(h, wca_ref) + b_ca
    h2 = _layer_norm(h1 + ca, ln2_g, ln2_b)                    # norm2

    # feed-forward block (ReLU; dropout == identity in eval)
    f = jnp.maximum(_mxu(h2, ffw1_ref) + ffb1_ref[...], 0.0)
    f = _mxu(f, ffw2_ref) + ff_b2
    h3 = _layer_norm(h2 + f, ln3_g, ln3_b)                     # norm3

    # fc2 (lane-dense padded output)
    o_ref[...] = (_mxu(h3, w2_ref) + b2_ref[...]).astype(o_ref.dtype)


# ---------------------------------------------------------------------------
# Wrapper
# ---------------------------------------------------------------------------
def _const_spec(shape):
    zeros = (0,) * len(shape)
    return pl.BlockSpec(shape, lambda i: zeros)   # weights resident across grid steps


def _batch_tile(B):
    # Fill MXU rows while keeping >=2 parallel grid tiles when possible
    # (v7x has 2 TensorCores; the parallel axis shards across them).
    if B % 256 == 0 and B // 256 >= 2:
        return 256
    if B % 128 == 0 and B // 128 >= 2:
        return 128
    return B


@jax.jit
def simple_transformer_forward(x, prep):
    B = x.shape[0]
    tile = _batch_tile(B)
    grid = (B // tile,)

    order = ["w1", "W_sa", "W_ca", "ff_w1", "ff_w2", "w2p", "hvecs", "ff_b1", "b2p"]
    arrs = [prep[k] for k in order]

    in_specs = [pl.BlockSpec((tile, INPUT_SIZE), lambda i: (i, 0))]
    in_specs += [_const_spec(a.shape) for a in arrs]
    out_spec = pl.BlockSpec((tile, OUT_PAD), lambda i: (i, 0))

    out_pad = pl.pallas_call(
        transformer_kernel,
        out_shape=jax.ShapeDtypeStruct((B, OUT_PAD), jnp.float32),
        grid_spec=pltpu.PrefetchScalarGridSpec(
            num_scalar_prefetch=0,
            grid=grid,
            in_specs=in_specs,
            out_specs=out_spec,
        ),
        compiler_params=pltpu.CompilerParams(
            dimension_semantics=("parallel",),
        ),
    )(x, *arrs)
    return out_pad[:, :OUTPUT_SIZE]


def prepare_params(p):
    """Fold attention projections (f32), pad fc2 to lane width, pack small
    vectors, cast weight matrices to bf16."""
    f32 = jnp.float32
    W_sa = p["sa_wv"] @ p["sa_wo"]                       # (H, H)
    b_sa = p["sa_bv"] @ p["sa_wo"] + p["sa_bo"]          # (1, H)
    W_ca = p["ca_wv"] @ p["ca_wo"]
    b_ca = p["ca_bv"] @ p["ca_wo"] + p["ca_bo"]

    w2p = jnp.zeros((HIDDEN_SIZE, OUT_PAD), f32).at[:, :OUTPUT_SIZE].set(p["w2"])
    b2p = jnp.zeros((1, OUT_PAD), f32).at[:, :OUTPUT_SIZE].set(p["b2"])

    hvecs = jnp.concatenate(
        [p["b1"], b_sa, b_ca,
         p["ln1_g"], p["ln1_b"],
         p["ln2_g"], p["ln2_b"],
         p["ff_b2"],
         p["ln3_g"], p["ln3_b"]], axis=0).astype(f32)    # (10, H)

    bf16 = lambda a: a.astype(jnp.bfloat16)
    return {
        "w1": bf16(p["w1"]),
        "W_sa": bf16(W_sa), "W_ca": bf16(W_ca),
        "ff_w1": bf16(p["ff_w1"]), "ff_w2": bf16(p["ff_w2"]),
        "w2p": bf16(w2p),
        "hvecs": hvecs,
        "ff_b1": p["ff_b1"].astype(f32),
        "b2p": b2p,
    }


def init_params(key):
    """Deterministic synthetic parameters (PyTorch Linear weights stored
    transposed to (in, out) so the kernel computes x @ W; biases as (1, out))."""
    keys = jax.random.split(key, 16)

    def w(k, shape, scale=0.02):
        return (scale * jax.random.normal(k, shape)).astype(jnp.float32)

    H, I, O, F = HIDDEN_SIZE, INPUT_SIZE, OUTPUT_SIZE, FFN_SIZE
    return {
        # fc1
        "w1": w(keys[0], (I, H)), "b1": w(keys[1], (1, H)),
        # self-attn (only the V slice of in_proj matters: seq_len == 1)
        "sa_wv": w(keys[2], (H, H)), "sa_bv": w(keys[3], (1, H)),
        "sa_wo": w(keys[4], (H, H)), "sa_bo": w(keys[5], (1, H)),
        "ln1_g": jnp.ones((1, H), jnp.float32), "ln1_b": jnp.zeros((1, H), jnp.float32),
        # cross-attn
        "ca_wv": w(keys[6], (H, H)), "ca_bv": w(keys[7], (1, H)),
        "ca_wo": w(keys[8], (H, H)), "ca_bo": w(keys[9], (1, H)),
        "ln2_g": jnp.ones((1, H), jnp.float32), "ln2_b": jnp.zeros((1, H), jnp.float32),
        # feed-forward
        "ff_w1": w(keys[10], (H, F)), "ff_b1": w(keys[11], (1, F)),
        "ff_w2": w(keys[12], (F, H)), "ff_b2": w(keys[13], (1, H)),
        "ln3_g": jnp.ones((1, H), jnp.float32), "ln3_b": jnp.zeros((1, H), jnp.float32),
        # fc2
        "w2": w(keys[14], (H, O)), "b2": w(keys[15], (1, O)),
    }


def reference_forward(x, p):
    """Plain-JAX f32 reference of the UNFOLDED math (validates both the
    attention fold and the bf16 weight cast inside the kernel)."""
    # TODO(synk): one-time cross-check against PyTorch nn.TransformerDecoderLayer
    # outputs (this reference encodes the same seq_len==1 / eval-dropout math).
    h = x @ p["w1"] + p["b1"]
    sa = (h @ p["sa_wv"] + p["sa_bv"]) @ p["sa_wo"] + p["sa_bo"]
    h1 = _layer_norm(h + sa, p["ln1_g"], p["ln1_b"])
    ca = (h @ p["ca_wv"] + p["ca_bv"]) @ p["ca_wo"] + p["ca_bo"]
    h2 = _layer_norm(h1 + ca, p["ln2_g"], p["ln2_b"])
    f = jnp.maximum(h2 @ p["ff_w1"] + p["ff_b1"], 0.0) @ p["ff_w2"] + p["ff_b2"]
    h3 = _layer_norm(h2 + f, p["ln3_g"], p["ln3_b"])
    return h3 @ p["w2"] + p["b2"]


if __name__ == "__main__":
    key = jax.random.PRNGKey(0)
    kx, kp = jax.random.split(key)
    x = jax.random.normal(kx, (BATCH, INPUT_SIZE), dtype=jnp.float32)
    params = init_params(kp)
    prep = prepare_params(params)

    out = jax.block_until_ready(simple_transformer_forward(x, prep))
    ref = reference_forward(x, params)

    assert out.shape == (BATCH, OUTPUT_SIZE)
    # bf16 weights/activations inside the kernel -> loosened tolerance vs f32 ref.
    assert jnp.allclose(out, ref, atol=3e-2, rtol=3e-2), float(jnp.max(jnp.abs(out - ref)))

    print("KERNEL_OK")
</pallas_src>

<mosaic_0001>
module attributes {stable_mosaic.version = 11 : i64} {
  func.func @transformer_kernel(%arg0: i32, %arg1: memref<128x16xf32, #tpu.memory_space<vmem>>, %arg2: memref<16x128xbf16, #tpu.memory_space<vmem>>, %arg3: memref<128x128xbf16, #tpu.memory_space<vmem>>, %arg4: memref<128x128xbf16, #tpu.memory_space<vmem>>, %arg5: memref<128x2048xbf16, #tpu.memory_space<vmem>>, %arg6: memref<2048x128xbf16, #tpu.memory_space<vmem>>, %arg7: memref<128x128xbf16, #tpu.memory_space<vmem>>, %arg8: memref<10x128xf32, #tpu.memory_space<vmem>>, %arg9: memref<1x2048xf32, #tpu.memory_space<vmem>>, %arg10: memref<1x128xf32, #tpu.memory_space<vmem>>, %arg11: memref<128x128xf32, #tpu.memory_space<vmem>>) attributes {dimension_semantics = [#tpu.dimension_semantics<parallel>], iteration_bounds = array<i64: 2>, scalar_prefetch = 0 : i64, scratch_operands = 0 : i64, tpu.core_type = #tpu.core_type<tc>, window_params = [{transform_indices = @transform_0, window_bounds = array<i64: 128, 16>}, {pipeline_mode = #tpu.pipeline_mode<synchronous>, transform_indices = @transform_1, window_bounds = array<i64: 16, 128>}, {pipeline_mode = #tpu.pipeline_mode<synchronous>, transform_indices = @transform_2, window_bounds = array<i64: 128, 128>}, {pipeline_mode = #tpu.pipeline_mode<synchronous>, transform_indices = @transform_3, window_bounds = array<i64: 128, 128>}, {pipeline_mode = #tpu.pipeline_mode<synchronous>, transform_indices = @transform_4, window_bounds = array<i64: 128, 2048>}, {pipeline_mode = #tpu.pipeline_mode<synchronous>, transform_indices = @transform_5, window_bounds = array<i64: 2048, 128>}, {pipeline_mode = #tpu.pipeline_mode<synchronous>, transform_indices = @transform_6, window_bounds = array<i64: 128, 128>}, {pipeline_mode = #tpu.pipeline_mode<synchronous>, transform_indices = @transform_7, window_bounds = array<i64: 10, 128>}, {pipeline_mode = #tpu.pipeline_mode<synchronous>, transform_indices = @transform_8, window_bounds = array<i64: 1, 2048>}, {pipeline_mode = #tpu.pipeline_mode<synchronous>, transform_indices = @transform_9, window_bounds = array<i64: 1, 128>}, {transform_indices = @transform_10, window_bounds = array<i64: 128, 128>}]} {
    %c0 = arith.constant 0 : index
    %c0_0 = arith.constant 0 : index
    %0 = vector.load %arg8[%c0, %c0_0] : memref<10x128xf32, #tpu.memory_space<vmem>>, vector<10x128xf32>
    %1 = vector.extract_strided_slice %0 {offsets = [0, 0], sizes = [1, 128], strides = [1, 1]} : vector<10x128xf32> to vector<1x128xf32>
    %2 = vector.extract_strided_slice %0 {offsets = [1, 0], sizes = [1, 128], strides = [1, 1]} : vector<10x128xf32> to vector<1x128xf32>
    %3 = vector.extract_strided_slice %0 {offsets = [2, 0], sizes = [1, 128], strides = [1, 1]} : vector<10x128xf32> to vector<1x128xf32>
    %4 = vector.extract_strided_slice %0 {offsets = [3, 0], sizes = [1, 128], strides = [1, 1]} : vector<10x128xf32> to vector<1x128xf32>
    %5 = vector.extract_strided_slice %0 {offsets = [4, 0], sizes = [1, 128], strides = [1, 1]} : vector<10x128xf32> to vector<1x128xf32>
    %6 = vector.extract_strided_slice %0 {offsets = [5, 0], sizes = [1, 128], strides = [1, 1]} : vector<10x128xf32> to vector<1x128xf32>
    %7 = vector.extract_strided_slice %0 {offsets = [6, 0], sizes = [1, 128], strides = [1, 1]} : vector<10x128xf32> to vector<1x128xf32>
    %8 = vector.extract_strided_slice %0 {offsets = [7, 0], sizes = [1, 128], strides = [1, 1]} : vector<10x128xf32> to vector<1x128xf32>
    %9 = vector.extract_strided_slice %0 {offsets = [8, 0], sizes = [1, 128], strides = [1, 1]} : vector<10x128xf32> to vector<1x128xf32>
    %10 = vector.extract_strided_slice %0 {offsets = [9, 0], sizes = [1, 128], strides = [1, 1]} : vector<10x128xf32> to vector<1x128xf32>
    %c0_1 = arith.constant 0 : index
    %c0_2 = arith.constant 0 : index
    %11 = vector.load %arg1[%c0_1, %c0_2] : memref<128x16xf32, #tpu.memory_space<vmem>>, vector<128x16xf32>
    %12 = arith.truncf %11 : vector<128x16xf32> to vector<128x16xbf16>
    %c0_3 = arith.constant 0 : index
    %c0_4 = arith.constant 0 : index
    %13 = vector.load %arg2[%c0_3, %c0_4] : memref<16x128xbf16, #tpu.memory_space<vmem>>, vector<16x128xbf16>
    %cst = arith.constant dense<0.000000e+00> : vector<128x128xf32>
    %14 = tpu.matmul %12, %13, %cst {dimension_numbers = #tpu.dot_dimension_numbers<[1], [0], [0], [1], [0, 0, 1, 1], [], []>} : vector<128x16xbf16>, vector<16x128xbf16>, vector<128x128xf32> -> vector<128x128xf32>
    %15 = vector.broadcast %1 : vector<1x128xf32> to vector<128x128xf32>
    %16 = arith.addf %14, %15 : vector<128x128xf32>
    %17 = arith.truncf %16 : vector<128x128xf32> to vector<128x128xbf16>
    %c0_5 = arith.constant 0 : index
    %c0_6 = arith.constant 0 : index
    %18 = vector.load %arg3[%c0_5, %c0_6] : memref<128x128xbf16, #tpu.memory_space<vmem>>, vector<128x128xbf16>
    %cst_7 = arith.constant dense<0.000000e+00> : vector<128x128xf32>
    %19 = tpu.matmul %17, %18, %cst_7 {dimension_numbers = #tpu.dot_dimension_numbers<[1], [0], [0], [1], [0, 0, 1, 1], [], []>} : vector<128x128xbf16>, vector<128x128xbf16>, vector<128x128xf32> -> vector<128x128xf32>
    %20 = vector.broadcast %2 : vector<1x128xf32> to vector<128x128xf32>
    %21 = arith.addf %19, %20 : vector<128x128xf32>
    %22 = arith.addf %16, %21 : vector<128x128xf32>
    %cst_8 = arith.constant dense<0.000000e+00> : vector<128xf32>
    %23 = vector.multi_reduction <add>, %22, %cst_8 [1] : vector<128x128xf32> to vector<128xf32>
    %24 = vector.shape_cast %23 : vector<128xf32> to vector<128x1xf32>
    %cst_9 = arith.constant 1.280000e+02 : f32
    %25 = vector.broadcast %cst_9 : f32 to vector<128x1xf32>
    %26 = arith.divf %24, %25 : vector<128x1xf32>
    %27 = vector.broadcast %26 : vector<128x1xf32> to vector<128x128xf32>
    %28 = arith.subf %22, %27 : vector<128x128xf32>
    %29 = arith.mulf %28, %28 : vector<128x128xf32>
    %cst_10 = arith.constant dense<0.000000e+00> : vector<128xf32>
    %30 = vector.multi_reduction <add>, %29, %cst_10 [1] : vector<128x128xf32> to vector<128xf32>
    %31 = vector.shape_cast %30 : vector<128xf32> to vector<128x1xf32>
    %cst_11 = arith.constant 1.280000e+02 : f32
    %32 = vector.broadcast %cst_11 : f32 to vector<128x1xf32>
    %33 = arith.divf %31, %32 : vector<128x1xf32>
    %34 = vector.broadcast %26 : vector<128x1xf32> to vector<128x128xf32>
    %35 = arith.subf %22, %34 : vector<128x128xf32>
    %cst_12 = arith.constant 9.99999974E-6 : f32
    %36 = vector.broadcast %cst_12 : f32 to vector<128x1xf32>
    %37 = arith.addf %33, %36 : vector<128x1xf32>
    %38 = math.rsqrt %37 : vector<128x1xf32>
    %39 = vector.broadcast %38 : vector<128x1xf32> to vector<128x128xf32>
    %40 = arith.mulf %35, %39 : vector<128x128xf32>
    %41 = vector.broadcast %4 : vector<1x128xf32> to vector<128x128xf32>
    %42 = arith.mulf %40, %41 : vector<128x128xf32>
    %43 = vector.broadcast %5 : vector<1x128xf32> to vector<128x128xf32>
    %44 = arith.addf %42, %43 : vector<128x128xf32>
    %45 = arith.truncf %16 : vector<128x128xf32> to vector<128x128xbf16>
    %c0_13 = arith.constant 0 : index
    %c0_14 = arith.constant 0 : index
    %46 = vector.load %arg4[%c0_13, %c0_14] : memref<128x128xbf16, #tpu.memory_space<vmem>>, vector<128x128xbf16>
    %cst_15 = arith.constant dense<0.000000e+00> : vector<128x128xf32>
    %47 = tpu.matmul %45, %46, %cst_15 {dimension_numbers = #tpu.dot_dimension_numbers<[1], [0], [0], [1], [0, 0, 1, 1], [], []>} : vector<128x128xbf16>, vector<128x128xbf16>, vector<128x128xf32> -> vector<128x128xf32>
    %48 = vector.broadcast %3 : vector<1x128xf32> to vector<128x128xf32>
    %49 = arith.addf %47, %48 : vector<128x128xf32>
    %50 = arith.addf %44, %49 : vector<128x128xf32>
    %cst_16 = arith.constant dense<0.000000e+00> : vector<128xf32>
    %51 = vector.multi_reduction <add>, %50, %cst_16 [1] : vector<128x128xf32> to vector<128xf32>
    %52 = vector.shape_cast %51 : vector<128xf32> to vector<128x1xf32>
    %cst_17 = arith.constant 1.280000e+02 : f32
    %53 = vector.broadcast %cst_17 : f32 to vector<128x1xf32>
    %54 = arith.divf %52, %53 : vector<128x1xf32>
    %55 = vector.broadcast %54 : vector<128x1xf32> to vector<128x128xf32>
    %56 = arith.subf %50, %55 : vector<128x128xf32>
    %57 = arith.mulf %56, %56 : vector<128x128xf32>
    %cst_18 = arith.constant dense<0.000000e+00> : vector<128xf32>
    %58 = vector.multi_reduction <add>, %57, %cst_18 [1] : vector<128x128xf32> to vector<128xf32>
    %59 = vector.shape_cast %58 : vector<128xf32> to vector<128x1xf32>
    %cst_19 = arith.constant 1.280000e+02 : f32
    %60 = vector.broadcast %cst_19 : f32 to vector<128x1xf32>
    %61 = arith.divf %59, %60 : vector<128x1xf32>
    %62 = vector.broadcast %54 : vector<128x1xf32> to vector<128x128xf32>
    %63 = arith.subf %50, %62 : vector<128x128xf32>
    %cst_20 = arith.constant 9.99999974E-6 : f32
    %64 = vector.broadcast %cst_20 : f32 to vector<128x1xf32>
    %65 = arith.addf %61, %64 : vector<128x1xf32>
    %66 = math.rsqrt %65 : vector<128x1xf32>
    %67 = vector.broadcast %66 : vector<128x1xf32> to vector<128x128xf32>
    %68 = arith.mulf %63, %67 : vector<128x128xf32>
    %69 = vector.broadcast %6 : vector<1x128xf32> to vector<128x128xf32>
    %70 = arith.mulf %68, %69 : vector<128x128xf32>
    %71 = vector.broadcast %7 : vector<1x128xf32> to vector<128x128xf32>
    %72 = arith.addf %70, %71 : vector<128x128xf32>
    %73 = arith.truncf %72 : vector<128x128xf32> to vector<128x128xbf16>
    %c0_21 = arith.constant 0 : index
    %c0_22 = arith.constant 0 : index
    %74 = vector.load %arg5[%c0_21, %c0_22] : memref<128x2048xbf16, #tpu.memory_space<vmem>>, vector<128x2048xbf16>
    %cst_23 = arith.constant dense<0.000000e+00> : vector<128x2048xf32>
    %75 = tpu.matmul %73, %74, %cst_23 {dimension_numbers = #tpu.dot_dimension_numbers<[1], [0], [0], [1], [0, 0, 1, 1], [], []>} : vector<128x128xbf16>, vector<128x2048xbf16>, vector<128x2048xf32> -> vector<128x2048xf32>
    %c0_24 = arith.constant 0 : index
    %c0_25 = arith.constant 0 : index
    %76 = vector.load %arg9[%c0_24, %c0_25] : memref<1x2048xf32, #tpu.memory_space<vmem>>, vector<1x2048xf32>
    %77 = vector.broadcast %76 : vector<1x2048xf32> to vector<128x2048xf32>
    %78 = arith.addf %75, %77 : vector<128x2048xf32>
    %cst_26 = arith.constant 0.000000e+00 : f32
    %79 = vector.broadcast %cst_26 : f32 to vector<128x2048xf32>
    %80 = arith.maximumf %78, %79 : vector<128x2048xf32>
    %81 = arith.truncf %80 : vector<128x2048xf32> to vector<128x2048xbf16>
    %c0_27 = arith.constant 0 : index
    %c0_28 = arith.constant 0 : index
    %82 = vector.load %arg6[%c0_27, %c0_28] : memref<2048x128xbf16, #tpu.memory_space<vmem>>, vector<2048x128xbf16>
    %cst_29 = arith.constant dense<0.000000e+00> : vector<128x128xf32>
    %83 = tpu.matmul %81, %82, %cst_29 {dimension_numbers = #tpu.dot_dimension_numbers<[1], [0], [0], [1], [0, 0, 1, 1], [], []>} : vector<128x2048xbf16>, vector<2048x128xbf16>, vector<128x128xf32> -> vector<128x128xf32>
    %84 = vector.broadcast %8 : vector<1x128xf32> to vector<128x128xf32>
    %85 = arith.addf %83, %84 : vector<128x128xf32>
    %86 = arith.addf %72, %85 : vector<128x128xf32>
    %cst_30 = arith.constant dense<0.000000e+00> : vector<128xf32>
    %87 = vector.multi_reduction <add>, %86, %cst_30 [1] : vector<128x128xf32> to vector<128xf32>
    %88 = vector.shape_cast %87 : vector<128xf32> to vector<128x1xf32>
    %cst_31 = arith.constant 1.280000e+02 : f32
    %89 = vector.broadcast %cst_31 : f32 to vector<128x1xf32>
    %90 = arith.divf %88, %89 : vector<128x1xf32>
    %91 = vector.broadcast %90 : vector<128x1xf32> to vector<128x128xf32>
    %92 = arith.subf %86, %91 : vector<128x128xf32>
    %93 = arith.mulf %92, %92 : vector<128x128xf32>
    %cst_32 = arith.constant dense<0.000000e+00> : vector<128xf32>
    %94 = vector.multi_reduction <add>, %93, %cst_32 [1] : vector<128x128xf32> to vector<128xf32>
    %95 = vector.shape_cast %94 : vector<128xf32> to vector<128x1xf32>
    %cst_33 = arith.constant 1.280000e+02 : f32
    %96 = vector.broadcast %cst_33 : f32 to vector<128x1xf32>
    %97 = arith.divf %95, %96 : vector<128x1xf32>
    %98 = vector.broadcast %90 : vector<128x1xf32> to vector<128x128xf32>
    %99 = arith.subf %86, %98 : vector<128x128xf32>
    %cst_34 = arith.constant 9.99999974E-6 : f32
    %100 = vector.broadcast %cst_34 : f32 to vector<128x1xf32>
    %101 = arith.addf %97, %100 : vector<128x1xf32>
    %102 = math.rsqrt %101 : vector<128x1xf32>
    %103 = vector.broadcast %102 : vector<128x1xf32> to vector<128x128xf32>
    %104 = arith.mulf %99, %103 : vector<128x128xf32>
    %105 = vector.broadcast %9 : vector<1x128xf32> to vector<128x128xf32>
    %106 = arith.mulf %104, %105 : vector<128x128xf32>
    %107 = vector.broadcast %10 : vector<1x128xf32> to vector<128x128xf32>
    %108 = arith.addf %106, %107 : vector<128x128xf32>
    %109 = arith.truncf %108 : vector<128x128xf32> to vector<128x128xbf16>
    %c0_35 = arith.constant 0 : index
    %c0_36 = arith.constant 0 : index
    %110 = vector.load %arg7[%c0_35, %c0_36] : memref<128x128xbf16, #tpu.memory_space<vmem>>, vector<128x128xbf16>
    %cst_37 = arith.constant dense<0.000000e+00> : vector<128x128xf32>
    %111 = tpu.matmul %109, %110, %cst_37 {dimension_numbers = #tpu.dot_dimension_numbers<[1], [0], [0], [1], [0, 0, 1, 1], [], []>} : vector<128x128xbf16>, vector<128x128xbf16>, vector<128x128xf32> -> vector<128x128xf32>
    %c0_38 = arith.constant 0 : index
    %c0_39 = arith.constant 0 : index
    %112 = vector.load %arg10[%c0_38, %c0_39] : memref<1x128xf32, #tpu.memory_space<vmem>>, vector<1x128xf32>
    %113 = vector.broadcast %112 : vector<1x128xf32> to vector<128x128xf32>
    %114 = arith.addf %111, %113 : vector<128x128xf32>
    %c0_40 = arith.constant 0 : index
    %c0_41 = arith.constant 0 : index
    %115 = vector.load %arg11[%c0_40, %c0_41] : memref<128x128xf32, #tpu.memory_space<vmem>>, vector<128x128xf32>
    tpu.vector_store %arg11[%c0_40, %c0_41], %114 {strides = array<i32>} : memref<128x128xf32, #tpu.memory_space<vmem>>, vector<128x128xf32>,
    return
  }
  func.func @transform_0(%arg0: i32) -> (i32, i32) {
    %c0_i32 = arith.constant 0 : i32
    %c0_i32_0 = arith.constant 0 : i32
    return %arg0, %c0_i32 : i32, i32
  }
  func.func @transform_1(%arg0: i32) -> (i32, i32) {
    %c0_i32 = arith.constant 0 : i32
    %c0_i32_0 = arith.constant 0 : i32
    %c0_i32_1 = arith.constant 0 : i32
    return %c0_i32, %c0_i32_0 : i32, i32
  }
  func.func @transform_2(%arg0: i32) -> (i32, i32) {
    %c0_i32 = arith.constant 0 : i32
    %c0_i32_0 = arith.constant 0 : i32
    %c0_i32_1 = arith.constant 0 : i32
    return %c0_i32, %c0_i32_0 : i32, i32
  }
  func.func @transform_3(%arg0: i32) -> (i32, i32) {
    %c0_i32 = arith.constant 0 : i32
    %c0_i32_0 = arith.constant 0 : i32
    %c0_i32_1 = arith.constant 0 : i32
    return %c0_i32, %c0_i32_0 : i32, i32
  }
  func.func @transform_4(%arg0: i32) -> (i32, i32) {
    %c0_i32 = arith.constant 0 : i32
    %c0_i32_0 = arith.constant 0 : i32
    %c0_i32_1 = arith.constant 0 : i32
    return %c0_i32, %c0_i32_0 : i32, i32
  }
  func.func @transform_5(%arg0: i32) -> (i32, i32) {
    %c0_i32 = arith.constant 0 : i32
    %c0_i32_0 = arith.constant 0 : i32
    %c0_i32_1 = arith.constant 0 : i32
    return %c0_i32, %c0_i32_0 : i32, i32
  }
  func.func @transform_6(%arg0: i32) -> (i32, i32) {
    %c0_i32 = arith.constant 0 : i32
    %c0_i32_0 = arith.constant 0 : i32
    %c0_i32_1 = arith.constant 0 : i32
    return %c0_i32, %c0_i32_0 : i32, i32
  }
  func.func @transform_7(%arg0: i32) -> (i32, i32) {
    %c0_i32 = arith.constant 0 : i32
    %c0_i32_0 = arith.constant 0 : i32
    %c0_i32_1 = arith.constant 0 : i32
    return %c0_i32, %c0_i32_0 : i32, i32
  }
  func.func @transform_8(%arg0: i32) -> (i32, i32) {
    %c0_i32 = arith.constant 0 : i32
    %c0_i32_0 = arith.constant 0 : i32
    %c0_i32_1 = arith.constant 0 : i32
    return %c0_i32, %c0_i32_0 : i32, i32
  }
  func.func @transform_9(%arg0: i32) -> (i32, i32) {
    %c0_i32 = arith.constant 0 : i32
    %c0_i32_0 = arith.constant 0 : i32
    %c0_i32_1 = arith.constant 0 : i32
    return %c0_i32, %c0_i32_0 : i32, i32
  }
  func.func @transform_10(%arg0: i32) -> (i32, i32) {
    %c0_i32 = arith.constant 0 : i32
    %c0_i32_0 = arith.constant 0 : i32
    return %arg0, %c0_i32 : i32, i32
  }
}

</mosaic_0001>

<llo_original>
// kernel: simple_transformer_forward.1
$region0: #{simple_transformer_forward.1}
  #allocation0 [shape = 'u32[]', space=smem, size = 0x4, offset = 0x4, fixed_abs, tag = 'smem constant byte address 0x4 - core index']
  #allocation1 [shape = 'u32[144,128]{1,0:T(1,128)}', space=vmem, size = 0x12000, scoped, tag = 'internal scratch']
  %s0 = inlined_call_operand.vmem [shape: f32[256,16], index: 0, kind: input, shape index: {}]
  %s1 = inlined_call_operand.vmem [shape: bf16[16,128], index: 1, kind: input, shape index: {}]
  %s2 = inlined_call_operand.vmem [shape: bf16[128,128], index: 2, kind: input, shape index: {}]
  %s3 = inlined_call_operand.vmem [shape: bf16[128,128], index: 3, kind: input, shape index: {}]
  %s4 = inlined_call_operand.hbm [shape: bf16[128,2048], index: 4, kind: input, shape index: {}]
  %s5 = inlined_call_operand.hbm [shape: bf16[2048,128], index: 5, kind: input, shape index: {}]
  %s6 = inlined_call_operand.vmem [shape: bf16[128,128], index: 6, kind: input, shape index: {}]
  %s7 = inlined_call_operand.vmem [shape: f32[10,128], index: 7, kind: input, shape index: {}]
  %s8 = inlined_call_operand.vmem [shape: f32[1,2048], index: 8, kind: input, shape index: {}]
  %s9 = inlined_call_operand.vmem [shape: f32[1,128], index: 9, kind: input, shape index: {}]
  %s10 = inlined_call_operand.vmem [shape: f32[256,128], index: 10, kind: output, shape index: {}]
  %s11 = sld [smem:[#allocation0]]
  $region81: #{simple_transformer_forward.1} parent=0
    _
  %s13 = ssub.s32 1, %s11
  %s14 = scalar_select 0, %s13, %s11
  $region1: #{simple_transformer_forward.1} parent=0
    #allocation2 [shape = 'u8[524288]{0}', space=vmem, size = 0x80000, scoped, tag = 'input window, operand 4, single buffered']
    #allocation3 [shape = 's32[2]{0}', space=sflag, size = 0x8, scoped, tag = 'scoped memory for simple_transformer_forward.1']
    #allocation4 [shape = 'u8[524288]{0}', space=vmem, size = 0x80000, scoped, tag = 'input window, operand 5, single buffered']
    #allocation5 [shape = 's32[1]{0}', space=sflag, size = 0x4, scoped, tag = 'scoped memory for simple_transformer_forward.1']
    %15 = vsyncpa [#allocation3], 0
    %16 = vsyncpa [#allocation5], 0
    loop: start=0, step=1, limit=4
    $region2: #{simple_transformer_forward.1} parent=1 // loop_pre_header
      _
    $region3: #{simple_transformer_forward.1} parent=1 // loop_header
      %s18 = sphi 0, %s22
      %p19 = scmp.ge.s32.totalorder %s18, 4
      %s28 = sphi 0, %s30
      %s31 = sphi 0, %s28
      %s32 = sphi 0, %s31
      %s48 = sphi 0, %s32
      %s52 = sphi 0, %s52
      %s54 = sphi 0, %s52
      %s55 = sphi 0, %s54
      %s69 = sphi 0, %s55
      %s73 = sphi 0, %s73
      %s75 = sphi 0, %s73
      %s76 = sphi 0, %s75
      %s90 = sphi 0, %s76
      %s94 = sphi 0, %s94
      %s96 = sphi 0, %s94
      %s97 = sphi 0, %s96
      %s111 = sphi 0, %s97
      %s115 = sphi 0, %s115
      %s117 = sphi 0, %s115
      %s118 = sphi 0, %s117
      %s132 = sphi 0, %s118
      %s136 = sphi 0, %s136
      %s138 = sphi 0, %s136
      %s139 = sphi 0, %s138
      %s153 = sphi 0, %s139
      %s157 = sphi 0, %s157
      %s159 = sphi 0, %s157
      %s160 = sphi 0, %s159
      %s174 = sphi 0, %s160
      %s178 = sphi 0, %s178
      %s180 = sphi 0, %s178
      %s181 = sphi 0, %s180
      %s195 = sphi 0, %s181
      %s199 = sphi 0, %s199
      %s201 = sphi 0, %s199
      %s202 = sphi 0, %s201
      %s216 = sphi 0, %s202
      %s220 = sphi 0, %s220
      %s222 = sphi 0, %s220
      %s223 = sphi 0, %s222
      %s237 = sphi 0, %s223
      %s243 = sphi 0, %s245
      %s246 = sphi 0, %s243
      %s247 = sphi 0, %s246
      %s263 = sphi 0, %s247
    $region4: #{simple_transformer_forward.1} parent=1 // loop_header_branch
      %21 = sbr.rel (%p19) target = $region8
    $region5: #{simple_transformer_forward.1} parent=1 // loop_body
      %s23 = ssub.s32 %s18, 1
      %s24 = ssub.s32 %s18, 2
      %s25 = sadd.s32 %s18, 1
      %s26 = ssub.s32 %s18, %s25
      %p27 = scmp.eq.s32.totalorder %s26, 0
      %s29 = sadd.s32 %s28, 1
      %s30 = scalar_select %p27, %s28, %s29
      %p33 = pneg %p27
      %p34 = scmp.eq.s32.totalorder %s18, 1
      %p35 = por %p33, %p34
      %p36 = scmp.ne.s32.totalorder %s28, %s31
      %p37 = scmp.eq.s32.totalorder %s18, 0
      %p38 = por %p36, %p37
      %p39 = scmp.ne.s32.totalorder %s28, %s31
      %p40 = scmp.eq.s32.totalorder %s23, 1
      %p41 = por %p39, %p40
      %p42 = scmp.ne.s32.totalorder %s31, %s32
      %p43 = scmp.eq.s32.totalorder %s23, 0
      %p44 = por %p42, %p43
      %p45 = scmp.ne.s32.totalorder %s31, %s32
      %p46 = scmp.eq.s32.totalorder %s24, 1
      %p47 = por %p45, %p46
      %p49 = scmp.ne.s32.totalorder %s32, %s48
      %p50 = scmp.eq.s32.totalorder %s24, 0
      %p51 = por %p49, %p50
      %s53 = sadd.s32 %s52, 1
      %p56 = scmp.eq.s32.totalorder %s18, 1
      %p57 = scmp.ne.s32.totalorder %s52, %s54
      %p58 = scmp.eq.s32.totalorder %s18, 0
      %p59 = por %p57, %p58
      %p60 = scmp.ne.s32.totalorder %s52, %s54
      %p61 = scmp.eq.s32.totalorder %s23, 1
      %p62 = por %p60, %p61
      %p63 = scmp.ne.s32.totalorder %s54, %s55
      %p64 = scmp.eq.s32.totalorder %s23, 0
      %p65 = por %p63, %p64
      %p66 = scmp.ne.s32.totalorder %s54, %s55
      %p67 = scmp.eq.s32.totalorder %s24, 1
      %p68 = por %p66, %p67
      %p70 = scmp.ne.s32.totalorder %s55, %s69
      %p71 = scmp.eq.s32.totalorder %s24, 0
      %p72 = por %p70, %p71
      %s74 = sadd.s32 %s73, 1
      %p77 = scmp.eq.s32.totalorder %s18, 1
      %p78 = scmp.ne.s32.totalorder %s73, %s75
      %p79 = scmp.eq.s32.totalorder %s18, 0
      %p80 = por %p78, %p79
      %p81 = scmp.ne.s32.totalorder %s73, %s75
      %p82 = scmp.eq.s32.totalorder %s23, 1
      %p83 = por %p81, %p82
      %p84 = scmp.ne.s32.totalorder %s75, %s76
      %p85 = scmp.eq.s32.totalorder %s23, 0
      %p86 = por %p84, %p85
      %p87 = scmp.ne.s32.totalorder %s75, %s76
      %p88 = scmp.eq.s32.totalorder %s24, 1
      %p89 = por %p87, %p88
      %p91 = scmp.ne.s32.totalorder %s76, %s90
      %p92 = scmp.eq.s32.totalorder %s24, 0
      %p93 = por %p91, %p92
      %s95 = sadd.s32 %s94, 1
      %p98 = scmp.eq.s32.totalorder %s18, 1
      %p99 = scmp.ne.s32.totalorder %s94, %s96
      %p100 = scmp.eq.s32.totalorder %s18, 0
      %p101 = por %p99, %p100
      %p102 = scmp.ne.s32.totalorder %s94, %s96
      %p103 = scmp.eq.s32.totalorder %s23, 1
      %p104 = por %p102, %p103
      %p105 = scmp.ne.s32.totalorder %s96, %s97
      %p106 = scmp.eq.s32.totalorder %s23, 0
      %p107 = por %p105, %p106
      %p108 = scmp.ne.s32.totalorder %s96, %s97
      %p109 = scmp.eq.s32.totalorder %s24, 1
      %p110 = por %p108, %p109
      %p112 = scmp.ne.s32.totalorder %s97, %s111
      %p113 = scmp.eq.s32.totalorder %s24, 0
      %p114 = por %p112, %p113
      %s116 = sadd.s32 %s115, 1
      %p119 = scmp.eq.s32.totalorder %s18, 1
      %p120 = scmp.ne.s32.totalorder %s115, %s117
      %p121 = scmp.eq.s32.totalorder %s18, 0
      %p122 = por %p120, %p121
      %p123 = scmp.ne.s32.totalorder %s115, %s117
      %p124 = scmp.eq.s32.totalorder %s23, 1
      %p125 = por %p123, %p124
      %p126 = scmp.ne.s32.totalorder %s117, %s118
      %p127 = scmp.eq.s32.totalorder %s23, 0
      %p128 = por %p126, %p127
      %p129 = scmp.ne.s32.totalorder %s117, %s118
      %p130 = scmp.eq.s32.totalorder %s24, 1
      %p131 = por %p129, %p130
      %p133 = scmp.ne.s32.totalorder %s118, %s132
      %p134 = scmp.eq.s32.totalorder %s24, 0
      %p135 = por %p133, %p134
      %s137 = sadd.s32 %s136, 1
      %p140 = scmp.eq.s32.totalorder %s18, 1
      %p141 = scmp.ne.s32.totalorder %s136, %s138
      %p142 = scmp.eq.s32.totalorder %s18, 0
      %p143 = por %p141, %p142
      %p144 = scmp.ne.s32.totalorder %s136, %s138
      %p145 = scmp.eq.s32.totalorder %s23, 1
      %p146 = por %p144, %p145
      %p147 = scmp.ne.s32.totalorder %s138, %s139
      %p148 = scmp.eq.s32.totalorder %s23, 0
      %p149 = por %p147, %p148
      %p150 = scmp.ne.s32.totalorder %s138, %s139
      %p151 = scmp.eq.s32.totalorder %s24, 1
      %p152 = por %p150, %p151
      %p154 = scmp.ne.s32.totalorder %s139, %s153
      %p155 = scmp.eq.s32.totalorder %s24, 0
      %p156 = por %p154, %p155
      %s158 = sadd.s32 %s157, 1
      %p161 = scmp.eq.s32.totalorder %s18, 1
      %p162 = scmp.ne.s32.totalorder %s157, %s159
      %p163 = scmp.eq.s32.totalorder %s18, 0
      %p164 = por %p162, %p163
      %p165 = scmp.ne.s32.totalorder %s157, %s159
      %p166 = scmp.eq.s32.totalorder %s23, 1
      %p167 = por %p165, %p166
      %p168 = scmp.ne.s32.totalorder %s159, %s160
      %p169 = scmp.eq.s32.totalorder %s23, 0
      %p170 = por %p168, %p169
      %p171 = scmp.ne.s32.totalorder %s159, %s160
      %p172 = scmp.eq.s32.totalorder %s24, 1
      %p173 = por %p171, %p172
      %p175 = scmp.ne.s32.totalorder %s160, %s174
      %p176 = scmp.eq.s32.totalorder %s24, 0
      %p177 = por %p175, %p176
      %s179 = sadd.s32 %s178, 1
      %p182 = scmp.eq.s32.totalorder %s18, 1
      %p183 = scmp.ne.s32.totalorder %s178, %s180
      %p184 = scmp.eq.s32.totalorder %s18, 0
      %p185 = por %p183, %p184
      %p186 = scmp.ne.s32.totalorder %s178, %s180
      %p187 = scmp.eq.s32.totalorder %s23, 1
      %p188 = por %p186, %p187
      %p189 = scmp.ne.s32.totalorder %s180, %s181
      %p190 = scmp.eq.s32.totalorder %s23, 0
      %p191 = por %p189, %p190
      %p192 = scmp.ne.s32.totalorder %s180, %s181
      %p193 = scmp.eq.s32.totalorder %s24, 1
      %p194 = por %p192, %p193
      %p196 = scmp.ne.s32.totalorder %s181, %s195
      %p197 = scmp.eq.s32.totalorder %s24, 0
      %p198 = por %p196, %p197
      %s200 = sadd.s32 %s199, 1
      %p203 = scmp.eq.s32.totalorder %s18, 1
      %p204 = scmp.ne.s32.totalorder %s199, %s201
      %p205 = scmp.eq.s32.totalorder %s18, 0
      %p206 = por %p204, %p205
      %p207 = scmp.ne.s32.totalorder %s199, %s201
      %p208 = scmp.eq.s32.totalorder %s23, 1
      %p209 = por %p207, %p208
      %p210 = scmp.ne.s32.totalorder %s201, %s202
      %p211 = scmp.eq.s32.totalorder %s23, 0
      %p212 = por %p210, %p211
      %p213 = scmp.ne.s32.totalorder %s201, %s202
      %p214 = scmp.eq.s32.totalorder %s24, 1
      %p215 = por %p213, %p214
      %p217 = scmp.ne.s32.totalorder %s202, %s216
      %p218 = scmp.eq.s32.totalorder %s24, 0
      %p219 = por %p217, %p218
      %s221 = sadd.s32 %s220, 1
      %p224 = scmp.eq.s32.totalorder %s18, 1
      %p225 = scmp.ne.s32.totalorder %s220, %s222
      %p226 = scmp.eq.s32.totalorder %s18, 0
      %p227 = por %p225, %p226
      %p228 = scmp.ne.s32.totalorder %s220, %s222
      %p229 = scmp.eq.s32.totalorder %s23, 1
      %p230 = por %p228, %p229
      %p231 = scmp.ne.s32.totalorder %s222, %s223
      %p232 = scmp.eq.s32.totalorder %s23, 0
      %p233 = por %p231, %p232
      %p234 = scmp.ne.s32.totalorder %s222, %s223
      %p235 = scmp.eq.s32.totalorder %s24, 1
      %p236 = por %p234, %p235
      %p238 = scmp.ne.s32.totalorder %s223, %s237
      %p239 = scmp.eq.s32.totalorder %s24, 0
      %p240 = por %p238, %p239
      %s241 = ssub.s32 %s18, %s25
      %p242 = scmp.eq.s32.totalorder %s241, 0
      %s244 = sadd.s32 %s243, 1
      %s245 = scalar_select %p242, %s243, %s244
      %p248 = pneg %p242
      %p249 = scmp.eq.s32.totalorder %s18, 1
      %p250 = por %p248, %p249
      %p251 = scmp.ne.s32.totalorder %s243, %s246
      %p252 = scmp.eq.s32.totalorder %s18, 0
      %p253 = por %p251, %p252
      %p254 = scmp.ne.s32.totalorder %s243, %s246
      %p255 = scmp.eq.s32.totalorder %s23, 1
      %p256 = por %p254, %p255
      %p257 = scmp.ne.s32.totalorder %s246, %s247
      %p258 = scmp.eq.s32.totalorder %s23, 0
      %p259 = por %p257, %p258
      %p260 = scmp.ne.s32.totalorder %s246, %s247
      %p261 = scmp.eq.s32.totalorder %s24, 1
      %p262 = por %p260, %p261
      %p264 = scmp.ne.s32.totalorder %s247, %s263
      %p265 = scmp.eq.s32.totalorder %s24, 0
      %p266 = por %p264, %p265
      %p267 = scmp.le.s32.totalorder 1, %s18
      %p268 = scmp.lt.s32.totalorder %s18, 3
      %p269 = pnand %p267, %p268
      %p270 = pneg %p269
      // Predicated region
      $region9: #{simple_transformer_forward.1} parent=5 // pred_check
        _
      $region10: #{simple_transformer_forward.1} parent=5 // pred_check_branch
        %272 = sbr.rel (%p269) target = $region12
      $region11: #{simple_transformer_forward.1} parent=5 // pred_region
        %s273 = ssub.s32 %s18, 1
        // Predicated region
        $region13: #{simple_transformer_forward.1} parent=11 // pred_check
          %p274 = pneg %p65
        $region14: #{simple_transformer_forward.1} parent=11 // pred_check_branch
          %276 = sbr.rel (%p274) target = $region16
        $region15: #{simple_transformer_forward.1} parent=11 // pred_region
          _
        $region16: #{simple_transformer_forward.1} parent=11 // pred_fallthru
          _
        // Predicated region
        $region17: #{simple_transformer_forward.1} parent=11 // pred_check
          %p277 = pneg %p86
        $region18: #{simple_transformer_forward.1} parent=11 // pred_check_branch
          %279 = sbr.rel (%p277) target = $region20
        $region19: #{simple_transformer_forward.1} parent=11 // pred_region
          _
        $region20: #{simple_transformer_forward.1} parent=11 // pred_fallthru
          _
        // Predicated region
        $region21: #{simple_transformer_forward.1} parent=11 // pred_check
          %p280 = pneg %p107
        $region22: #{simple_transformer_forward.1} parent=11 // pred_check_branch
          %282 = sbr.rel (%p280) target = $region24
        $region23: #{simple_transformer_forward.1} parent=11 // pred_region
          _
        $region24: #{simple_transformer_forward.1} parent=11 // pred_fallthru
          _
        // Predicated region
        $region25: #{simple_transformer_forward.1} parent=11 // pred_check
          %p283 = pneg %p128
        $region26: #{simple_transformer_forward.1} parent=11 // pred_check_branch
          %285 = sbr.rel (%p283) target = $region28
        $region27: #{simple_transformer_forward.1} parent=11 // pred_region
          %s287 = ssub.s32 16384, 16384
          %288 = vsyncadd [#allocation3], %s287
          %s289 = sshll.u32 [#allocation2], 4
          %s290 = int_to_ptr.vmem [resolvable:$true] %s289
          %295 = dma.hbm_to_vmem [thread:$0]  %s4, 16384, %s290, [#allocation3], 1024, 1024, 64
        $region28: #{simple_transformer_forward.1} parent=11 // pred_fallthru
          _
        // Predicated region
        $region29: #{simple_transformer_forward.1} parent=11 // pred_check
          %p296 = pneg %p149
        $region30: #{simple_transformer_forward.1} parent=11 // pred_check_branch
          %298 = sbr.rel (%p296) target = $region32
        $region31: #{simple_transformer_forward.1} parent=11 // pred_region
          %s300 = ssub.s32 16384, 16384
          %301 = vsyncadd [#allocation5], %s300
          %s302 = sshll.u32 [#allocation4], 4
          %s303 = int_to_ptr.vmem [resolvable:$true] %s302
          %308 = dma.hbm_to_vmem [thread:$0]  %s5, 16384, %s303, [#allocation5], 64, 64, 4
        $region32: #{simple_transformer_forward.1} parent=11 // pred_fallthru
          _
        // Predicated region
        $region33: #{simple_transformer_forward.1} parent=11 // pred_check
          %p309 = pneg %p170
        $region34: #{simple_transformer_forward.1} parent=11 // pred_check_branch
          %311 = sbr.rel (%p309) target = $region36
        $region35: #{simple_transformer_forward.1} parent=11 // pred_region
          _
        $region36: #{simple_transformer_forward.1} parent=11 // pred_fallthru
          _
        // Predicated region
        $region37: #{simple_transformer_forward.1} parent=11 // pred_check
          %p312 = pneg %p191
        $region38: #{simple_transformer_forward.1} parent=11 // pred_check_branch
          %314 = sbr.rel (%p312) target = $region40
        $region39: #{simple_transformer_forward.1} parent=11 // pred_region
          _
        $region40: #{simple_transformer_forward.1} parent=11 // pred_fallthru
          _
        // Predicated region
        $region41: #{simple_transformer_forward.1} parent=11 // pred_check
          %p315 = pneg %p212
        $region42: #{simple_transformer_forward.1} parent=11 // pred_check_branch
          %317 = sbr.rel (%p315) target = $region44
        $region43: #{simple_transformer_forward.1} parent=11 // pred_region
          _
        $region44: #{simple_transformer_forward.1} parent=11 // pred_fallthru
          _
        // Predicated region
        $region45: #{simple_transformer_forward.1} parent=11 // pred_check
          %p318 = pneg %p233
        $region46: #{simple_transformer_forward.1} parent=11 // pred_check_branch
          %320 = sbr.rel (%p318) target = $region48
        $region47: #{simple_transformer_forward.1} parent=11 // pred_region
          _
        $region48: #{simple_transformer_forward.1} parent=11 // pred_fallthru
          _
      $region12: #{simple_transformer_forward.1} parent=5 // pred_fallthru
        _
      %p321 = scmp.lt.s32.totalorder %s18, 2
      // Predicated region
      $region49: #{simple_transformer_forward.1} parent=5 // pred_check
        %p322 = pneg %p321
      $region50: #{simple_transformer_forward.1} parent=5 // pred_check_branch
        %324 = sbr.rel (%p322) target = $region52
      $region51: #{simple_transformer_forward.1} parent=5 // pred_region
        // Predicated region
        $region53: #{simple_transformer_forward.1} parent=51 // pred_check
          %p325 = pneg %p38
        $region54: #{simple_transformer_forward.1} parent=51 // pred_check_branch
          %327 = sbr.rel (%p325) target = $region56
        $region55: #{simple_transformer_forward.1} parent=51 // pred_region
          %s328 = smul.u32 16, %s18
          %p329 = scmp.lt.s32.totalorder %s328, 31
          %s330 = scalar_select %p329, %s328, 31
          %s331 = smul.addr %s330, 8
          %s332 = scalar_lea.vmem %s0, %s331
          %s333 = smul.u32 16, %s18
        $region56: #{simple_transformer_forward.1} parent=51 // pred_fallthru
          _
      $region52: #{simple_transformer_forward.1} parent=5 // pred_fallthru
        _
      %p334 = scmp.le.s32.totalorder 1, %s18
      %p335 = scmp.lt.s32.totalorder %s18, 3
      %p336 = pnand %p334, %p335
      %p337 = pneg %p336
      // Predicated region
      $region57: #{simple_transformer_forward.1} parent=5 // pred_check
        _
      $region58: #{simple_transformer_forward.1} parent=5 // pred_check_branch
        %339 = sbr.rel (%p336) target = $region60
      $region59: #{simple_transformer_forward.1} parent=5 // pred_region
        %s340 = ssub.s32 %s18, 1
        // Predicated region
        $region61: #{simple_transformer_forward.1} parent=59 // pred_check
          %p341 = pneg %p128
        $region62: #{simple_transformer_forward.1} parent=59 // pred_check_branch
          %343 = sbr.rel (%p341) target = $region64
        $region63: #{simple_transformer_forward.1} parent=59 // pred_region
          %344 = dma.done [#allocation3], 16384
        $region64: #{simple_transformer_forward.1} parent=59 // pred_fallthru
          _
        // Predicated region
        $region65: #{simple_transformer_forward.1} parent=59 // pred_check
          %p345 = pneg %p149
        $region66: #{simple_transformer_forward.1} parent=59 // pred_check_branch
          %347 = sbr.rel (%p345) target = $region68
        $region67: #{simple_transformer_forward.1} parent=59 // pred_region
          %348 = dma.done [#allocation5], 16384
        $region68: #{simple_transformer_forward.1} parent=59 // pred_fallthru
          _
        %s349 = smul.u32 16, %s23
        %p350 = scmp.lt.s32.totalorder %s349, 31
        %s351 = scalar_select %p350, %s349, 31
        %s352 = smul.addr %s351, 8
        %s353 = scalar_lea.vmem %s0, %s352
        %p354 = pneg %p44
        %p355 = pneg %p41
        %p356 = pneg %p65
        %p357 = pneg %p62
        %p358 = pneg %p86
        %p359 = pneg %p83
        %p360 = pneg %p107
        %p361 = pneg %p104
        %p362 = pneg %p128
        %p363 = pneg %p125
        %p364 = pneg %p149
        %p365 = pneg %p146
        %p366 = pneg %p170
        %p367 = pneg %p167
        %p368 = pneg %p191
        %p369 = pneg %p188
        %p370 = pneg %p212
        %p371 = pneg %p209
        %p372 = pneg %p233
        %p373 = pneg %p230
        %p374 = pneg %p259
        %p375 = pneg %p256
        %s376 = smul.u32 16, %s23
        %p377 = scmp.lt.s32.totalorder %s376, 31
        %s378 = scalar_select %p377, %s376, 31
        %s379 = smul.addr %s378, 8
        %s380 = scalar_lea.vmem %s10, %s379
        %s381 = smul.u32 16, %s23
        %p382 = scmp.lt.s32.totalorder %s381, 31
        %s383 = scalar_select %p382, %s381, 31
        %s384 = smul.addr %s383, 8
        %s385 = scalar_lea.vmem %s0, %s384
        %s386 = smul.u32 16, %s23
        %s387 = smul.u32 16, %s23
        %p388 = scmp.lt.s32.totalorder %s387, 31
        %s389 = scalar_select %p388, %s387, 31
        %s390 = smul.addr %s389, 8
        %s391 = scalar_lea.vmem %s10, %s390
        %s392 = smul.u32 16, %s23
        %v394 = vld [vmem:[%s7] sm:$0xff]
        %v395 = vld [vmem:[%s7 + $0x8] sm:$0x3]
        %v396 = vld [vmem:[%s385] sm:$0xff]
        %v397 = vld [vmem:[%s385 + $0x8] sm:$0xff]
        %v398 = vld [vmem:[%s385 + $0x10] sm:$0xff]
        %v399 = vld [vmem:[%s385 + $0x18] sm:$0xff]
        %v400 = vld [vmem:[%s385 + $0x20] sm:$0xff]
        %v401 = vld [vmem:[%s385 + $0x28] sm:$0xff]
        %v402 = vld [vmem:[%s385 + $0x30] sm:$0xff]
        %v403 = vld [vmem:[%s385 + $0x38] sm:$0xff]
        %v404 = vld [vmem:[%s385 + $0x40] sm:$0xff]
        %v405 = vld [vmem:[%s385 + $0x48] sm:$0xff]
        %v406 = vld [vmem:[%s385 + $0x50] sm:$0xff]
        %v407 = vld [vmem:[%s385 + $0x58] sm:$0xff]
        %v408 = vld [vmem:[%s385 + $0x60] sm:$0xff]
        %v409 = vld [vmem:[%s385 + $0x68] sm:$0xff]
        %v410 = vld [vmem:[%s385 + $0x70] sm:$0xff]
        %v411 = vld [vmem:[%s385 + $0x78] sm:$0xff]
        %v412 = vpack.c.bf16 %v397, %v396
        %v413 = vpack.c.bf16 %v399, %v398
        %v414 = vpack.c.bf16 %v401, %v400
        %v415 = vpack.c.bf16 %v403, %v402
        %v416 = vpack.c.bf16 %v405, %v404
        %v417 = vpack.c.bf16 %v407, %v406
        %v418 = vpack.c.bf16 %v409, %v408
        %v419 = vpack.c.bf16 %v411, %v410
        %v420 = vld [vmem:[%s1] sm:$0xf]
        %v421 = vld [vmem:[%s1 + $0x4] sm:$0xf]
        %v422 = vlaneseq
        %v423 = vshrl.u32 %v422, 7
        %v424 = vsub.s32 0, %v423
        %v425 = vrot.slane %v394, %v424
        %v428 = vunpack.c.l.b16 %v420
        %v429 = vunpack.c.l.b16 %v421
        %v430 = vpack.c.b16 %v429, %v428
        %vm432 = vcmask 130048
        %v434 = vsel %vm432, %v412, 0
        %v437 = vsel %vm432, %v413, 0
        %v440 = vsel %vm432, %v414, 0
        %v443 = vsel %vm432, %v415, 0
        %v446 = vsel %vm432, %v416, 0
        %v449 = vsel %vm432, %v417, 0
        %v452 = vsel %vm432, %v418, 0
        %v455 = vsel %vm432, %v419, 0
        %457 = vmatprep.subr.bf16.mxu0 0
        %458 = vmatpush1.bf16.msra.mxu0 %v430
        %459 = vmatprep.subr.bf16.mxu0 0
        %460 = vmatpush1.bf16.msra.mxu0 0
        %461 = vmatprep.subr.bf16.mxu0 0
        %462 = vmatpush1.bf16.msra.mxu0 0
        %463 = vmatprep.subr.bf16.mxu0 0
        %464 = vmatpush1.bf16.msra.mxu0 0
        %465 = vmatprep.subr.bf16.mxu0 0
        %466 = vmatpush1.bf16.msra.mxu0 0
        %467 = vmatprep.subr.bf16.mxu0 0
        %468 = vmatpush1.bf16.msra.mxu0 0
        %469 = vmatprep.subr.bf16.mxu0 0
        %470 = vmatpush1.bf16.msra.mxu0 0
        %471 = vmatprep.subr.bf16.mxu0 0
        %472 = vmatpush1.bf16.msra.mxu0 0
        %473 = vmatprep.subr.bf16.mxu0 0
        %474 = vmatpush1.bf16.msra.mxu0 0
        %475 = vmatprep.subr.bf16.mxu0 0
        %476 = vmatpush1.bf16.msra.mxu0 0
        %477 = vmatprep.subr.bf16.mxu0 0
        %478 = vmatpush1.bf16.msra.mxu0 0
        %479 = vmatprep.subr.bf16.mxu0 0
        %480 = vmatpush1.bf16.msra.mxu0 0
        %481 = vmatprep.subr.bf16.mxu0 0
        %482 = vmatpush1.bf16.msra.mxu0 0
        %483 = vmatprep.subr.bf16.mxu0 0
        %484 = vmatpush1.bf16.msra.mxu0 0
        %485 = vmatprep.subr.bf16.mxu0 0
        %486 = vmatpush1.bf16.msra.mxu0 0
        %487 = vmatprep.subr.bf16.mxu0 0
        %488 = vmatpush1.bf16.msra.mxu0 0
        %489 = vmatprep.mubr.bf16.mxu0 0
        %490 = vmatmul.mubr.bf16.gmra.mrb[0].mxu0 %v434
        %v491 = vpop.f32.mrb[0].mxu0
        %v492 = vadd.f32 %v425, %v491
        %v493 = vpop.f32.mrb[0].mxu0
        %v494 = vpop.f32.mrb[0].mxu0
        %v495 = vadd.f32 %v425, %v494
        %v496 = vpop.f32.mrb[0].mxu0
        %497 = vmatprep.mubr.bf16.mxu0 0
        %498 = vmatmul.mubr.bf16.gmra.mrb[0].mxu0 %v437
        %v499 = vpop.f32.mrb[0].mxu0
        %v500 = vadd.f32 %v425, %v499
        %v501 = vpop.f32.mrb[0].mxu0
        %v502 = vpop.f32.mrb[0].mxu0
        %v503 = vadd.f32 %v425, %v502
        %v504 = vpop.f32.mrb[0].mxu0
        %505 = vmatprep.mubr.bf16.mxu0 0
        %506 = vmatmul.mubr.bf16.gmra.mrb[0].mxu0 %v440
        %v507 = vpop.f32.mrb[0].mxu0
        %v508 = vadd.f32 %v425, %v507
        %v509 = vpop.f32.mrb[0].mxu0
        %v510 = vpop.f32.mrb[0].mxu0
        %v511 = vadd.f32 %v425, %v510
        %v512 = vpop.f32.mrb[0].mxu0
        %513 = vmatprep.mubr.bf16.mxu0 0
        %514 = vmatmul.mubr.bf16.gmra.mrb[0].mxu0 %v443
        %v515 = vpop.f32.mrb[0].mxu0
        %v516 = vadd.f32 %v425, %v515
        %v517 = vpop.f32.mrb[0].mxu0
        %v518 = vpop.f32.mrb[0].mxu0
        %v519 = vadd.f32 %v425, %v518
        %v520 = vpop.f32.mrb[0].mxu0
        %521 = vmatprep.mubr.bf16.mxu0 0
        %522 = vmatmul.mubr.bf16.gmra.mrb[0].mxu0 %v446
        %v523 = vpop.f32.mrb[0].mxu0
        %v524 = vadd.f32 %v425, %v523
        %v525 = vpop.f32.mrb[0].mxu0
        %v526 = vpop.f32.mrb[0].mxu0
        %v527 = vadd.f32 %v425, %v526
        %v528 = vpop.f32.mrb[0].mxu0
        %529 = vmatprep.mubr.bf16.mxu0 0
        %530 = vmatmul.mubr.bf16.gmra.mrb[0].mxu0 %v449
        %v531 = vpop.f32.mrb[0].mxu0
        %v532 = vadd.f32 %v425, %v531
        %v533 = vpop.f32.mrb[0].mxu0
        %v534 = vpop.f32.mrb[0].mxu0
        %v535 = vadd.f32 %v425, %v534
        %v536 = vpop.f32.mrb[0].mxu0
        %537 = vmatprep.mubr.bf16.mxu0 0
        %538 = vmatmul.mubr.bf16.gmra.mrb[0].mxu0 %v452
        %v539 = vpop.f32.mrb[0].mxu0
        %v540 = vadd.f32 %v425, %v539
        %v541 = vpop.f32.mrb[0].mxu0
        %v542 = vpop.f32.mrb[0].mxu0
        %v543 = vadd.f32 %v425, %v542
        %v544 = vpop.f32.mrb[0].mxu0
        %545 = vmatprep.mubr.bf16.mxu0 0
        %546 = vmatmul.mubr.bf16.gmra.mrb[0].mxu0 %v455
        %v547 = vpop.f32.mrb[0].mxu0
        %v548 = vadd.f32 %v425, %v547
        %v549 = vpop.f32.mrb[0].mxu0
        %v550 = vpop.f32.mrb[0].mxu0
        %v551 = vadd.f32 %v425, %v550
        %v552 = vpop.f32.mrb[0].mxu0
        %553 = vdwg.mxu0
        %v554 = vpack.c.bf16 %v495, %v492
        %v555 = vpack.c.bf16 %v503, %v500
        %v556 = vpack.c.bf16 %v511, %v508
        %v557 = vpack.c.bf16 %v519, %v516
        %v558 = vpack.c.bf16 %v527, %v524
        %v559 = vpack.c.bf16 %v535, %v532
        %v560 = vpack.c.bf16 %v543, %v540
        %v561 = vpack.c.bf16 %v551, %v548
        %v562 = vld [vmem:[%s2] sm:$0xf]
        %v563 = vld [vmem:[%s2 + $0x4] sm:$0xf]
        %v564 = vld [vmem:[%s2 + $0x8] sm:$0xf]
        %v565 = vld [vmem:[%s2 + $0xc] sm:$0xf]
        %v566 = vld [vmem:[%s2 + $0x10] sm:$0xf]
        %v567 = vld [vmem:[%s2 + $0x14] sm:$0xf]
        %v568 = vld [vmem:[%s2 + $0x18] sm:$0xf]
        %v569 = vld [vmem:[%s2 + $0x1c] sm:$0xf]
        %v570 = vld [vmem:[%s2 + $0x20] sm:$0xf]
        %v571 = vld [vmem:[%s2 + $0x24] sm:$0xf]
        %v572 = vld [vmem:[%s2 + $0x28] sm:$0xf]
        %v573 = vld [vmem:[%s2 + $0x2c] sm:$0xf]
        %v574 = vld [vmem:[%s2 + $0x30] sm:$0xf]
        %v575 = vld [vmem:[%s2 + $0x34] sm:$0xf]
        %v576 = vld [vmem:[%s2 + $0x38] sm:$0xf]
        %v577 = vld [vmem:[%s2 + $0x3c] sm:$0xf]
        %v578 = vlaneseq
        %v579 = vshrl.u32 %v578, 7
        %v580 = vsub.s32 1, %v579
        %v581 = vrot.slane %v394, %v580
        %v598 = vunpack.c.l.b16 %v562
        %v599 = vunpack.c.l.b16 %v563
        %v600 = vunpack.c.l.b16 %v564
        %v601 = vunpack.c.l.b16 %v565
        %v602 = vunpack.c.l.b16 %v566
        %v603 = vunpack.c.l.b16 %v567
        %v604 = vunpack.c.l.b16 %v568
        %v605 = vunpack.c.l.b16 %v569
        %v606 = vunpack.c.l.b16 %v570
        %v607 = vunpack.c.l.b16 %v571
        %v608 = vunpack.c.l.b16 %v572
        %v609 = vunpack.c.l.b16 %v573
        %v610 = vunpack.c.l.b16 %v574
        %v611 = vunpack.c.l.b16 %v575
        %v612 = vunpack.c.l.b16 %v576
        %v613 = vunpack.c.l.b16 %v577
        %v614 = vpack.c.b16 %v599, %v598
        %v615 = vpack.c.b16 %v601, %v600
        %v616 = vpack.c.b16 %v603, %v602
        %v617 = vpack.c.b16 %v605, %v604
        %v618 = vpack.c.b16 %v607, %v606
        %v619 = vpack.c.b16 %v609, %v608
        %v620 = vpack.c.b16 %v611, %v610
        %v621 = vpack.c.b16 %v613, %v612
        %630 = vmatprep.subr.bf16.mxu0 0
        %631 = vmatpush1.bf16.msra.mxu0 %v614
        %632 = vmatprep.subr.bf16.mxu0 0
        %633 = vmatpush1.bf16.msra.mxu0 %v615
        %634 = vmatprep.subr.bf16.mxu0 0
        %635 = vmatpush1.bf16.msra.mxu0 %v616
        %636 = vmatprep.subr.bf16.mxu0 0
        %637 = vmatpush1.bf16.msra.mxu0 %v617
        %638 = vmatprep.subr.bf16.mxu0 0
        %639 = vmatpush1.bf16.msra.mxu0 %v618
        %640 = vmatprep.subr.bf16.mxu0 0
        %641 = vmatpush1.bf16.msra.mxu0 %v619
        %642 = vmatprep.subr.bf16.mxu0 0
        %643 = vmatpush1.bf16.msra.mxu0 %v620
        %644 = vmatprep.subr.bf16.mxu0 0
        %645 = vmatpush1.bf16.msra.mxu0 %v621
        %646 = vmatprep.subr.bf16.mxu0 0
        %647 = vmatpush1.bf16.msra.mxu0 0
        %648 = vmatprep.subr.bf16.mxu0 0
        %649 = vmatpush1.bf16.msra.mxu0 0
        %650 = vmatprep.subr.bf16.mxu0 0
        %651 = vmatpush1.bf16.msra.mxu0 0
        %652 = vmatprep.subr.bf16.mxu0 0
        %653 = vmatpush1.bf16.msra.mxu0 0
        %654 = vmatprep.subr.bf16.mxu0 0
        %655 = vmatpush1.bf16.msra.mxu0 0
        %656 = vmatprep.subr.bf16.mxu0 0
        %657 = vmatpush1.bf16.msra.mxu0 0
        %658 = vmatprep.subr.bf16.mxu0 0
        %659 = vmatpush1.bf16.msra.mxu0 0
        %660 = vmatprep.subr.bf16.mxu0 0
        %661 = vmatpush1.bf16.msra.mxu0 0
        %662 = vmatprep.mubr.bf16.mxu0 0
        %663 = vmatmul.mubr.bf16.gmra.mrb[0].mxu0 %v554
        %v664 = vpop.f32.mrb[0].mxu0
        %v665 = vadd.f32 %v581, %v664
        %v666 = vpop.f32.mrb[0].mxu0
        %v667 = vpop.f32.mrb[0].mxu0
        %v668 = vadd.f32 %v581, %v667
        %v669 = vpop.f32.mrb[0].mxu0
        %670 = vmatprep.mubr.bf16.mxu0 0
        %671 = vmatmul.mubr.bf16.gmra.mrb[0].mxu0 %v555
        %v672 = vpop.f32.mrb[0].mxu0
        %v673 = vadd.f32 %v581, %v672
        %v674 = vpop.f32.mrb[0].mxu0
        %v675 = vpop.f32.mrb[0].mxu0
        %v676 = vadd.f32 %v581, %v675
        %v677 = vpop.f32.mrb[0].mxu0
        %678 = vmatprep.mubr.bf16.mxu0 0
        %679 = vmatmul.mubr.bf16.gmra.mrb[0].mxu0 %v556
        %v680 = vpop.f32.mrb[0].mxu0
        %v681 = vadd.f32 %v581, %v680
        %v682 = vpop.f32.mrb[0].mxu0
        %v683 = vpop.f32.mrb[0].mxu0
        %v684 = vadd.f32 %v581, %v683
        %v685 = vpop.f32.mrb[0].mxu0
        %686 = vmatprep.mubr.bf16.mxu0 0
        %687 = vmatmul.mubr.bf16.gmra.mrb[0].mxu0 %v557
        %v688 = vpop.f32.mrb[0].mxu0
        %v689 = vadd.f32 %v581, %v688
        %v690 = vpop.f32.mrb[0].mxu0
        %v691 = vpop.f32.mrb[0].mxu0
        %v692 = vadd.f32 %v581, %v691
        %v693 = vpop.f32.mrb[0].mxu0
        %694 = vmatprep.mubr.bf16.mxu0 0
        %695 = vmatmul.mubr.bf16.gmra.mrb[0].mxu0 %v558
        %v696 = vpop.f32.mrb[0].mxu0
        %v697 = vadd.f32 %v581, %v696
        %v698 = vpop.f32.mrb[0].mxu0
        %v699 = vpop.f32.mrb[0].mxu0
        %v700 = vadd.f32 %v581, %v699
        %v701 = vpop.f32.mrb[0].mxu0
        %702 = vmatprep.mubr.bf16.mxu0 0
        %703 = vmatmul.mubr.bf16.gmra.mrb[0].mxu0 %v559
        %v704 = vpop.f32.mrb[0].mxu0
        %v705 = vadd.f32 %v581, %v704
        %v706 = vpop.f32.mrb[0].mxu0
        %v707 = vpop.f32.mrb[0].mxu0
        %v708 = vadd.f32 %v581, %v707
        %v709 = vpop.f32.mrb[0].mxu0
        %710 = vmatprep.mubr.bf16.mxu0 0
        %711 = vmatmul.mubr.bf16.gmra.mrb[0].mxu0 %v560
        %v712 = vpop.f32.mrb[0].mxu0
        %v713 = vadd.f32 %v581, %v712
        %v714 = vpop.f32.mrb[0].mxu0
        %v715 = vpop.f32.mrb[0].mxu0
        %v716 = vadd.f32 %v581, %v715
        %v717 = vpop.f32.mrb[0].mxu0
        %718 = vmatprep.mubr.bf16.mxu0 0
        %719 = vmatmul.mubr.bf16.gmra.mrb[0].mxu0 %v561
        %v720 = vpop.f32.mrb[0].mxu0
        %v721 = vadd.f32 %v581, %v720
        %v722 = vpop.f32.mrb[0].mxu0
        %v723 = vpop.f32.mrb[0].mxu0
        %v724 = vadd.f32 %v581, %v723
        %v725 = vpop.f32.mrb[0].mxu0
        %726 = vdwg.mxu0
        %v727 = vadd.f32 %v492, %v665
        %v728 = vadd.f32 %v495, %v668
        %v729 = vadd.f32 %v500, %v673
        %v730 = vadd.f32 %v503, %v676
        %v731 = vadd.f32 %v508, %v681
        %v732 = vadd.f32 %v511, %v684
        %v733 = vadd.f32 %v516, %v689
        %v734 = vadd.f32 %v519, %v692
        %v735 = vadd.f32 %v524, %v697
        %v736 = vadd.f32 %v527, %v700
        %v737 = vadd.f32 %v532, %v705
        %v738 = vadd.f32 %v535, %v708
        %v739 = vadd.f32 %v540, %v713
        %v740 = vadd.f32 %v543, %v716
        %v741 = vadd.f32 %v548, %v721
        %v742 = vadd.f32 %v551, %v724
        %743 = vadd.xlane.f32.xlu0 %v727
        %v744 = vpop.xlane.xlu0 %743
        %745 = vadd.xlane.f32.xlu0 %v728
        %v746 = vpop.xlane.xlu0 %745
        %747 = vadd.xlane.f32.xlu0 %v729
        %v748 = vpop.xlane.xlu0 %747
        %749 = vadd.xlane.f32.xlu0 %v730
        %v750 = vpop.xlane.xlu0 %749
        %751 = vadd.xlane.f32.xlu0 %v731
        %v752 = vpop.xlane.xlu0 %751
        %753 = vadd.xlane.f32.xlu0 %v732
        %v754 = vpop.xlane.xlu0 %753
        %755 = vadd.xlane.f32.xlu0 %v733
        %v756 = vpop.xlane.xlu0 %755
        %757 = vadd.xlane.f32.xlu0 %v734
        %v758 = vpop.xlane.xlu0 %757
        %759 = vadd.xlane.f32.xlu0 %v735
        %v760 = vpop.xlane.xlu0 %759
        %761 = vadd.xlane.f32.xlu0 %v736
        %v762 = vpop.xlane.xlu0 %761
        %763 = vadd.xlane.f32.xlu0 %v737
        %v764 = vpop.xlane.xlu0 %763
        %765 = vadd.xlane.f32.xlu0 %v738
        %v766 = vpop.xlane.xlu0 %765
        %767 = vadd.xlane.f32.xlu0 %v739
        %v768 = vpop.xlane.xlu0 %767
        %769 = vadd.xlane.f32.xlu0 %v740
        %v770 = vpop.xlane.xlu0 %769
        %771 = vadd.xlane.f32.xlu0 %v741
        %v772 = vpop.xlane.xlu0 %771
        %773 = vadd.xlane.f32.xlu0 %v742
        %v774 = vpop.xlane.xlu0 %773
        %v775 = vrcp.pop 128.0
        %v776 = vmul.f32 %v744, %v775
        %v777 = vmul.f32 %v746, %v775
        %v778 = vmul.f32 %v748, %v775
        %v779 = vmul.f32 %v750, %v775
        %v780 = vmul.f32 %v752, %v775
        %v781 = vmul.f32 %v754, %v775
        %v782 = vmul.f32 %v756, %v775
        %v783 = vmul.f32 %v758, %v775
        %v784 = vmul.f32 %v760, %v775
        %v785 = vmul.f32 %v762, %v775
        %v786 = vmul.f32 %v764, %v775
        %v787 = vmul.f32 %v766, %v775
        %v788 = vmul.f32 %v768, %v775
        %v789 = vmul.f32 %v770, %v775
        %v790 = vmul.f32 %v772, %v775
        %v791 = vmul.f32 %v774, %v775
        %v792 = vsub.f32 %v727, %v776
        %v793 = vsub.f32 %v728, %v777
        %v794 = vsub.f32 %v729, %v778
        %v795 = vsub.f32 %v730, %v779
        %v796 = vsub.f32 %v731, %v780
        %v797 = vsub.f32 %v732, %v781
        %v798 = vsub.f32 %v733, %v782
        %v799 = vsub.f32 %v734, %v783
        %v800 = vsub.f32 %v735, %v784
        %v801 = vsub.f32 %v736, %v785
        %v802 = vsub.f32 %v737, %v786
        %v803 = vsub.f32 %v738, %v787
        %v804 = vsub.f32 %v739, %v788
        %v805 = vsub.f32 %v740, %v789
        %v806 = vsub.f32 %v741, %v790
        %v807 = vsub.f32 %v742, %v791
        %v808 = vmul.f32 %v792, %v792
        %v809 = vmul.f32 %v793, %v793
        %v810 = vmul.f32 %v794, %v794
        %v811 = vmul.f32 %v795, %v795
        %v812 = vmul.f32 %v796, %v796
        %v813 = vmul.f32 %v797, %v797
        %v814 = vmul.f32 %v798, %v798
        %v815 = vmul.f32 %v799, %v799
        %v816 = vmul.f32 %v800, %v800
        %v817 = vmul.f32 %v801, %v801
        %v818 = vmul.f32 %v802, %v802
        %v819 = vmul.f32 %v803, %v803
        %v820 = vmul.f32 %v804, %v804
        %v821 = vmul.f32 %v805, %v805
        %v822 = vmul.f32 %v806, %v806
        %v823 = vmul.f32 %v807, %v807
        %824 = vadd.xlane.f32.xlu0 %v808
        %v825 = vpop.xlane.xlu0 %824
        %826 = vadd.xlane.f32.xlu0 %v809
        %v827 = vpop.xlane.xlu0 %826
        %828 = vadd.xlane.f32.xlu0 %v810
        %v829 = vpop.xlane.xlu0 %828
        %830 = vadd.xlane.f32.xlu0 %v811
        %v831 = vpop.xlane.xlu0 %830
        %832 = vadd.xlane.f32.xlu0 %v812
        %v833 = vpop.xlane.xlu0 %832
        %834 = vadd.xlane.f32.xlu0 %v813
        %v835 = vpop.xlane.xlu0 %834
        %836 = vadd.xlane.f32.xlu0 %v814
        %v837 = vpop.xlane.xlu0 %836
        %838 = vadd.xlane.f32.xlu0 %v815
        %v839 = vpop.xlane.xlu0 %838
        %840 = vadd.xlane.f32.xlu0 %v816
        %v841 = vpop.xlane.xlu0 %840
        %842 = vadd.xlane.f32.xlu0 %v817
        %v843 = vpop.xlane.xlu0 %842
        %844 = vadd.xlane.f32.xlu0 %v818
        %v845 = vpop.xlane.xlu0 %844
        %846 = vadd.xlane.f32.xlu0 %v819
        %v847 = vpop.xlane.xlu0 %846
        %848 = vadd.xlane.f32.xlu0 %v820
        %v849 = vpop.xlane.xlu0 %848
        %850 = vadd.xlane.f32.xlu0 %v821
        %v851 = vpop.xlane.xlu0 %850
        %852 = vadd.xlane.f32.xlu0 %v822
        %v853 = vpop.xlane.xlu0 %852
        %854 = vadd.xlane.f32.xlu0 %v823
        %v855 = vpop.xlane.xlu0 %854
        %v856 = vmul.f32 %v825, %v775
        %v857 = vmul.f32 %v827, %v775
        %v858 = vmul.f32 %v829, %v775
        %v859 = vmul.f32 %v831, %v775
        %v860 = vmul.f32 %v833, %v775
        %v861 = vmul.f32 %v835, %v775
        %v862 = vmul.f32 %v837, %v775
        %v863 = vmul.f32 %v839, %v775
        %v864 = vmul.f32 %v841, %v775
        %v865 = vmul.f32 %v843, %v775
        %v866 = vmul.f32 %v845, %v775
        %v867 = vmul.f32 %v847, %v775
        %v868 = vmul.f32 %v849, %v775
        %v869 = vmul.f32 %v851, %v775
        %v870 = vmul.f32 %v853, %v775
        %v871 = vmul.f32 %v855, %v775
        %v872 = vadd.f32 %v856, 1e-05
        %v873 = vadd.f32 %v857, 1e-05
        %v874 = vadd.f32 %v858, 1e-05
        %v875 = vadd.f32 %v859, 1e-05
        %v876 = vadd.f32 %v860, 1e-05
        %v877 = vadd.f32 %v861, 1e-05
        %v878 = vadd.f32 %v862, 1e-05
        %v879 = vadd.f32 %v863, 1e-05
        %v880 = vadd.f32 %v864, 1e-05
        %v881 = vadd.f32 %v865, 1e-05
        %v882 = vadd.f32 %v866, 1e-05
        %v883 = vadd.f32 %v867, 1e-05
        %v884 = vadd.f32 %v868, 1e-05
        %v885 = vadd.f32 %v869, 1e-05
        %v886 = vadd.f32 %v870, 1e-05
        %v887 = vadd.f32 %v871, 1e-05
        %v888 = vrsqrt.pop %v872
        %v889 = vrsqrt.pop %v873
        %v890 = vrsqrt.pop %v874
        %v891 = vrsqrt.pop %v875
        %v892 = vrsqrt.pop %v876
        %v893 = vrsqrt.pop %v877
        %v894 = vrsqrt.pop %v878
        %v895 = vrsqrt.pop %v879
        %v896 = vrsqrt.pop %v880
        %v897 = vrsqrt.pop %v881
        %v898 = vrsqrt.pop %v882
        %v899 = vrsqrt.pop %v883
        %v900 = vrsqrt.pop %v884
        %v901 = vrsqrt.pop %v885
        %v902 = vrsqrt.pop %v886
        %v903 = vrsqrt.pop %v887
        %v904 = vmul.f32 %v792, %v888
        %v905 = vmul.f32 %v793, %v889
        %v906 = vmul.f32 %v794, %v890
        %v907 = vmul.f32 %v795, %v891
        %v908 = vmul.f32 %v796, %v892
        %v909 = vmul.f32 %v797, %v893
        %v910 = vmul.f32 %v798, %v894
        %v911 = vmul.f32 %v799, %v895
        %v912 = vmul.f32 %v800, %v896
        %v913 = vmul.f32 %v801, %v897
        %v914 = vmul.f32 %v802, %v898
        %v915 = vmul.f32 %v803, %v899
        %v916 = vmul.f32 %v804, %v900
        %v917 = vmul.f32 %v805, %v901
        %v918 = vmul.f32 %v806, %v902
        %v919 = vmul.f32 %v807, %v903
        %v920 = vlaneseq
        %v921 = vshrl.u32 %v920, 7
        %v922 = vsub.s32 3, %v921
        %v923 = vrot.slane %v394, %v922
        %v924 = vmul.f32 %v904, %v923
        %v925 = vmul.f32 %v905, %v923
        %v926 = vmul.f32 %v906, %v923
        %v927 = vmul.f32 %v907, %v923
        %v928 = vmul.f32 %v908, %v923
        %v929 = vmul.f32 %v909, %v923
        %v930 = vmul.f32 %v910, %v923
        %v931 = vmul.f32 %v911, %v923
        %v932 = vmul.f32 %v912, %v923
        %v933 = vmul.f32 %v913, %v923
        %v934 = vmul.f32 %v914, %v923
        %v935 = vmul.f32 %v915, %v923
        %v936 = vmul.f32 %v916, %v923
        %v937 = vmul.f32 %v917, %v923
        %v938 = vmul.f32 %v918, %v923
        %v939 = vmul.f32 %v919, %v923
        %v940 = vlaneseq
        %v941 = vshrl.u32 %v940, 7
        %v942 = vsub.s32 4, %v941
        %v943 = vrot.slane %v394, %v942
        %v944 = vadd.f32 %v924, %v943
        %v945 = vadd.f32 %v925, %v943
        %v946 = vadd.f32 %v926, %v943
        %v947 = vadd.f32 %v927, %v943
        %v948 = vadd.f32 %v928, %v943
        %v949 = vadd.f32 %v929, %v943
        %v950 = vadd.f32 %v930, %v943
        %v951 = vadd.f32 %v931, %v943
        %v952 = vadd.f32 %v932, %v943
        %v953 = vadd.f32 %v933, %v943
        %v954 = vadd.f32 %v934, %v943
        %v955 = vadd.f32 %v935, %v943
        %v956 = vadd.f32 %v936, %v943
        %v957 = vadd.f32 %v937, %v943
        %v958 = vadd.f32 %v938, %v943
        %v959 = vadd.f32 %v939, %v943
        %v960 = vld [vmem:[%s3] sm:$0xf]
        %v961 = vld [vmem:[%s3 + $0x4] sm:$0xf]
        %v962 = vld [vmem:[%s3 + $0x8] sm:$0xf]
        %v963 = vld [vmem:[%s3 + $0xc] sm:$0xf]
        %v964 = vld [vmem:[%s3 + $0x10] sm:$0xf]
        %v965 = vld [vmem:[%s3 + $0x14] sm:$0xf]
        %v966 = vld [vmem:[%s3 + $0x18] sm:$0xf]
        %v967 = vld [vmem:[%s3 + $0x1c] sm:$0xf]
        %v968 = vld [vmem:[%s3 + $0x20] sm:$0xf]
        %v969 = vld [vmem:[%s3 + $0x24] sm:$0xf]
        %v970 = vld [vmem:[%s3 + $0x28] sm:$0xf]
        %v971 = vld [vmem:[%s3 + $0x2c] sm:$0xf]
        %v972 = vld [vmem:[%s3 + $0x30] sm:$0xf]
        %v973 = vld [vmem:[%s3 + $0x34] sm:$0xf]
        %v974 = vld [vmem:[%s3 + $0x38] sm:$0xf]
        %v975 = vld [vmem:[%s3 + $0x3c] sm:$0xf]
        %v976 = vlaneseq
        %v977 = vshrl.u32 %v976, 7
        %v978 = vsub.s32 2, %v977
        %v979 = vrot.slane %v394, %v978
        %v996 = vunpack.c.l.b16 %v960
        %v997 = vunpack.c.l.b16 %v961
        %v998 = vunpack.c.l.b16 %v962
        %v999 = vunpack.c.l.b16 %v963
        %v1000 = vunpack.c.l.b16 %v964
        %v1001 = vunpack.c.l.b16 %v965
        %v1002 = vunpack.c.l.b16 %v966
        %v1003 = vunpack.c.l.b16 %v967
        %v1004 = vunpack.c.l.b16 %v968
        %v1005 = vunpack.c.l.b16 %v969
        %v1006 = vunpack.c.l.b16 %v970
        %v1007 = vunpack.c.l.b16 %v971
        %v1008 = vunpack.c.l.b16 %v972
        %v1009 = vunpack.c.l.b16 %v973
        %v1010 = vunpack.c.l.b16 %v974
        %v1011 = vunpack.c.l.b16 %v975
        %v1012 = vpack.c.b16 %v997, %v996
        %v1013 = vpack.c.b16 %v999, %v998
        %v1014 = vpack.c.b16 %v1001, %v1000
        %v1015 = vpack.c.b16 %v1003, %v1002
        %v1016 = vpack.c.b16 %v1005, %v1004
        %v1017 = vpack.c.b16 %v1007, %v1006
        %v1018 = vpack.c.b16 %v1009, %v1008
        %v1019 = vpack.c.b16 %v1011, %v1010
        %1028 = vmatprep.subr.bf16.mxu0 0
        %1029 = vmatpush1.bf16.msra.mxu0 %v1012
        %1030 = vmatprep.subr.bf16.mxu0 0
        %1031 = vmatpush1.bf16.msra.mxu0 %v1013
        %1032 = vmatprep.subr.bf16.mxu0 0
        %1033 = vmatpush1.bf16.msra.mxu0 %v1014
        %1034 = vmatprep.subr.bf16.mxu0 0
        %1035 = vmatpush1.bf16.msra.mxu0 %v1015
        %1036 = vmatprep.subr.bf16.mxu0 0
        %1037 = vmatpush1.bf16.msra.mxu0 %v1016
        %1038 = vmatprep.subr.bf16.mxu0 0
        %1039 = vmatpush1.bf16.msra.mxu0 %v1017
        %1040 = vmatprep.subr.bf16.mxu0 0
        %1041 = vmatpush1.bf16.msra.mxu0 %v1018
        %1042 = vmatprep.subr.bf16.mxu0 0
        %1043 = vmatpush1.bf16.msra.mxu0 %v1019
        %1044 = vmatprep.subr.bf16.mxu0 0
        %1045 = vmatpush1.bf16.msra.mxu0 0
        %1046 = vmatprep.subr.bf16.mxu0 0
        %1047 = vmatpush1.bf16.msra.mxu0 0
        %1048 = vmatprep.subr.bf16.mxu0 0
        %1049 = vmatpush1.bf16.msra.mxu0 0
        %1050 = vmatprep.subr.bf16.mxu0 0
        %1051 = vmatpush1.bf16.msra.mxu0 0
        %1052 = vmatprep.subr.bf16.mxu0 0
        %1053 = vmatpush1.bf16.msra.mxu0 0
        %1054 = vmatprep.subr.bf16.mxu0 0
        %1055 = vmatpush1.bf16.msra.mxu0 0
        %1056 = vmatprep.subr.bf16.mxu0 0
        %1057 = vmatpush1.bf16.msra.mxu0 0
        %1058 = vmatprep.subr.bf16.mxu0 0
        %1059 = vmatpush1.bf16.msra.mxu0 0
        %1060 = vmatprep.mubr.bf16.mxu0 0
        %1061 = vmatmul.mubr.bf16.gmra.mrb[0].mxu0 %v554
        %v1062 = vpop.f32.mrb[0].mxu0
        %v1063 = vadd.f32 %v979, %v1062
        %v1064 = vpop.f32.mrb[0].mxu0
        %v1065 = vpop.f32.mrb[0].mxu0
        %v1066 = vadd.f32 %v979, %v1065
        %v1067 = vpop.f32.mrb[0].mxu0
        %1068 = vmatprep.mubr.bf16.mxu0 0
        %1069 = vmatmul.mubr.bf16.gmra.mrb[0].mxu0 %v555
        %v1070 = vpop.f32.mrb[0].mxu0
        %v1071 = vadd.f32 %v979, %v1070
        %v1072 = vpop.f32.mrb[0].mxu0
        %v1073 = vpop.f32.mrb[0].mxu0
        %v1074 = vadd.f32 %v979, %v1073
        %v1075 = vpop.f32.mrb[0].mxu0
        %1076 = vmatprep.mubr.bf16.mxu0 0
        %1077 = vmatmul.mubr.bf16.gmra.mrb[0].mxu0 %v556
        %v1078 = vpop.f32.mrb[0].mxu0
        %v1079 = vadd.f32 %v979, %v1078
        %v1080 = vpop.f32.mrb[0].mxu0
        %v1081 = vpop.f32.mrb[0].mxu0
        %v1082 = vadd.f32 %v979, %v1081
        %v1083 = vpop.f32.mrb[0].mxu0
        %1084 = vmatprep.mubr.bf16.mxu0 0
        %1085 = vmatmul.mubr.bf16.gmra.mrb[0].mxu0 %v557
        %v1086 = vpop.f32.mrb[0].mxu0
        %v1087 = vadd.f32 %v979, %v1086
        %v1088 = vpop.f32.mrb[0].mxu0
        %v1089 = vpop.f32.mrb[0].mxu0
        %v1090 = vadd.f32 %v979, %v1089
        %v1091 = vpop.f32.mrb[0].mxu0
        %1092 = vmatprep.mubr.bf16.mxu0 0
        %1093 = vmatmul.mubr.bf16.gmra.mrb[0].mxu0 %v558
        %v1094 = vpop.f32.mrb[0].mxu0
        %v1095 = vadd.f32 %v979, %v1094
        %v1096 = vpop.f32.mrb[0].mxu0
        %v1097 = vpop.f32.mrb[0].mxu0
        %v1098 = vadd.f32 %v979, %v1097
        %v1099 = vpop.f32.mrb[0].mxu0
        %1100 = vmatprep.mubr.bf16.mxu0 0
        %1101 = vmatmul.mubr.bf16.gmra.mrb[0].mxu0 %v559
        %v1102 = vpop.f32.mrb[0].mxu0
        %v1103 = vadd.f32 %v979, %v1102
        %v1104 = vpop.f32.mrb[0].mxu0
        %v1105 = vpop.f32.mrb[0].mxu0
        %v1106 = vadd.f32 %v979, %v1105
        %v1107 = vpop.f32.mrb[0].mxu0
        %1108 = vmatprep.mubr.bf16.mxu0 0
        %1109 = vmatmul.mubr.bf16.gmra.mrb[0].mxu0 %v560
        %v1110 = vpop.f32.mrb[0].mxu0
        %v1111 = vadd.f32 %v979, %v1110
        %v1112 = vpop.f32.mrb[0].mxu0
        %v1113 = vpop.f32.mrb[0].mxu0
        %v1114 = vadd.f32 %v979, %v1113
        %v1115 = vpop.f32.mrb[0].mxu0
        %1116 = vmatprep.mubr.bf16.mxu0 0
        %1117 = vmatmul.mubr.bf16.gmra.mrb[0].mxu0 %v561
        %v1118 = vpop.f32.mrb[0].mxu0
        %v1119 = vadd.f32 %v979, %v1118
        %v1120 = vpop.f32.mrb[0].mxu0
        %v1121 = vpop.f32.mrb[0].mxu0
        %v1122 = vadd.f32 %v979, %v1121
        %v1123 = vpop.f32.mrb[0].mxu0
        %1124 = vdwg.mxu0
        %v1125 = vadd.f32 %v944, %v1063
        %v1126 = vadd.f32 %v945, %v1066
        %v1127 = vadd.f32 %v946, %v1071
        %v1128 = vadd.f32 %v947, %v1074
        %v1129 = vadd.f32 %v948, %v1079
        %v1130 = vadd.f32 %v949, %v1082
        %v1131 = vadd.f32 %v950, %v1087
        %v1132 = vadd.f32 %v951, %v1090
        %v1133 = vadd.f32 %v952, %v1095
        %v1134 = vadd.f32 %v953, %v1098
        %v1135 = vadd.f32 %v954, %v1103
        %v1136 = vadd.f32 %v955, %v1106
        %v1137 = vadd.f32 %v956, %v1111
        %v1138 = vadd.f32 %v957, %v1114
        %v1139 = vadd.f32 %v958, %v1119
        %v1140 = vadd.f32 %v959, %v1122
        %1141 = vadd.xlane.f32.xlu0 %v1125
        %v1142 = vpop.xlane.xlu0 %1141
        %1143 = vadd.xlane.f32.xlu0 %v1126
        %v1144 = vpop.xlane.xlu0 %1143
        %1145 = vadd.xlane.f32.xlu0 %v1127
        %v1146 = vpop.xlane.xlu0 %1145
        %1147 = vadd.xlane.f32.xlu0 %v1128
        %v1148 = vpop.xlane.xlu0 %1147
        %1149 = vadd.xlane.f32.xlu0 %v1129
        %v1150 = vpop.xlane.xlu0 %1149
        %1151 = vadd.xlane.f32.xlu0 %v1130
        %v1152 = vpop.xlane.xlu0 %1151
        %1153 = vadd.xlane.f32.xlu0 %v1131
        %v1154 = vpop.xlane.xlu0 %1153
        %1155 = vadd.xlane.f32.xlu0 %v1132
        %v1156 = vpop.xlane.xlu0 %1155
        %1157 = vadd.xlane.f32.xlu0 %v1133
        %v1158 = vpop.xlane.xlu0 %1157
        %1159 = vadd.xlane.f32.xlu0 %v1134
        %v1160 = vpop.xlane.xlu0 %1159
        %1161 = vadd.xlane.f32.xlu0 %v1135
        %v1162 = vpop.xlane.xlu0 %1161
        %1163 = vadd.xlane.f32.xlu0 %v1136
        %v1164 = vpop.xlane.xlu0 %1163
        %1165 = vadd.xlane.f32.xlu0 %v1137
        %v1166 = vpop.xlane.xlu0 %1165
        %1167 = vadd.xlane.f32.xlu0 %v1138
        %v1168 = vpop.xlane.xlu0 %1167
        %1169 = vadd.xlane.f32.xlu0 %v1139
        %v1170 = vpop.xlane.xlu0 %1169
        %1171 = vadd.xlane.f32.xlu0 %v1140
        %v1172 = vpop.xlane.xlu0 %1171
        %v1173 = vmul.f32 %v1142, %v775
        %v1174 = vmul.f32 %v1144, %v775
        %v1175 = vmul.f32 %v1146, %v775
        %v1176 = vmul.f32 %v1148, %v775
        %v1177 = vmul.f32 %v1150, %v775
        %v1178 = vmul.f32 %v1152, %v775
        %v1179 = vmul.f32 %v1154, %v775
        %v1180 = vmul.f32 %v1156, %v775
        %v1181 = vmul.f32 %v1158, %v775
        %v1182 = vmul.f32 %v1160, %v775
        %v1183 = vmul.f32 %v1162, %v775
        %v1184 = vmul.f32 %v1164, %v775
        %v1185 = vmul.f32 %v1166, %v775
        %v1186 = vmul.f32 %v1168, %v775
        %v1187 = vmul.f32 %v1170, %v775
        %v1188 = vmul.f32 %v1172, %v775
        %v1189 = vsub.f32 %v1125, %v1173
        %v1190 = vsub.f32 %v1126, %v1174
        %v1191 = vsub.f32 %v1127, %v1175
        %v1192 = vsub.f32 %v1128, %v1176
        %v1193 = vsub.f32 %v1129, %v1177
        %v1194 = vsub.f32 %v1130, %v1178
        %v1195 = vsub.f32 %v1131, %v1179
        %v1196 = vsub.f32 %v1132, %v1180
        %v1197 = vsub.f32 %v1133, %v1181
        %v1198 = vsub.f32 %v1134, %v1182
        %v1199 = vsub.f32 %v1135, %v1183
        %v1200 = vsub.f32 %v1136, %v1184
        %v1201 = vsub.f32 %v1137, %v1185
        %v1202 = vsub.f32 %v1138, %v1186
        %v1203 = vsub.f32 %v1139, %v1187
        %v1204 = vsub.f32 %v1140, %v1188
        %v1205 = vmul.f32 %v1189, %v1189
        %v1206 = vmul.f32 %v1190, %v1190
        %v1207 = vmul.f32 %v1191, %v1191
        %v1208 = vmul.f32 %v1192, %v1192
        %v1209 = vmul.f32 %v1193, %v1193
        %v1210 = vmul.f32 %v1194, %v1194
        %v1211 = vmul.f32 %v1195, %v1195
        %v1212 = vmul.f32 %v1196, %v1196
        %v1213 = vmul.f32 %v1197, %v1197
        %v1214 = vmul.f32 %v1198, %v1198
        %v1215 = vmul.f32 %v1199, %v1199
        %v1216 = vmul.f32 %v1200, %v1200
        %v1217 = vmul.f32 %v1201, %v1201
        %v1218 = vmul.f32 %v1202, %v1202
        %v1219 = vmul.f32 %v1203, %v1203
        %v1220 = vmul.f32 %v1204, %v1204
        %1221 = vadd.xlane.f32.xlu0 %v1205
        %v1222 = vpop.xlane.xlu0 %1221
        %1223 = vadd.xlane.f32.xlu0 %v1206
        %v1224 = vpop.xlane.xlu0 %1223
        %1225 = vadd.xlane.f32.xlu0 %v1207
        %v1226 = vpop.xlane.xlu0 %1225
        %1227 = vadd.xlane.f32.xlu0 %v1208
        %v1228 = vpop.xlane.xlu0 %1227
        %1229 = vadd.xlane.f32.xlu0 %v1209
        %v1230 = vpop.xlane.xlu0 %1229
        %1231 = vadd.xlane.f32.xlu0 %v1210
        %v1232 = vpop.xlane.xlu0 %1231
        %1233 = vadd.xlane.f32.xlu0 %v1211
        %v1234 = vpop.xlane.xlu0 %1233
        %1235 = vadd.xlane.f32.xlu0 %v1212
        %v1236 = vpop.xlane.xlu0 %1235
        %1237 = vadd.xlane.f32.xlu0 %v1213
        %v1238 = vpop.xlane.xlu0 %1237
        %1239 = vadd.xlane.f32.xlu0 %v1214
        %v1240 = vpop.xlane.xlu0 %1239
        %1241 = vadd.xlane.f32.xlu0 %v1215
        %v1242 = vpop.xlane.xlu0 %1241
        %1243 = vadd.xlane.f32.xlu0 %v1216
        %v1244 = vpop.xlane.xlu0 %1243
        %1245 = vadd.xlane.f32.xlu0 %v1217
        %v1246 = vpop.xlane.xlu0 %1245
        %1247 = vadd.xlane.f32.xlu0 %v1218
        %v1248 = vpop.xlane.xlu0 %1247
        %1249 = vadd.xlane.f32.xlu0 %v1219
        %v1250 = vpop.xlane.xlu0 %1249
        %1251 = vadd.xlane.f32.xlu0 %v1220
        %v1252 = vpop.xlane.xlu0 %1251
        %v1253 = vmul.f32 %v1222, %v775
        %v1254 = vmul.f32 %v1224, %v775
        %v1255 = vmul.f32 %v1226, %v775
        %v1256 = vmul.f32 %v1228, %v775
        %v1257 = vmul.f32 %v1230, %v775
        %v1258 = vmul.f32 %v1232, %v775
        %v1259 = vmul.f32 %v1234, %v775
        %v1260 = vmul.f32 %v1236, %v775
        %v1261 = vmul.f32 %v1238, %v775
        %v1262 = vmul.f32 %v1240, %v775
        %v1263 = vmul.f32 %v1242, %v775
        %v1264 = vmul.f32 %v1244, %v775
        %v1265 = vmul.f32 %v1246, %v775
        %v1266 = vmul.f32 %v1248, %v775
        %v1267 = vmul.f32 %v1250, %v775
        %v1268 = vmul.f32 %v1252, %v775
        %v1269 = vadd.f32 %v1253, 1e-05
        %v1270 = vadd.f32 %v1254, 1e-05
        %v1271 = vadd.f32 %v1255, 1e-05
        %v1272 = vadd.f32 %v1256, 1e-05
        %v1273 = vadd.f32 %v1257, 1e-05
        %v1274 = vadd.f32 %v1258, 1e-05
        %v1275 = vadd.f32 %v1259, 1e-05
        %v1276 = vadd.f32 %v1260, 1e-05
        %v1277 = vadd.f32 %v1261, 1e-05
        %v1278 = vadd.f32 %v1262, 1e-05
        %v1279 = vadd.f32 %v1263, 1e-05
        %v1280 = vadd.f32 %v1264, 1e-05
        %v1281 = vadd.f32 %v1265, 1e-05
        %v1282 = vadd.f32 %v1266, 1e-05
        %v1283 = vadd.f32 %v1267, 1e-05
        %v1284 = vadd.f32 %v1268, 1e-05
        %v1285 = vrsqrt.pop %v1269
        %v1286 = vrsqrt.pop %v1270
        %v1287 = vrsqrt.pop %v1271
        %v1288 = vrsqrt.pop %v1272
        %v1289 = vrsqrt.pop %v1273
        %v1290 = vrsqrt.pop %v1274
        %v1291 = vrsqrt.pop %v1275
        %v1292 = vrsqrt.pop %v1276
        %v1293 = vrsqrt.pop %v1277
        %v1294 = vrsqrt.pop %v1278
        %v1295 = vrsqrt.pop %v1279
        %v1296 = vrsqrt.pop %v1280
        %v1297 = vrsqrt.pop %v1281
        %v1298 = vrsqrt.pop %v1282
        %v1299 = vrsqrt.pop %v1283
        %v1300 = vrsqrt.pop %v1284
        %v1301 = vmul.f32 %v1189, %v1285
        %v1302 = vmul.f32 %v1190, %v1286
        %v1303 = vmul.f32 %v1191, %v1287
        %v1304 = vmul.f32 %v1192, %v1288
        %v1305 = vmul.f32 %v1193, %v1289
        %v1306 = vmul.f32 %v1194, %v1290
        %v1307 = vmul.f32 %v1195, %v1291
        %v1308 = vmul.f32 %v1196, %v1292
        %v1309 = vmul.f32 %v1197, %v1293
        %v1310 = vmul.f32 %v1198, %v1294
        %v1311 = vmul.f32 %v1199, %v1295
        %v1312 = vmul.f32 %v1200, %v1296
        %v1313 = vmul.f32 %v1201, %v1297
        %v1314 = vmul.f32 %v1202, %v1298
        %v1315 = vmul.f32 %v1203, %v1299
        %v1316 = vmul.f32 %v1204, %v1300
        %v1317 = vlaneseq
        %v1318 = vshrl.u32 %v1317, 7
        %v1319 = vsub.s32 5, %v1318
        %v1320 = vrot.slane %v394, %v1319
        %v1321 = vmul.f32 %v1301, %v1320
        %v1322 = vmul.f32 %v1302, %v1320
        %v1323 = vmul.f32 %v1303, %v1320
        %v1324 = vmul.f32 %v1304, %v1320
        %v1325 = vmul.f32 %v1305, %v1320
        %v1326 = vmul.f32 %v1306, %v1320
        %v1327 = vmul.f32 %v1307, %v1320
        %v1328 = vmul.f32 %v1308, %v1320
        %v1329 = vmul.f32 %v1309, %v1320
        %v1330 = vmul.f32 %v1310, %v1320
        %v1331 = vmul.f32 %v1311, %v1320
        %v1332 = vmul.f32 %v1312, %v1320
        %v1333 = vmul.f32 %v1313, %v1320
        %v1334 = vmul.f32 %v1314, %v1320
        %v1335 = vmul.f32 %v1315, %v1320
        %v1336 = vmul.f32 %v1316, %v1320
        %v1337 = vlaneseq
        %v1338 = vshrl.u32 %v1337, 7
        %v1339 = vsub.s32 6, %v1338
        %v1340 = vrot.slane %v394, %v1339
        %v1341 = vadd.f32 %v1321, %v1340
        %v1342 = vadd.f32 %v1322, %v1340
        %v1343 = vadd.f32 %v1323, %v1340
        %v1344 = vadd.f32 %v1324, %v1340
        %v1345 = vadd.f32 %v1325, %v1340
        %v1346 = vadd.f32 %v1326, %v1340
        %v1347 = vadd.f32 %v1327, %v1340
        %v1348 = vadd.f32 %v1328, %v1340
        %v1349 = vadd.f32 %v1329, %v1340
        %v1350 = vadd.f32 %v1330, %v1340
        %v1351 = vadd.f32 %v1331, %v1340
        %v1352 = vadd.f32 %v1332, %v1340
        %v1353 = vadd.f32 %v1333, %v1340
        %v1354 = vadd.f32 %v1334, %v1340
        %v1355 = vadd.f32 %v1335, %v1340
        %v1356 = vadd.f32 %v1336, %v1340
        %v1357 = vpack.c.bf16 %v1342, %v1341
        %v1358 = vpack.c.bf16 %v1344, %v1343
        %v1359 = vpack.c.bf16 %v1346, %v1345
        %v1360 = vpack.c.bf16 %v1348, %v1347
        %v1361 = vpack.c.bf16 %v1350, %v1349
        %v1362 = vpack.c.bf16 %v1352, %v1351
        %v1363 = vpack.c.bf16 %v1354, %v1353
        %v1364 = vpack.c.bf16 %v1356, %v1355
        %v1365 = vld [vmem:[#allocation2] sm:$0xff]
        %v1366 = vld [vmem:[#allocation2 + $0x8] sm:$0xff]
        %v1367 = vld [vmem:[#allocation2 + $0x10] sm:$0xff]
        %v1368 = vld [vmem:[#allocation2 + $0x18] sm:$0xff]
        %v1369 = vld [vmem:[#allocation2 + $0x20] sm:$0xff]
        %v1370 = vld [vmem:[#allocation2 + $0x28] sm:$0xff]
        %v1371 = vld [vmem:[#allocation2 + $0x30] sm:$0xff]
        %v1372 = vld [vmem:[#allocation2 + $0x38] sm:$0xff]
        %v1373 = vld [vmem:[#allocation2 + $0x40] sm:$0xff]
        %v1374 = vld [vmem:[#allocation2 + $0x48] sm:$0xff]
        %v1375 = vld [vmem:[#allocation2 + $0x50] sm:$0xff]
        %v1376 = vld [vmem:[#allocation2 + $0x58] sm:$0xff]
        %v1377 = vld [vmem:[#allocation2 + $0x60] sm:$0xff]
        %v1378 = vld [vmem:[#allocation2 + $0x68] sm:$0xff]
        %v1379 = vld [vmem:[#allocation2 + $0x70] sm:$0xff]
        %v1380 = vld [vmem:[#allocation2 + $0x78] sm:$0xff]
        %v1381 = vld [vmem:[#allocation2 + $0x80] sm:$0xff]
        %v1382 = vld [vmem:[#allocation2 + $0x88] sm:$0xff]
        %v1383 = vld [vmem:[#allocation2 + $0x90] sm:$0xff]
        %v1384 = vld [vmem:[#allocation2 + $0x98] sm:$0xff]
        %v1385 = vld [vmem:[#allocation2 + $0xa0] sm:$0xff]
        %v1386 = vld [vmem:[#allocation2 + $0xa8] sm:$0xff]
        %v1387 = vld [vmem:[#allocation2 + $0xb0] sm:$0xff]
        %v1388 = vld [vmem:[#allocation2 + $0xb8] sm:$0xff]
        %v1389 = vld [vmem:[#allocation2 + $0xc0] sm:$0xff]
        %v1390 = vld [vmem:[#allocation2 + $0xc8] sm:$0xff]
        %v1391 = vld [vmem:[#allocation2 + $0xd0] sm:$0xff]
        %v1392 = vld [vmem:[#allocation2 + $0xd8] sm:$0xff]
        %v1393 = vld [vmem:[#allocation2 + $0xe0] sm:$0xff]
        %v1394 = vld [vmem:[#allocation2 + $0xe8] sm:$0xff]
        %v1395 = vld [vmem:[#allocation2 + $0xf0] sm:$0xff]
        %v1396 = vld [vmem:[#allocation2 + $0xf8] sm:$0xff]
        %v1397 = vld [vmem:[#allocation2 + $0x100] sm:$0xff]
        %v1398 = vld [vmem:[#allocation2 + $0x108] sm:$0xff]
        %v1399 = vld [vmem:[#allocation2 + $0x110] sm:$0xff]
        %v1400 = vld [vmem:[#allocation2 + $0x118] sm:$0xff]
        %v1401 = vld [vmem:[#allocation2 + $0x120] sm:$0xff]
        %v1402 = vld [vmem:[#allocation2 + $0x128] sm:$0xff]
        %v1403 = vld [vmem:[#allocation2 + $0x130] sm:$0xff]
        %v1404 = vld [vmem:[#allocation2 + $0x138] sm:$0xff]
        %v1405 = vld [vmem:[#allocation2 + $0x140] sm:$0xff]
        %v1406 = vld [vmem:[#allocation2 + $0x148] sm:$0xff]
        %v1407 = vld [vmem:[#allocation2 + $0x150] sm:$0xff]
        %v1408 = vld [vmem:[#allocation2 + $0x158] sm:$0xff]
        %v1409 = vld [vmem:[#allocation2 + $0x160] sm:$0xff]
        %v1410 = vld [vmem:[#allocation2 + $0x168] sm:$0xff]
        %v1411 = vld [vmem:[#allocation2 + $0x170] sm:$0xff]
        %v1412 = vld [vmem:[#allocation2 + $0x178] sm:$0xff]
        %v1413 = vld [vmem:[#allocation2 + $0x180] sm:$0xff]
        %v1414 = vld [vmem:[#allocation2 + $0x188] sm:$0xff]
        %v1415 = vld [vmem:[#allocation2 + $0x190] sm:$0xff]
        %v1416 = vld [vmem:[#allocation2 + $0x198] sm:$0xff]
        %v1417 = vld [vmem:[#allocation2 + $0x1a0] sm:$0xff]
        %v1418 = vld [vmem:[#allocation2 + $0x1a8] sm:$0xff]
        %v1419 = vld [vmem:[#allocation2 + $0x1b0] sm:$0xff]
        %v1420 = vld [vmem:[#allocation2 + $0x1b8] sm:$0xff]
        %v1421 = vld [vmem:[#allocation2 + $0x1c0] sm:$0xff]
        %v1422 = vld [vmem:[#allocation2 + $0x1c8] sm:$0xff]
        %v1423 = vld [vmem:[#allocation2 + $0x1d0] sm:$0xff]
        %v1424 = vld [vmem:[#allocation2 + $0x1d8] sm:$0xff]
        %v1425 = vld [vmem:[#allocation2 + $0x1e0] sm:$0xff]
        %v1426 = vld [vmem:[#allocation2 + $0x1e8] sm:$0xff]
        %v1427 = vld [vmem:[#allocation2 + $0x1f0] sm:$0xff]
        %v1428 = vld [vmem:[#allocation2 + $0x1f8] sm:$0xff]
        %v1429 = vld [vmem:[#allocation2 + $0x200] sm:$0xff]
        %v1430 = vld [vmem:[#allocation2 + $0x208] sm:$0xff]
        %v1431 = vld [vmem:[#allocation2 + $0x210] sm:$0xff]
        %v1432 = vld [vmem:[#allocation2 + $0x218] sm:$0xff]
        %v1433 = vld [vmem:[#allocation2 + $0x220] sm:$0xff]
        %v1434 = vld [vmem:[#allocation2 + $0x228] sm:$0xff]
        %v1435 = vld [vmem:[#allocation2 + $0x230] sm:$0xff]
        %v1436 = vld [vmem:[#allocation2 + $0x238] sm:$0xff]
        %v1437 = vld [vmem:[#allocation2 + $0x240] sm:$0xff]
        %v1438 = vld [vmem:[#allocation2 + $0x248] sm:$0xff]
        %v1439 = vld [vmem:[#allocation2 + $0x250] sm:$0xff]
        %v1440 = vld [vmem:[#allocation2 + $0x258] sm:$0xff]
        %v1441 = vld [vmem:[#allocation2 + $0x260] sm:$0xff]
        %v1442 = vld [vmem:[#allocation2 + $0x268] sm:$0xff]
        %v1443 = vld [vmem:[#allocation2 + $0x270] sm:$0xff]
        %v1444 = vld [vmem:[#allocation2 + $0x278] sm:$0xff]
        %v1445 = vld [vmem:[#allocation2 + $0x280] sm:$0xff]
        %v1446 = vld [vmem:[#allocation2 + $0x288] sm:$0xff]
        %v1447 = vld [vmem:[#allocation2 + $0x290] sm:$0xff]
        %v1448 = vld [vmem:[#allocation2 + $0x298] sm:$0xff]
        %v1449 = vld [vmem:[#allocation2 + $0x2a0] sm:$0xff]
        %v1450 = vld [vmem:[#allocation2 + $0x2a8] sm:$0xff]
        %v1451 = vld [vmem:[#allocation2 + $0x2b0] sm:$0xff]
        %v1452 = vld [vmem:[#allocation2 + $0x2b8] sm:$0xff]
        %v1453 = vld [vmem:[#allocation2 + $0x2c0] sm:$0xff]
        %v1454 = vld [vmem:[#allocation2 + $0x2c8] sm:$0xff]
        %v1455 = vld [vmem:[#allocation2 + $0x2d0] sm:$0xff]
        %v1456 = vld [vmem:[#allocation2 + $0x2d8] sm:$0xff]
        %v1457 = vld [vmem:[#allocation2 + $0x2e0] sm:$0xff]
        %v1458 = vld [vmem:[#allocation2 + $0x2e8] sm:$0xff]
        %v1459 = vld [vmem:[#allocation2 + $0x2f0] sm:$0xff]
        %v1460 = vld [vmem:[#allocation2 + $0x2f8] sm:$0xff]
        %v1461 = vld [vmem:[#allocation2 + $0x300] sm:$0xff]
        %v1462 = vld [vmem:[#allocation2 + $0x308] sm:$0xff]
        %v1463 = vld [vmem:[#allocation2 + $0x310] sm:$0xff]
        %v1464 = vld [vmem:[#allocation2 + $0x318] sm:$0xff]
        %v1465 = vld [vmem:[#allocation2 + $0x320] sm:$0xff]
        %v1466 = vld [vmem:[#allocation2 + $0x328] sm:$0xff]
        %v1467 = vld [vmem:[#allocation2 + $0x330] sm:$0xff]
        %v1468 = vld [vmem:[#allocation2 + $0x338] sm:$0xff]
        %v1469 = vld [vmem:[#allocation2 + $0x340] sm:$0xff]
        %v1470 = vld [vmem:[#allocation2 + $0x348] sm:$0xff]
        %v1471 = vld [vmem:[#allocation2 + $0x350] sm:$0xff]
        %v1472 = vld [vmem:[#allocation2 + $0x358] sm:$0xff]
        %v1473 = vld [vmem:[#allocation2 + $0x360] sm:$0xff]
        %v1474 = vld [vmem:[#allocation2 + $0x368] sm:$0xff]
        %v1475 = vld [vmem:[#allocation2 + $0x370] sm:$0xff]
        %v1476 = vld [vmem:[#allocation2 + $0x378] sm:$0xff]
        %v1477 = vld [vmem:[#allocation2 + $0x380] sm:$0xff]
        %v1478 = vld [vmem:[#allocation2 + $0x388] sm:$0xff]
        %v1479 = vld [vmem:[#allocation2 + $0x390] sm:$0xff]
        %v1480 = vld [vmem:[#allocation2 + $0x398] sm:$0xff]
        %v1481 = vld [vmem:[#allocation2 + $0x3a0] sm:$0xff]
        %v1482 = vld [vmem:[#allocation2 + $0x3a8] sm:$0xff]
        %v1483 = vld [vmem:[#allocation2 + $0x3b0] sm:$0xff]
        %v1484 = vld [vmem:[#allocation2 + $0x3b8] sm:$0xff]
        %v1485 = vld [vmem:[#allocation2 + $0x3c0] sm:$0xff]
        %v1486 = vld [vmem:[#allocation2 + $0x3c8] sm:$0xff]
        %v1487 = vld [vmem:[#allocation2 + $0x3d0] sm:$0xff]
        %v1488 = vld [vmem:[#allocation2 + $0x3d8] sm:$0xff]
        %v1489 = vld [vmem:[#allocation2 + $0x3e0] sm:$0xff]
        %v1490 = vld [vmem:[#allocation2 + $0x3e8] sm:$0xff]
        %v1491 = vld [vmem:[#allocation2 + $0x3f0] sm:$0xff]
        %v1492 = vld [vmem:[#allocation2 + $0x3f8] sm:$0xff]
        %v1493 = vld [vmem:[%s8] sm:$0xff]
        %v1494 = vld [vmem:[%s8 + $0x8] sm:$0xff]
        %v1497 = vlaneseq
        %v1498 = vshrl.u32 %v1497, 7
        %v1499 = vsub.s32 0, %v1498
        %v1500 = vrot.slane %v1493, %v1499
        %v1501 = vlaneseq
        %v1502 = vshrl.u32 %v1501, 7
        %v1503 = vsub.s32 1, %v1502
        %v1504 = vrot.slane %v1493, %v1503
        %v1505 = vlaneseq
        %v1506 = vshrl.u32 %v1505, 7
        %v1507 = vsub.s32 2, %v1506
        %v1508 = vrot.slane %v1493, %v1507
        %v1509 = vlaneseq
        %v1510 = vshrl.u32 %v1509, 7
        %v1511 = vsub.s32 3, %v1510
        %v1512 = vrot.slane %v1493, %v1511
        %v1513 = vlaneseq
        %v1514 = vshrl.u32 %v1513, 7
        %v1515 = vsub.s32 4, %v1514
        %v1516 = vrot.slane %v1493, %v1515
        %v1517 = vlaneseq
        %v1518 = vshrl.u32 %v1517, 7
        %v1519 = vsub.s32 5, %v1518
        %v1520 = vrot.slane %v1493, %v1519
        %v1521 = vlaneseq
        %v1522 = vshrl.u32 %v1521, 7
        %v1523 = vsub.s32 6, %v1522
        %v1524 = vrot.slane %v1493, %v1523
        %v1525 = vlaneseq
        %v1526 = vshrl.u32 %v1525, 7
        %v1527 = vsub.s32 7, %v1526
        %v1528 = vrot.slane %v1493, %v1527
        %v1529 = vlaneseq
        %v1530 = vshrl.u32 %v1529, 7
        %v1531 = vsub.s32 0, %v1530
        %v1532 = vrot.slane %v1494, %v1531
        %v1533 = vlaneseq
        %v1534 = vshrl.u32 %v1533, 7
        %v1535 = vsub.s32 1, %v1534
        %v1536 = vrot.slane %v1494, %v1535
        %v1537 = vlaneseq
        %v1538 = vshrl.u32 %v1537, 7
        %v1539 = vsub.s32 2, %v1538
        %v1540 = vrot.slane %v1494, %v1539
        %v1541 = vlaneseq
        %v1542 = vshrl.u32 %v1541, 7
        %v1543 = vsub.s32 3, %v1542
        %v1544 = vrot.slane %v1494, %v1543
        %v1545 = vlaneseq
        %v1546 = vshrl.u32 %v1545, 7
        %v1547 = vsub.s32 4, %v1546
        %v1548 = vrot.slane %v1494, %v1547
        %v1549 = vlaneseq
        %v1550 = vshrl.u32 %v1549, 7
        %v1551 = vsub.s32 5, %v1550
        %v1552 = vrot.slane %v1494, %v1551
        %v1553 = vlaneseq
        %v1554 = vshrl.u32 %v1553, 7
        %v1555 = vsub.s32 6, %v1554
        %v1556 = vrot.slane %v1494, %v1555
        %v1557 = vlaneseq
        %v1558 = vshrl.u32 %v1557, 7
        %v1559 = vsub.s32 7, %v1558
        %v1560 = vrot.slane %v1494, %v1559
        %v1705 = vunpack.c.l.b16 %v1365
        %v1706 = vunpack.c.h.b16 %v1365
        %v1707 = vunpack.c.l.b16 %v1366
        %v1708 = vunpack.c.h.b16 %v1366
        %v1709 = vunpack.c.l.b16 %v1367
        %v1710 = vunpack.c.h.b16 %v1367
        %v1711 = vunpack.c.l.b16 %v1368
        %v1712 = vunpack.c.h.b16 %v1368
        %v1713 = vunpack.c.l.b16 %v1369
        %v1714 = vunpack.c.h.b16 %v1369
        %v1715 = vunpack.c.l.b16 %v1370
        %v1716 = vunpack.c.h.b16 %v1370
        %v1717 = vunpack.c.l.b16 %v1371
        %v1718 = vunpack.c.h.b16 %v1371
        %v1719 = vunpack.c.l.b16 %v1372
        %v1720 = vunpack.c.h.b16 %v1372
        %v1721 = vunpack.c.l.b16 %v1373
        %v1722 = vunpack.c.h.b16 %v1373
        %v1723 = vunpack.c.l.b16 %v1374
        %v1724 = vunpack.c.h.b16 %v1374
        %v1725 = vunpack.c.l.b16 %v1375
        %v1726 = vunpack.c.h.b16 %v1375
        %v1727 = vunpack.c.l.b16 %v1376
        %v1728 = vunpack.c.h.b16 %v1376
        %v1729 = vunpack.c.l.b16 %v1377
        %v1730 = vunpack.c.h.b16 %v1377
        %v1731 = vunpack.c.l.b16 %v1378
        %v1732 = vunpack.c.h.b16 %v1378
        %v1733 = vunpack.c.l.b16 %v1379
        %v1734 = vunpack.c.h.b16 %v1379
        %v1735 = vunpack.c.l.b16 %v1380
        %v1736 = vunpack.c.h.b16 %v1380
        %v1737 = vunpack.c.l.b16 %v1381
        %v1738 = vunpack.c.h.b16 %v1381
        %v1739 = vunpack.c.l.b16 %v1382
        %v1740 = vunpack.c.h.b16 %v1382
        %v1741 = vunpack.c.l.b16 %v1383
        %v1742 = vunpack.c.h.b16 %v1383
        %v1743 = vunpack.c.l.b16 %v1384
        %v1744 = vunpack.c.h.b16 %v1384
        %v1745 = vunpack.c.l.b16 %v1385
        %v1746 = vunpack.c.h.b16 %v1385
        %v1747 = vunpack.c.l.b16 %v1386
        %v1748 = vunpack.c.h.b16 %v1386
        %v1749 = vunpack.c.l.b16 %v1387
        %v1750 = vunpack.c.h.b16 %v1387
        %v1751 = vunpack.c.l.b16 %v1388
        %v1752 = vunpack.c.h.b16 %v1388
        %v1753 = vunpack.c.l.b16 %v1389
        %v1754 = vunpack.c.h.b16 %v1389
        %v1755 = vunpack.c.l.b16 %v1390
        %v1756 = vunpack.c.h.b16 %v1390
        %v1757 = vunpack.c.l.b16 %v1391
        %v1758 = vunpack.c.h.b16 %v1391
        %v1759 = vunpack.c.l.b16 %v1392
        %v1760 = vunpack.c.h.b16 %v1392
        %v1761 = vunpack.c.l.b16 %v1393
        %v1762 = vunpack.c.h.b16 %v1393
        %v1763 = vunpack.c.l.b16 %v1394
        %v1764 = vunpack.c.h.b16 %v1394
        %v1765 = vunpack.c.l.b16 %v1395
        %v1766 = vunpack.c.h.b16 %v1395
        %v1767 = vunpack.c.l.b16 %v1396
        %v1768 = vunpack.c.h.b16 %v1396
        %v1769 = vunpack.c.l.b16 %v1397
        %v1770 = vunpack.c.h.b16 %v1397
        %v1771 = vunpack.c.l.b16 %v1398
        %v1772 = vunpack.c.h.b16 %v1398
        %v1773 = vunpack.c.l.b16 %v1399
        %v1774 = vunpack.c.h.b16 %v1399
        %v1775 = vunpack.c.l.b16 %v1400
        %v1776 = vunpack.c.h.b16 %v1400
        %v1777 = vunpack.c.l.b16 %v1401
        %v1778 = vunpack.c.h.b16 %v1401
        %v1779 = vunpack.c.l.b16 %v1402
        %v1780 = vunpack.c.h.b16 %v1402
        %v1781 = vunpack.c.l.b16 %v1403
        %v1782 = vunpack.c.h.b16 %v1403
        %v1783 = vunpack.c.l.b16 %v1404
        %v1784 = vunpack.c.h.b16 %v1404
        %v1785 = vunpack.c.l.b16 %v1405
        %v1786 = vunpack.c.h.b16 %v1405
        %v1787 = vunpack.c.l.b16 %v1406
        %v1788 = vunpack.c.h.b16 %v1406
        %v1789 = vunpack.c.l.b16 %v1407
        %v1790 = vunpack.c.h.b16 %v1407
        %v1791 = vunpack.c.l.b16 %v1408
        %v1792 = vunpack.c.h.b16 %v1408
        %v1793 = vunpack.c.l.b16 %v1409
        %v1794 = vunpack.c.h.b16 %v1409
        %v1795 = vunpack.c.l.b16 %v1410
        %v1796 = vunpack.c.h.b16 %v1410
        %v1797 = vunpack.c.l.b16 %v1411
        %v1798 = vunpack.c.h.b16 %v1411
        %v1799 = vunpack.c.l.b16 %v1412
        %v1800 = vunpack.c.h.b16 %v1412
        %v1801 = vunpack.c.l.b16 %v1413
        %v1802 = vunpack.c.h.b16 %v1413
        %v1803 = vunpack.c.l.b16 %v1414
        %v1804 = vunpack.c.h.b16 %v1414
        %v1805 = vunpack.c.l.b16 %v1415
        %v1806 = vunpack.c.h.b16 %v1415
        %v1807 = vunpack.c.l.b16 %v1416
        %v1808 = vunpack.c.h.b16 %v1416
        %v1809 = vunpack.c.l.b16 %v1417
        %v1810 = vunpack.c.h.b16 %v1417
        %v1811 = vunpack.c.l.b16 %v1418
        %v1812 = vunpack.c.h.b16 %v1418
        %v1813 = vunpack.c.l.b16 %v1419
        %v1814 = vunpack.c.h.b16 %v1419
        %v1815 = vunpack.c.l.b16 %v1420
        %v1816 = vunpack.c.h.b16 %v1420
        %v1817 = vunpack.c.l.b16 %v1421
        %v1818 = vunpack.c.h.b16 %v1421
        %v1819 = vunpack.c.l.b16 %v1422
        %v1820 = vunpack.c.h.b16 %v1422
        %v1821 = vunpack.c.l.b16 %v1423
        %v1822 = vunpack.c.h.b16 %v1423
        %v1823 = vunpack.c.l.b16 %v1424
        %v1824 = vunpack.c.h.b16 %v1424
        %v1825 = vunpack.c.l.b16 %v1425
        %v1826 = vunpack.c.h.b16 %v1425
        %v1827 = vunpack.c.l.b16 %v1426
        %v1828 = vunpack.c.h.b16 %v1426
        %v1829 = vunpack.c.l.b16 %v1427
        %v1830 = vunpack.c.h.b16 %v1427
        %v1831 = vunpack.c.l.b16 %v1428
        %v1832 = vunpack.c.h.b16 %v1428
        %v1833 = vunpack.c.l.b16 %v1429
        %v1834 = vunpack.c.h.b16 %v1429
        %v1835 = vunpack.c.l.b16 %v1430
        %v1836 = vunpack.c.h.b16 %v1430
        %v1837 = vunpack.c.l.b16 %v1431
        %v1838 = vunpack.c.h.b16 %v1431
        %v1839 = vunpack.c.l.b16 %v1432
        %v1840 = vunpack.c.h.b16 %v1432
        %v1841 = vunpack.c.l.b16 %v1433
        %v1842 = vunpack.c.h.b16 %v1433
        %v1843 = vunpack.c.l.b16 %v1434
        %v1844 = vunpack.c.h.b16 %v1434
        %v1845 = vunpack.c.l.b16 %v1435
        %v1846 = vunpack.c.h.b16 %v1435
        %v1847 = vunpack.c.l.b16 %v1436
        %v1848 = vunpack.c.h.b16 %v1436
        %v1849 = vunpack.c.l.b16 %v1437
        %v1850 = vunpack.c.h.b16 %v1437
        %v1851 = vunpack.c.l.b16 %v1438
        %v1852 = vunpack.c.h.b16 %v1438
        %v1853 = vunpack.c.l.b16 %v1439
        %v1854 = vunpack.c.h.b16 %v1439
        %v1855 = vunpack.c.l.b16 %v1440
        %v1856 = vunpack.c.h.b16 %v1440
        %v1857 = vunpack.c.l.b16 %v1441
        %v1858 = vunpack.c.h.b16 %v1441
        %v1859 = vunpack.c.l.b16 %v1442
        %v1860 = vunpack.c.h.b16 %v1442
        %v1861 = vunpack.c.l.b16 %v1443
        %v1862 = vunpack.c.h.b16 %v1443
        %v1863 = vunpack.c.l.b16 %v1444
        %v1864 = vunpack.c.h.b16 %v1444
        %v1865 = vunpack.c.l.b16 %v1445
        %v1866 = vunpack.c.h.b16 %v1445
        %v1867 = vunpack.c.l.b16 %v1446
        %v1868 = vunpack.c.h.b16 %v1446
        %v1869 = vunpack.c.l.b16 %v1447
        %v1870 = vunpack.c.h.b16 %v1447
        %v1871 = vunpack.c.l.b16 %v1448
        %v1872 = vunpack.c.h.b16 %v1448
        %v1873 = vunpack.c.l.b16 %v1449
        %v1874 = vunpack.c.h.b16 %v1449
        %v1875 = vunpack.c.l.b16 %v1450
        %v1876 = vunpack.c.h.b16 %v1450
        %v1877 = vunpack.c.l.b16 %v1451
        %v1878 = vunpack.c.h.b16 %v1451
        %v1879 = vunpack.c.l.b16 %v1452
        %v1880 = vunpack.c.h.b16 %v1452
        %v1881 = vunpack.c.l.b16 %v1453
        %v1882 = vunpack.c.h.b16 %v1453
        %v1883 = vunpack.c.l.b16 %v1454
        %v1884 = vunpack.c.h.b16 %v1454
        %v1885 = vunpack.c.l.b16 %v1455
        %v1886 = vunpack.c.h.b16 %v1455
        %v1887 = vunpack.c.l.b16 %v1456
        %v1888 = vunpack.c.h.b16 %v1456
        %v1889 = vunpack.c.l.b16 %v1457
        %v1890 = vunpack.c.h.b16 %v1457
        %v1891 = vunpack.c.l.b16 %v1458
        %v1892 = vunpack.c.h.b16 %v1458
        %v1893 = vunpack.c.l.b16 %v1459
        %v1894 = vunpack.c.h.b16 %v1459
        %v1895 = vunpack.c.l.b16 %v1460
        %v1896 = vunpack.c.h.b16 %v1460
        %v1897 = vunpack.c.l.b16 %v1461
        %v1898 = vunpack.c.h.b16 %v1461
        %v1899 = vunpack.c.l.b16 %v1462
        %v1900 = vunpack.c.h.b16 %v1462
        %v1901 = vunpack.c.l.b16 %v1463
        %v1902 = vunpack.c.h.b16 %v1463
        %v1903 = vunpack.c.l.b16 %v1464
        %v1904 = vunpack.c.h.b16 %v1464
        %v1905 = vunpack.c.l.b16 %v1465
        %v1906 = vunpack.c.h.b16 %v1465
        %v1907 = vunpack.c.l.b16 %v1466
        %v1908 = vunpack.c.h.b16 %v1466
        %v1909 = vunpack.c.l.b16 %v1467
        %v1910 = vunpack.c.h.b16 %v1467
        %v1911 = vunpack.c.l.b16 %v1468
        %v1912 = vunpack.c.h.b16 %v1468
        %v1913 = vunpack.c.l.b16 %v1469
        %v1914 = vunpack.c.h.b16 %v1469
        %v1915 = vunpack.c.l.b16 %v1470
        %v1916 = vunpack.c.h.b16 %v1470
        %v1917 = vunpack.c.l.b16 %v1471
        %v1918 = vunpack.c.h.b16 %v1471
        %v1919 = vunpack.c.l.b16 %v1472
        %v1920 = vunpack.c.h.b16 %v1472
        %v1921 = vunpack.c.l.b16 %v1473
        %v1922 = vunpack.c.h.b16 %v1473
        %v1923 = vunpack.c.l.b16 %v1474
        %v1924 = vunpack.c.h.b16 %v1474
        %v1925 = vunpack.c.l.b16 %v1475
        %v1926 = vunpack.c.h.b16 %v1475
        %v1927 = vunpack.c.l.b16 %v1476
        %v1928 = vunpack.c.h.b16 %v1476
        %v1929 = vunpack.c.l.b16 %v1477
        %v1930 = vunpack.c.h.b16 %v1477
        %v1931 = vunpack.c.l.b16 %v1478
        %v1932 = vunpack.c.h.b16 %v1478
        %v1933 = vunpack.c.l.b16 %v1479
        %v1934 = vunpack.c.h.b16 %v1479
        %v1935 = vunpack.c.l.b16 %v1480
        %v1936 = vunpack.c.h.b16 %v1480
        %v1937 = vunpack.c.l.b16 %v1481
        %v1938 = vunpack.c.h.b16 %v1481
        %v1939 = vunpack.c.l.b16 %v1482
        %v1940 = vunpack.c.h.b16 %v1482
        %v1941 = vunpack.c.l.b16 %v1483
        %v1942 = vunpack.c.h.b16 %v1483
        %v1943 = vunpack.c.l.b16 %v1484
        %v1944 = vunpack.c.h.b16 %v1484
        %v1945 = vunpack.c.l.b16 %v1485
        %v1946 = vunpack.c.h.b16 %v1485
        %v1947 = vunpack.c.l.b16 %v1486
        %v1948 = vunpack.c.h.b16 %v1486
        %v1949 = vunpack.c.l.b16 %v1487
        %v1950 = vunpack.c.h.b16 %v1487
        %v1951 = vunpack.c.l.b16 %v1488
        %v1952 = vunpack.c.h.b16 %v1488
        %v1953 = vunpack.c.l.b16 %v1489
        %v1954 = vunpack.c.h.b16 %v1489
        %v1955 = vunpack.c.l.b16 %v1490
        %v1956 = vunpack.c.h.b16 %v1490
        %v1957 = vunpack.c.l.b16 %v1491
        %v1958 = vunpack.c.h.b16 %v1491
        %v1959 = vunpack.c.l.b16 %v1492
        %v1960 = vunpack.c.h.b16 %v1492
        %v1961 = vpack.c.b16 %v1721, %v1705
        %v1962 = vpack.c.b16 %v1722, %v1706
        %v1963 = vpack.c.b16 %v1723, %v1707
        %v1964 = vpack.c.b16 %v1724, %v1708
        %v1965 = vpack.c.b16 %v1725, %v1709
        %v1966 = vpack.c.b16 %v1726, %v1710
        %v1967 = vpack.c.b16 %v1727, %v1711
        %v1968 = vpack.c.b16 %v1728, %v1712
        %v1969 = vpack.c.b16 %v1729, %v1713
        %v1970 = vpack.c.b16 %v1730, %v1714
        %v1971 = vpack.c.b16 %v1731, %v1715
        %v1972 = vpack.c.b16 %v1732, %v1716
        %v1973 = vpack.c.b16 %v1733, %v1717
        %v1974 = vpack.c.b16 %v1734, %v1718
        %v1975 = vpack.c.b16 %v1735, %v1719
        %v1976 = vpack.c.b16 %v1736, %v1720
        %v1977 = vpack.c.b16 %v1753, %v1737
        %v1978 = vpack.c.b16 %v1754, %v1738
        %v1979 = vpack.c.b16 %v1755, %v1739
        %v1980 = vpack.c.b16 %v1756, %v1740
        %v1981 = vpack.c.b16 %v1757, %v1741
        %v1982 = vpack.c.b16 %v1758, %v1742
        %v1983 = vpack.c.b16 %v1759, %v1743
        %v1984 = vpack.c.b16 %v1760, %v1744
        %v1985 = vpack.c.b16 %v1761, %v1745
        %v1986 = vpack.c.b16 %v1762, %v1746
        %v1987 = vpack.c.b16 %v1763, %v1747
        %v1988 = vpack.c.b16 %v1764, %v1748
        %v1989 = vpack.c.b16 %v1765, %v1749
        %v1990 = vpack.c.b16 %v1766, %v1750
        %v1991 = vpack.c.b16 %v1767, %v1751
        %v1992 = vpack.c.b16 %v1768, %v1752
        %v1993 = vpack.c.b16 %v1785, %v1769
        %v1994 = vpack.c.b16 %v1786, %v1770
        %v1995 = vpack.c.b16 %v1787, %v1771
        %v1996 = vpack.c.b16 %v1788, %v1772
        %v1997 = vpack.c.b16 %v1789, %v1773
        %v1998 = vpack.c.b16 %v1790, %v1774
        %v1999 = vpack.c.b16 %v1791, %v1775
        %v2000 = vpack.c.b16 %v1792, %v1776
        %v2001 = vpack.c.b16 %v1793, %v1777
        %v2002 = vpack.c.b16 %v1794, %v1778
        %v2003 = vpack.c.b16 %v1795, %v1779
        %v2004 = vpack.c.b16 %v1796, %v1780
        %v2005 = vpack.c.b16 %v1797, %v1781
        %v2006 = vpack.c.b16 %v1798, %v1782
        %v2007 = vpack.c.b16 %v1799, %v1783
        %v2008 = vpack.c.b16 %v1800, %v1784
        %v2009 = vpack.c.b16 %v1817, %v1801
        %v2010 = vpack.c.b16 %v1818, %v1802
        %v2011 = vpack.c.b16 %v1819, %v1803
        %v2012 = vpack.c.b16 %v1820, %v1804
        %v2013 = vpack.c.b16 %v1821, %v1805
        %v2014 = vpack.c.b16 %v1822, %v1806
        %v2015 = vpack.c.b16 %v1823, %v1807
        %v2016 = vpack.c.b16 %v1824, %v1808
        %v2017 = vpack.c.b16 %v1825, %v1809
        %v2018 = vpack.c.b16 %v1826, %v1810
        %v2019 = vpack.c.b16 %v1827, %v1811
        %v2020 = vpack.c.b16 %v1828, %v1812
        %v2021 = vpack.c.b16 %v1829, %v1813
        %v2022 = vpack.c.b16 %v1830, %v1814
        %v2023 = vpack.c.b16 %v1831, %v1815
        %v2024 = vpack.c.b16 %v1832, %v1816
        %v2025 = vpack.c.b16 %v1849, %v1833
        %v2026 = vpack.c.b16 %v1850, %v1834
        %v2027 = vpack.c.b16 %v1851, %v1835
        %v2028 = vpack.c.b16 %v1852, %v1836
        %v2029 = vpack.c.b16 %v1853, %v1837
        %v2030 = vpack.c.b16 %v1854, %v1838
        %v2031 = vpack.c.b16 %v1855, %v1839
        %v2032 = vpack.c.b16 %v1856, %v1840
        %v2033 = vpack.c.b16 %v1857, %v1841
        %v2034 = vpack.c.b16 %v1858, %v1842
        %v2035 = vpack.c.b16 %v1859, %v1843
        %v2036 = vpack.c.b16 %v1860, %v1844
        %v2037 = vpack.c.b16 %v1861, %v1845
        %v2038 = vpack.c.b16 %v1862, %v1846
        %v2039 = vpack.c.b16 %v1863, %v1847
        %v2040 = vpack.c.b16 %v1864, %v1848
        %v2041 = vpack.c.b16 %v1881, %v1865
        %v2042 = vpack.c.b16 %v1882, %v1866
        %v2043 = vpack.c.b16 %v1883, %v1867
        %v2044 = vpack.c.b16 %v1884, %v1868
        %v2045 = vpack.c.b16 %v1885, %v1869
        %v2046 = vpack.c.b16 %v1886, %v1870
        %v2047 = vpack.c.b16 %v1887, %v1871
        %v2048 = vpack.c.b16 %v1888, %v1872
        %v2049 = vpack.c.b16 %v1889, %v1873
        %v2050 = vpack.c.b16 %v1890, %v1874
        %v2051 = vpack.c.b16 %v1891, %v1875
        %v2052 = vpack.c.b16 %v1892, %v1876
        %v2053 = vpack.c.b16 %v1893, %v1877
        %v2054 = vpack.c.b16 %v1894, %v1878
        %v2055 = vpack.c.b16 %v1895, %v1879
        %v2056 = vpack.c.b16 %v1896, %v1880
        %v2057 = vpack.c.b16 %v1913, %v1897
        %v2058 = vpack.c.b16 %v1914, %v1898
        %v2059 = vpack.c.b16 %v1915, %v1899
        %v2060 = vpack.c.b16 %v1916, %v1900
        %v2061 = vpack.c.b16 %v1917, %v1901
        %v2062 = vpack.c.b16 %v1918, %v1902
        %v2063 = vpack.c.b16 %v1919, %v1903
        %v2064 = vpack.c.b16 %v1920, %v1904
        %v2065 = vpack.c.b16 %v1921, %v1905
        %v2066 = vpack.c.b16 %v1922, %v1906
        %v2067 = vpack.c.b16 %v1923, %v1907
        %v2068 = vpack.c.b16 %v1924, %v1908
        %v2069 = vpack.c.b16 %v1925, %v1909
        %v2070 = vpack.c.b16 %v1926, %v1910
        %v2071 = vpack.c.b16 %v1927, %v1911
        %v2072 = vpack.c.b16 %v1928, %v1912
        %v2073 = vpack.c.b16 %v1945, %v1929
        %v2074 = vpack.c.b16 %v1946, %v1930
        %v2075 = vpack.c.b16 %v1947, %v1931
        %v2076 = vpack.c.b16 %v1948, %v1932
        %v2077 = vpack.c.b16 %v1949, %v1933
        %v2078 = vpack.c.b16 %v1950, %v1934
        %v2079 = vpack.c.b16 %v1951, %v1935
        %v2080 = vpack.c.b16 %v1952, %v1936
        %v2081 = vpack.c.b16 %v1953, %v1937
        %v2082 = vpack.c.b16 %v1954, %v1938
        %v2083 = vpack.c.b16 %v1955, %v1939
        %v2084 = vpack.c.b16 %v1956, %v1940
        %v2085 = vpack.c.b16 %v1957, %v1941
        %v2086 = vpack.c.b16 %v1958, %v1942
        %v2087 = vpack.c.b16 %v1959, %v1943
        %v2088 = vpack.c.b16 %v1960, %v1944
        %2217 = vmatprep.subr.bf16.mxu0 %v1962
        %2218 = vmatpush1.bf16.msra.mxu0 %v1961
        %2219 = vmatprep.subr.bf16.mxu0 %v1978
        %2220 = vmatpush1.bf16.msra.mxu0 %v1977
        %2221 = vmatprep.subr.bf16.mxu0 %v1994
        %2222 = vmatpush1.bf16.msra.mxu0 %v1993
        %2223 = vmatprep.subr.bf16.mxu0 %v2010
        %2224 = vmatpush1.bf16.msra.mxu0 %v2009
        %2225 = vmatprep.subr.bf16.mxu0 %v2026
        %2226 = vmatpush1.bf16.msra.mxu0 %v2025
        %2227 = vmatprep.subr.bf16.mxu0 %v2042
        %2228 = vmatpush1.bf16.msra.mxu0 %v2041
        %2229 = vmatprep.subr.bf16.mxu0 %v2058
        %2230 = vmatpush1.bf16.msra.mxu0 %v2057
        %2231 = vmatprep.subr.bf16.mxu0 %v2074
        %2232 = vmatpush1.bf16.msra.mxu0 %v2073
        %2233 = vmatprep.subr.bf16.mxu0 0
        %2234 = vmatpush1.bf16.msra.mxu0 0
        %2235 = vmatprep.subr.bf16.mxu0 0
        %2236 = vmatpush1.bf16.msra.mxu0 0
        %2237 = vmatprep.subr.bf16.mxu0 0
        %2238 = vmatpush1.bf16.msra.mxu0 0
        %2239 = vmatprep.subr.bf16.mxu0 0
        %2240 = vmatpush1.bf16.msra.mxu0 0
        %2241 = vmatprep.subr.bf16.mxu0 0
        %2242 = vmatpush1.bf16.msra.mxu0 0
        %2243 = vmatprep.subr.bf16.mxu0 0
        %2244 = vmatpush1.bf16.msra.mxu0 0
        %2245 = vmatprep.subr.bf16.mxu0 0
        %2246 = vmatpush1.bf16.msra.mxu0 0
        %2247 = vmatprep.subr.bf16.mxu0 0
        %2248 = vmatpush1.bf16.msra.mxu0 0
        %2249 = vmatprep.mubr.bf16.mxu0 0
        %2250 = vmatmul.mubr.bf16.gmra.mrb[0].mxu0 %v1357
        %v2251 = vpop.f32.mrb[0].mxu0
        %v2252 = vadd.f32 %v1500, %v2251
        %v2253 = vpop.f32.mrb[0].mxu0
        %v2254 = vadd.f32 %v1504, %v2253
        %v2255 = vpop.f32.mrb[0].mxu0
        %v2256 = vadd.f32 %v1500, %v2255
        %v2257 = vpop.f32.mrb[0].mxu0
        %v2258 = vadd.f32 %v1504, %v2257
        %2259 = vmatprep.mubr.bf16.mxu0 0
        %2260 = vmatmul.mubr.bf16.gmra.mrb[0].mxu0 %v1358
        %v2261 = vpop.f32.mrb[0].mxu0
        %v2262 = vadd.f32 %v1500, %v2261
        %v2263 = vpop.f32.mrb[0].mxu0
        %v2264 = vadd.f32 %v1504, %v2263
        %v2265 = vpop.f32.mrb[0].mxu0
        %v2266 = vadd.f32 %v1500, %v2265
        %v2267 = vpop.f32.mrb[0].mxu0
        %v2268 = vadd.f32 %v1504, %v2267
        %2269 = vmatprep.mubr.bf16.mxu0 0
        %2270 = vmatmul.mubr.bf16.gmra.mrb[0].mxu0 %v1359
        %v2271 = vpop.f32.mrb[0].mxu0
        %v2272 = vadd.f32 %v1500, %v2271
        %v2273 = vpop.f32.mrb[0].mxu0
        %v2274 = vadd.f32 %v1504, %v2273
        %v2275 = vpop.f32.mrb[0].mxu0
        %v2276 = vadd.f32 %v1500, %v2275
        %v2277 = vpop.f32.mrb[0].mxu0
        %v2278 = vadd.f32 %v1504, %v2277
        %2279 = vmatprep.mubr.bf16.mxu0 0
        %2280 = vmatmul.mubr.bf16.gmra.mrb[0].mxu0 %v1360
        %v2281 = vpop.f32.mrb[0].mxu0
        %v2282 = vadd.f32 %v1500, %v2281
        %v2283 = vpop.f32.mrb[0].mxu0
        %v2284 = vadd.f32 %v1504, %v2283
        %v2285 = vpop.f32.mrb[0].mxu0
        %v2286 = vadd.f32 %v1500, %v2285
        %v2287 = vpop.f32.mrb[0].mxu0
        %v2288 = vadd.f32 %v1504, %v2287
        %2289 = vmatprep.mubr.bf16.mxu0 0
        %2290 = vmatmul.mubr.bf16.gmra.mrb[0].mxu0 %v1361
        %v2291 = vpop.f32.mrb[0].mxu0
        %v2292 = vadd.f32 %v1500, %v2291
        %v2293 = vpop.f32.mrb[0].mxu0
        %v2294 = vadd.f32 %v1504, %v2293
        %v2295 = vpop.f32.mrb[0].mxu0
        %v2296 = vadd.f32 %v1500, %v2295
        %v2297 = vpop.f32.mrb[0].mxu0
        %v2298 = vadd.f32 %v1504, %v2297
        %2299 = vmatprep.mubr.bf16.mxu0 0
        %2300 = vmatmul.mubr.bf16.gmra.mrb[0].mxu0 %v1362
        %v2301 = vpop.f32.mrb[0].mxu0
        %v2302 = vadd.f32 %v1500, %v2301
        %v2303 = vpop.f32.mrb[0].mxu0
        %v2304 = vadd.f32 %v1504, %v2303
        %v2305 = vpop.f32.mrb[0].mxu0
        %v2306 = vadd.f32 %v1500, %v2305
        %v2307 = vpop.f32.mrb[0].mxu0
        %v2308 = vadd.f32 %v1504, %v2307
        %2309 = vmatprep.mubr.bf16.mxu0 0
        %2310 = vmatmul.mubr.bf16.gmra.mrb[0].mxu0 %v1363
        %v2311 = vpop.f32.mrb[0].mxu0
        %v2312 = vadd.f32 %v1500, %v2311
        %v2313 = vpop.f32.mrb[0].mxu0
        %v2314 = vadd.f32 %v1504, %v2313
        %v2315 = vpop.f32.mrb[0].mxu0
        %v2316 = vadd.f32 %v1500, %v2315
        %v2317 = vpop.f32.mrb[0].mxu0
        %v2318 = vadd.f32 %v1504, %v2317
        %2319 = vmatprep.mubr.bf16.mxu0 0
        %2320 = vmatmul.mubr.bf16.gmra.mrb[0].mxu0 %v1364
        %v2321 = vpop.f32.mrb[0].mxu0
        %v2322 = vadd.f32 %v1500, %v2321
        %v2323 = vpop.f32.mrb[0].mxu0
        %v2324 = vadd.f32 %v1504, %v2323
        %v2325 = vpop.f32.mrb[0].mxu0
        %v2326 = vadd.f32 %v1500, %v2325
        %v2327 = vpop.f32.mrb[0].mxu0
        %v2328 = vadd.f32 %v1504, %v2327
        %2329 = vdwg.mxu0
        %2330 = vmatprep.subr.bf16.mxu0 %v1964
        %2331 = vmatpush1.bf16.msra.mxu0 %v1963
        %2332 = vmatprep.subr.bf16.mxu0 %v1980
        %2333 = vmatpush1.bf16.msra.mxu0 %v1979
        %2334 = vmatprep.subr.bf16.mxu0 %v1996
        %2335 = vmatpush1.bf16.msra.mxu0 %v1995
        %2336 = vmatprep.subr.bf16.mxu0 %v2012
        %2337 = vmatpush1.bf16.msra.mxu0 %v2011
        %2338 = vmatprep.subr.bf16.mxu0 %v2028
        %2339 = vmatpush1.bf16.msra.mxu0 %v2027
        %2340 = vmatprep.subr.bf16.mxu0 %v2044
        %2341 = vmatpush1.bf16.msra.mxu0 %v2043
        %2342 = vmatprep.subr.bf16.mxu0 %v2060
        %2343 = vmatpush1.bf16.msra.mxu0 %v2059
        %2344 = vmatprep.subr.bf16.mxu0 %v2076
        %2345 = vmatpush1.bf16.msra.mxu0 %v2075
        %2346 = vmatprep.subr.bf16.mxu0 0
        %2347 = vmatpush1.bf16.msra.mxu0 0
        %2348 = vmatprep.subr.bf16.mxu0 0
        %2349 = vmatpush1.bf16.msra.mxu0 0
        %2350 = vmatprep.subr.bf16.mxu0 0
        %2351 = vmatpush1.bf16.msra.mxu0 0
        %2352 = vmatprep.subr.bf16.mxu0 0
        %2353 = vmatpush1.bf16.msra.mxu0 0
        %2354 = vmatprep.subr.bf16.mxu0 0
        %2355 = vmatpush1.bf16.msra.mxu0 0
        %2356 = vmatprep.subr.bf16.mxu0 0
        %2357 = vmatpush1.bf16.msra.mxu0 0
        %2358 = vmatprep.subr.bf16.mxu0 0
        %2359 = vmatpush1.bf16.msra.mxu0 0
        %2360 = vmatprep.subr.bf16.mxu0 0
        %2361 = vmatpush1.bf16.msra.mxu0 0
        %2362 = vmatprep.mubr.bf16.mxu0 0
        %2363 = vmatmul.mubr.bf16.gmra.mrb[0].mxu0 %v1357
        %v2364 = vpop.f32.mrb[0].mxu0
        %v2365 = vadd.f32 %v1508, %v2364
        %v2366 = vpop.f32.mrb[0].mxu0
        %v2367 = vadd.f32 %v1512, %v2366
        %v2368 = vpop.f32.mrb[0].mxu0
        %v2369 = vadd.f32 %v1508, %v2368
        %v2370 = vpop.f32.mrb[0].mxu0
        %v2371 = vadd.f32 %v1512, %v2370
        %2372 = vmatprep.mubr.bf16.mxu0 0
        %2373 = vmatmul.mubr.bf16.gmra.mrb[0].mxu0 %v1358
        %v2374 = vpop.f32.mrb[0].mxu0
        %v2375 = vadd.f32 %v1508, %v2374
        %v2376 = vpop.f32.mrb[0].mxu0
        %v2377 = vadd.f32 %v1512, %v2376
        %v2378 = vpop.f32.mrb[0].mxu0
        %v2379 = vadd.f32 %v1508, %v2378
        %v2380 = vpop.f32.mrb[0].mxu0
        %v2381 = vadd.f32 %v1512, %v2380
        %2382 = vmatprep.mubr.bf16.mxu0 0
        %2383 = vmatmul.mubr.bf16.gmra.mrb[0].mxu0 %v1359
        %v2384 = vpop.f32.mrb[0].mxu0
        %v2385 = vadd.f32 %v1508, %v2384
        %v2386 = vpop.f32.mrb[0].mxu0
        %v2387 = vadd.f32 %v1512, %v2386
        %v2388 = vpop.f32.mrb[0].mxu0
        %v2389 = vadd.f32 %v1508, %v2388
        %v2390 = vpop.f32.mrb[0].mxu0
        %v2391 = vadd.f32 %v1512, %v2390
        %2392 = vmatprep.mubr.bf16.mxu0 0
        %2393 = vmatmul.mubr.bf16.gmra.mrb[0].mxu0 %v1360
        %v2394 = vpop.f32.mrb[0].mxu0
        %v2395 = vadd.f32 %v1508, %v2394
        %v2396 = vpop.f32.mrb[0].mxu0
        %v2397 = vadd.f32 %v1512, %v2396
        %v2398 = vpop.f32.mrb[0].mxu0
        %v2399 = vadd.f32 %v1508, %v2398
        %v2400 = vpop.f32.mrb[0].mxu0
        %v2401 = vadd.f32 %v1512, %v2400
        %2402 = vmatprep.mubr.bf16.mxu0 0
        %2403 = vmatmul.mubr.bf16.gmra.mrb[0].mxu0 %v1361
        %v2404 = vpop.f32.mrb[0].mxu0
        %v2405 = vadd.f32 %v1508, %v2404
        %v2406 = vpop.f32.mrb[0].mxu0
        %v2407 = vadd.f32 %v1512, %v2406
        %v2408 = vpop.f32.mrb[0].mxu0
        %v2409 = vadd.f32 %v1508, %v2408
        %v2410 = vpop.f32.mrb[0].mxu0
        %v2411 = vadd.f32 %v1512, %v2410
        %2412 = vmatprep.mubr.bf16.mxu0 0
        %2413 = vmatmul.mubr.bf16.gmra.mrb[0].mxu0 %v1362
        %v2414 = vpop.f32.mrb[0].mxu0
        %v2415 = vadd.f32 %v1508, %v2414
        %v2416 = vpop.f32.mrb[0].mxu0
        %v2417 = vadd.f32 %v1512, %v2416
        %v2418 = vpop.f32.mrb[0].mxu0
        %v2419 = vadd.f32 %v1508, %v2418
        %v2420 = vpop.f32.mrb[0].mxu0
        %v2421 = vadd.f32 %v1512, %v2420
        %2422 = vmatprep.mubr.bf16.mxu0 0
        %2423 = vmatmul.mubr.bf16.gmra.mrb[0].mxu0 %v1363
        %v2424 = vpop.f32.mrb[0].mxu0
        %v2425 = vadd.f32 %v1508, %v2424
        %v2426 = vpop.f32.mrb[0].mxu0
        %v2427 = vadd.f32 %v1512, %v2426
        %v2428 = vpop.f32.mrb[0].mxu0
        %v2429 = vadd.f32 %v1508, %v2428
        %v2430 = vpop.f32.mrb[0].mxu0
        %v2431 = vadd.f32 %v1512, %v2430
        %2432 = vmatprep.mubr.bf16.mxu0 0
        %2433 = vmatmul.mubr.bf16.gmra.mrb[0].mxu0 %v1364
        %v2434 = vpop.f32.mrb[0].mxu0
        %v2435 = vadd.f32 %v1508, %v2434
        %v2436 = vpop.f32.mrb[0].mxu0
        %v2437 = vadd.f32 %v1512, %v2436
        %v2438 = vpop.f32.mrb[0].mxu0
        %v2439 = vadd.f32 %v1508, %v2438
        %v2440 = vpop.f32.mrb[0].mxu0
        %v2441 = vadd.f32 %v1512, %v2440
        %2442 = vdwg.mxu0
        %2443 = vmatprep.subr.bf16.mxu0 %v1966
        %2444 = vmatpush1.bf16.msra.mxu0 %v1965
        %2445 = vmatprep.subr.bf16.mxu0 %v1982
        %2446 = vmatpush1.bf16.msra.mxu0 %v1981
        %2447 = vmatprep.subr.bf16.mxu0 %v1998
        %2448 = vmatpush1.bf16.msra.mxu0 %v1997
        %2449 = vmatprep.subr.bf16.mxu0 %v2014
        %2450 = vmatpush1.bf16.msra.mxu0 %v2013
        %2451 = vmatprep.subr.bf16.mxu0 %v2030
        %2452 = vmatpush1.bf16.msra.mxu0 %v2029
        %2453 = vmatprep.subr.bf16.mxu0 %v2046
        %2454 = vmatpush1.bf16.msra.mxu0 %v2045
        %2455 = vmatprep.subr.bf16.mxu0 %v2062
        %2456 = vmatpush1.bf16.msra.mxu0 %v2061
        %2457 = vmatprep.subr.bf16.mxu0 %v2078
        %2458 = vmatpush1.bf16.msra.mxu0 %v2077
        %2459 = vmatprep.subr.bf16.mxu0 0
        %2460 = vmatpush1.bf16.msra.mxu0 0
        %2461 = vmatprep.subr.bf16.mxu0 0
        %2462 = vmatpush1.bf16.msra.mxu0 0
        %2463 = vmatprep.subr.bf16.mxu0 0
        %2464 = vmatpush1.bf16.msra.mxu0 0
        %2465 = vmatprep.subr.bf16.mxu0 0
        %2466 = vmatpush1.bf16.msra.mxu0 0
        %2467 = vmatprep.subr.bf16.mxu0 0
        %2468 = vmatpush1.bf16.msra.mxu0 0
        %2469 = vmatprep.subr.bf16.mxu0 0
        %2470 = vmatpush1.bf16.msra.mxu0 0
        %2471 = vmatprep.subr.bf16.mxu0 0
        %2472 = vmatpush1.bf16.msra.mxu0 0
        %2473 = vmatprep.subr.bf16.mxu0 0
        %2474 = vmatpush1.bf16.msra.mxu0 0
        %2475 = vmatprep.mubr.bf16.mxu0 0
        %2476 = vmatmul.mubr.bf16.gmra.mrb[0].mxu0 %v1357
        %v2477 = vpop.f32.mrb[0].mxu0
        %v2478 = vadd.f32 %v1516, %v2477
        %v2479 = vpop.f32.mrb[0].mxu0
        %v2480 = vadd.f32 %v1520, %v2479
        %v2481 = vpop.f32.mrb[0].mxu0
        %v2482 = vadd.f32 %v1516, %v2481
        %v2483 = vpop.f32.mrb[0].mxu0
        %v2484 = vadd.f32 %v1520, %v2483
        %2485 = vmatprep.mubr.bf16.mxu0 0
        %2486 = vmatmul.mubr.bf16.gmra.mrb[0].mxu0 %v1358
        %v2487 = vpop.f32.mrb[0].mxu0
        %v2488 = vadd.f32 %v1516, %v2487
        %v2489 = vpop.f32.mrb[0].mxu0
        %v2490 = vadd.f32 %v1520, %v2489
        %v2491 = vpop.f32.mrb[0].mxu0
        %v2492 = vadd.f32 %v1516, %v2491
        %v2493 = vpop.f32.mrb[0].mxu0
        %v2494 = vadd.f32 %v1520, %v2493
        %2495 = vmatprep.mubr.bf16.mxu0 0
        %2496 = vmatmul.mubr.bf16.gmra.mrb[0].mxu0 %v1359
        %v2497 = vpop.f32.mrb[0].mxu0
        %v2498 = vadd.f32 %v1516, %v2497
        %v2499 = vpop.f32.mrb[0].mxu0
        %v2500 = vadd.f32 %v1520, %v2499
        %v2501 = vpop.f32.mrb[0].mxu0
        %v2502 = vadd.f32 %v1516, %v2501
        %v2503 = vpop.f32.mrb[0].mxu0
        %v2504 = vadd.f32 %v1520, %v2503
        %2505 = vmatprep.mubr.bf16.mxu0 0
        %2506 = vmatmul.mubr.bf16.gmra.mrb[0].mxu0 %v1360
        %v2507 = vpop.f32.mrb[0].mxu0
        %v2508 = vadd.f32 %v1516, %v2507
        %v2509 = vpop.f32.mrb[0].mxu0
        %v2510 = vadd.f32 %v1520, %v2509
        %v2511 = vpop.f32.mrb[0].mxu0
        %v2512 = vadd.f32 %v1516, %v2511
        %v2513 = vpop.f32.mrb[0].mxu0
        %v2514 = vadd.f32 %v1520, %v2513
        %2515 = vmatprep.mubr.bf16.mxu0 0
        %2516 = vmatmul.mubr.bf16.gmra.mrb[0].mxu0 %v1361
        %v2517 = vpop.f32.mrb[0].mxu0
        %v2518 = vadd.f32 %v1516, %v2517
        %v2519 = vpop.f32.mrb[0].mxu0
        %v2520 = vadd.f32 %v1520, %v2519
        %v2521 = vpop.f32.mrb[0].mxu0
        %v2522 = vadd.f32 %v1516, %v2521
        %v2523 = vpop.f32.mrb[0].mxu0
        %v2524 = vadd.f32 %v1520, %v2523
        %2525 = vmatprep.mubr.bf16.mxu0 0
        %2526 = vmatmul.mubr.bf16.gmra.mrb[0].mxu0 %v1362
        %v2527 = vpop.f32.mrb[0].mxu0
        %v2528 = vadd.f32 %v1516, %v2527
        %v2529 = vpop.f32.mrb[0].mxu0
        %v2530 = vadd.f32 %v1520, %v2529
        %v2531 = vpop.f32.mrb[0].mxu0
        %v2532 = vadd.f32 %v1516, %v2531
        %v2533 = vpop.f32.mrb[0].mxu0
        %v2534 = vadd.f32 %v1520, %v2533
        %2535 = vmatprep.mubr.bf16.mxu0 0
        %2536 = vmatmul.mubr.bf16.gmra.mrb[0].mxu0 %v1363
        %v2537 = vpop.f32.mrb[0].mxu0
        %v2538 = vadd.f32 %v1516, %v2537
        %v2539 = vpop.f32.mrb[0].mxu0
        %v2540 = vadd.f32 %v1520, %v2539
        %v2541 = vpop.f32.mrb[0].mxu0
        %v2542 = vadd.f32 %v1516, %v2541
        %v2543 = vpop.f32.mrb[0].mxu0
        %v2544 = vadd.f32 %v1520, %v2543
        %2545 = vmatprep.mubr.bf16.mxu0 0
        %2546 = vmatmul.mubr.bf16.gmra.mrb[0].mxu0 %v1364
        %v2547 = vpop.f32.mrb[0].mxu0
        %v2548 = vadd.f32 %v1516, %v2547
        %v2549 = vpop.f32.mrb[0].mxu0
        %v2550 = vadd.f32 %v1520, %v2549
        %v2551 = vpop.f32.mrb[0].mxu0
        %v2552 = vadd.f32 %v1516, %v2551
        %v2553 = vpop.f32.mrb[0].mxu0
        %v2554 = vadd.f32 %v1520, %v2553
        %2555 = vdwg.mxu0
        %2556 = vmatprep.subr.bf16.mxu0 %v1968
        %2557 = vmatpush1.bf16.msra.mxu0 %v1967
        %2558 = vmatprep.subr.bf16.mxu0 %v1984
        %2559 = vmatpush1.bf16.msra.mxu0 %v1983
        %2560 = vmatprep.subr.bf16.mxu0 %v2000
        %2561 = vmatpush1.bf16.msra.mxu0 %v1999
        %2562 = vmatprep.subr.bf16.mxu0 %v2016
        %2563 = vmatpush1.bf16.msra.mxu0 %v2015
        %2564 = vmatprep.subr.bf16.mxu0 %v2032
        %2565 = vmatpush1.bf16.msra.mxu0 %v2031
        %2566 = vmatprep.subr.bf16.mxu0 %v2048
        %2567 = vmatpush1.bf16.msra.mxu0 %v2047
        %2568 = vmatprep.subr.bf16.mxu0 %v2064
        %2569 = vmatpush1.bf16.msra.mxu0 %v2063
        %2570 = vmatprep.subr.bf16.mxu0 %v2080
        %2571 = vmatpush1.bf16.msra.mxu0 %v2079
        %2572 = vmatprep.subr.bf16.mxu0 0
        %2573 = vmatpush1.bf16.msra.mxu0 0
        %2574 = vmatprep.subr.bf16.mxu0 0
        %2575 = vmatpush1.bf16.msra.mxu0 0
        %2576 = vmatprep.subr.bf16.mxu0 0
        %2577 = vmatpush1.bf16.msra.mxu0 0
        %2578 = vmatprep.subr.bf16.mxu0 0
        %2579 = vmatpush1.bf16.msra.mxu0 0
        %2580 = vmatprep.subr.bf16.mxu0 0
        %2581 = vmatpush1.bf16.msra.mxu0 0
        %2582 = vmatprep.subr.bf16.mxu0 0
        %2583 = vmatpush1.bf16.msra.mxu0 0
        %2584 = vmatprep.subr.bf16.mxu0 0
        %2585 = vmatpush1.bf16.msra.mxu0 0
        %2586 = vmatprep.subr.bf16.mxu0 0
        %2587 = vmatpush1.bf16.msra.mxu0 0
        %2588 = vmatprep.mubr.bf16.mxu0 0
        %2589 = vmatmul.mubr.bf16.gmra.mrb[0].mxu0 %v1357
        %v2590 = vpop.f32.mrb[0].mxu0
        %v2591 = vadd.f32 %v1524, %v2590
        %v2592 = vpop.f32.mrb[0].mxu0
        %v2593 = vadd.f32 %v1528, %v2592
        %v2594 = vpop.f32.mrb[0].mxu0
        %v2595 = vadd.f32 %v1524, %v2594
        %v2596 = vpop.f32.mrb[0].mxu0
        %v2597 = vadd.f32 %v1528, %v2596
        %2598 = vmatprep.mubr.bf16.mxu0 0
        %2599 = vmatmul.mubr.bf16.gmra.mrb[0].mxu0 %v1358
        %v2600 = vpop.f32.mrb[0].mxu0
        %v2601 = vadd.f32 %v1524, %v2600
        %v2602 = vpop.f32.mrb[0].mxu0
        %v2603 = vadd.f32 %v1528, %v2602
        %v2604 = vpop.f32.mrb[0].mxu0
        %v2605 = vadd.f32 %v1524, %v2604
        %v2606 = vpop.f32.mrb[0].mxu0
        %v2607 = vadd.f32 %v1528, %v2606
        %2608 = vmatprep.mubr.bf16.mxu0 0
        %2609 = vmatmul.mubr.bf16.gmra.mrb[0].mxu0 %v1359
        %v2610 = vpop.f32.mrb[0].mxu0
        %v2611 = vadd.f32 %v1524, %v2610
        %v2612 = vpop.f32.mrb[0].mxu0
        %v2613 = vadd.f32 %v1528, %v2612
        %v2614 = vpop.f32.mrb[0].mxu0
        %v2615 = vadd.f32 %v1524, %v2614
        %v2616 = vpop.f32.mrb[0].mxu0
        %v2617 = vadd.f32 %v1528, %v2616
        %2618 = vmatprep.mubr.bf16.mxu0 0
        %2619 = vmatmul.mubr.bf16.gmra.mrb[0].mxu0 %v1360
        %v2620 = vpop.f32.mrb[0].mxu0
        %v2621 = vadd.f32 %v1524, %v2620
        %v2622 = vpop.f32.mrb[0].mxu0
        %v2623 = vadd.f32 %v1528, %v2622
        %v2624 = vpop.f32.mrb[0].mxu0
        %v2625 = vadd.f32 %v1524, %v2624
        %v2626 = vpop.f32.mrb[0].mxu0
        %v2627 = vadd.f32 %v1528, %v2626
        %2628 = vmatprep.mubr.bf16.mxu0 0
        %2629 = vmatmul.mubr.bf16.gmra.mrb[0].mxu0 %v1361
        %v2630 = vpop.f32.mrb[0].mxu0
        %v2631 = vadd.f32 %v1524, %v2630
        %v2632 = vpop.f32.mrb[0].mxu0
        %v2633 = vadd.f32 %v1528, %v2632
        %v2634 = vpop.f32.mrb[0].mxu0
        %v2635 = vadd.f32 %v1524, %v2634
        %v2636 = vpop.f32.mrb[0].mxu0
        %v2637 = vadd.f32 %v1528, %v2636
        %2638 = vmatprep.mubr.bf16.mxu0 0
        %2639 = vmatmul.mubr.bf16.gmra.mrb[0].mxu0 %v1362
        %v2640 = vpop.f32.mrb[0].mxu0
        %v2641 = vadd.f32 %v1524, %v2640
        %v2642 = vpop.f32.mrb[0].mxu0
        %v2643 = vadd.f32 %v1528, %v2642
        %v2644 = vpop.f32.mrb[0].mxu0
        %v2645 = vadd.f32 %v1524, %v2644
        %v2646 = vpop.f32.mrb[0].mxu0
        %v2647 = vadd.f32 %v1528, %v2646
        %2648 = vmatprep.mubr.bf16.mxu0 0
        %2649 = vmatmul.mubr.bf16.gmra.mrb[0].mxu0 %v1363
        %v2650 = vpop.f32.mrb[0].mxu0
        %v2651 = vadd.f32 %v1524, %v2650
        %v2652 = vpop.f32.mrb[0].mxu0
        %v2653 = vadd.f32 %v1528, %v2652
        %v2654 = vpop.f32.mrb[0].mxu0
        %v2655 = vadd.f32 %v1524, %v2654
        %v2656 = vpop.f32.mrb[0].mxu0
        %v2657 = vadd.f32 %v1528, %v2656
        %2658 = vmatprep.mubr.bf16.mxu0 0
        %2659 = vmatmul.mubr.bf16.gmra.mrb[0].mxu0 %v1364
        %v2660 = vpop.f32.mrb[0].mxu0
        %v2661 = vadd.f32 %v1524, %v2660
        %v2662 = vpop.f32.mrb[0].mxu0
        %v2663 = vadd.f32 %v1528, %v2662
        %v2664 = vpop.f32.mrb[0].mxu0
        %v2665 = vadd.f32 %v1524, %v2664
        %v2666 = vpop.f32.mrb[0].mxu0
        %v2667 = vadd.f32 %v1528, %v2666
        %2668 = vdwg.mxu0
        %2669 = vmatprep.subr.bf16.mxu0 %v1970
        %2670 = vmatpush1.bf16.msra.mxu0 %v1969
        %2671 = vmatprep.subr.bf16.mxu0 %v1986
        %2672 = vmatpush1.bf16.msra.mxu0 %v1985
        %2673 = vmatprep.subr.bf16.mxu0 %v2002
        %2674 = vmatpush1.bf16.msra.mxu0 %v2001
        %2675 = vmatprep.subr.bf16.mxu0 %v2018
        %2676 = vmatpush1.bf16.msra.mxu0 %v2017
        %2677 = vmatprep.subr.bf16.mxu0 %v2034
        %2678 = vmatpush1.bf16.msra.mxu0 %v2033
        %2679 = vmatprep.subr.bf16.mxu0 %v2050
        %2680 = vmatpush1.bf16.msra.mxu0 %v2049
        %2681 = vmatprep.subr.bf16.mxu0 %v2066
        %2682 = vmatpush1.bf16.msra.mxu0 %v2065
        %2683 = vmatprep.subr.bf16.mxu0 %v2082
        %2684 = vmatpush1.bf16.msra.mxu0 %v2081
        %2685 = vmatprep.subr.bf16.mxu0 0
        %2686 = vmatpush1.bf16.msra.mxu0 0
        %2687 = vmatprep.subr.bf16.mxu0 0
        %2688 = vmatpush1.bf16.msra.mxu0 0
        %2689 = vmatprep.subr.bf16.mxu0 0
        %2690 = vmatpush1.bf16.msra.mxu0 0
        %2691 = vmatprep.subr.bf16.mxu0 0
        %2692 = vmatpush1.bf16.msra.mxu0 0
        %2693 = vmatprep.subr.bf16.mxu0 0
        %2694 = vmatpush1.bf16.msra.mxu0 0
        %2695 = vmatprep.subr.bf16.mxu0 0
        %2696 = vmatpush1.bf16.msra.mxu0 0
        %2697 = vmatprep.subr.bf16.mxu0 0
        %2698 = vmatpush1.bf16.msra.mxu0 0
        %2699 = vmatprep.subr.bf16.mxu0 0
        %2700 = vmatpush1.bf16.msra.mxu0 0
        %2701 = vmatprep.mubr.bf16.mxu0 0
        %2702 = vmatmul.mubr.bf16.gmra.mrb[0].mxu0 %v1357
        %v2703 = vpop.f32.mrb[0].mxu0
        %v2704 = vadd.f32 %v1532, %v2703
        %v2705 = vpop.f32.mrb[0].mxu0
        %v2706 = vadd.f32 %v1536, %v2705
        %v2707 = vpop.f32.mrb[0].mxu0
        %v2708 = vadd.f32 %v1532, %v2707
        %v2709 = vpop.f32.mrb[0].mxu0
        %v2710 = vadd.f32 %v1536, %v2709
        %2711 = vmatprep.mubr.bf16.mxu0 0
        %2712 = vmatmul.mubr.bf16.gmra.mrb[0].mxu0 %v1358
        %v2713 = vpop.f32.mrb[0].mxu0
        %v2714 = vadd.f32 %v1532, %v2713
        %v2715 = vpop.f32.mrb[0].mxu0
        %v2716 = vadd.f32 %v1536, %v2715
        %v2717 = vpop.f32.mrb[0].mxu0
        %v2718 = vadd.f32 %v1532, %v2717
        %v2719 = vpop.f32.mrb[0].mxu0
        %v2720 = vadd.f32 %v1536, %v2719
        %2721 = vmatprep.mubr.bf16.mxu0 0
        %2722 = vmatmul.mubr.bf16.gmra.mrb[0].mxu0 %v1359
        %v2723 = vpop.f32.mrb[0].mxu0
        %v2724 = vadd.f32 %v1532, %v2723
        %v2725 = vpop.f32.mrb[0].mxu0
        %v2726 = vadd.f32 %v1536, %v2725
        %v2727 = vpop.f32.mrb[0].mxu0
        %v2728 = vadd.f32 %v1532, %v2727
        %v2729 = vpop.f32.mrb[0].mxu0
        %v2730 = vadd.f32 %v1536, %v2729
        %2731 = vmatprep.mubr.bf16.mxu0 0
        %2732 = vmatmul.mubr.bf16.gmra.mrb[0].mxu0 %v1360
        %v2733 = vpop.f32.mrb[0].mxu0
        %v2734 = vadd.f32 %v1532, %v2733
        %v2735 = vpop.f32.mrb[0].mxu0
        %v2736 = vadd.f32 %v1536, %v2735
        %v2737 = vpop.f32.mrb[0].mxu0
        %v2738 = vadd.f32 %v1532, %v2737
        %v2739 = vpop.f32.mrb[0].mxu0
        %v2740 = vadd.f32 %v1536, %v2739
        %2741 = vmatprep.mubr.bf16.mxu0 0
        %2742 = vmatmul.mubr.bf16.gmra.mrb[0].mxu0 %v1361
        %v2743 = vpop.f32.mrb[0].mxu0
        %v2744 = vadd.f32 %v1532, %v2743
        %v2745 = vpop.f32.mrb[0].mxu0
        %v2746 = vadd.f32 %v1536, %v2745
        %v2747 = vpop.f32.mrb[0].mxu0
        %v2748 = vadd.f32 %v1532, %v2747
        %v2749 = vpop.f32.mrb[0].mxu0
        %v2750 = vadd.f32 %v1536, %v2749
        %2751 = vmatprep.mubr.bf16.mxu0 0
        %2752 = vmatmul.mubr.bf16.gmra.mrb[0].mxu0 %v1362
        %v2753 = vpop.f32.mrb[0].mxu0
        %v2754 = vadd.f32 %v1532, %v2753
        %v2755 = vpop.f32.mrb[0].mxu0
        %v2756 = vadd.f32 %v1536, %v2755
        %v2757 = vpop.f32.mrb[0].mxu0
        %v2758 = vadd.f32 %v1532, %v2757
        %v2759 = vpop.f32.mrb[0].mxu0
        %v2760 = vadd.f32 %v1536, %v2759
        %2761 = vmatprep.mubr.bf16.mxu0 0
        %2762 = vmatmul.mubr.bf16.gmra.mrb[0].mxu0 %v1363
        %v2763 = vpop.f32.mrb[0].mxu0
        %v2764 = vadd.f32 %v1532, %v2763
        %v2765 = vpop.f32.mrb[0].mxu0
        %v2766 = vadd.f32 %v1536, %v2765
        %v2767 = vpop.f32.mrb[0].mxu0
        %v2768 = vadd.f32 %v1532, %v2767
        %v2769 = vpop.f32.mrb[0].mxu0
        %v2770 = vadd.f32 %v1536, %v2769
        %2771 = vmatprep.mubr.bf16.mxu0 0
        %2772 = vmatmul.mubr.bf16.gmra.mrb[0].mxu0 %v1364
        %v2773 = vpop.f32.mrb[0].mxu0
        %v2774 = vadd.f32 %v1532, %v2773
        %v2775 = vpop.f32.mrb[0].mxu0
        %v2776 = vadd.f32 %v1536, %v2775
        %v2777 = vpop.f32.mrb[0].mxu0
        %v2778 = vadd.f32 %v1532, %v2777
        %v2779 = vpop.f32.mrb[0].mxu0
        %v2780 = vadd.f32 %v1536, %v2779
        %2781 = vdwg.mxu0
        %2782 = vmatprep.subr.bf16.mxu0 %v1972
        %2783 = vmatpush1.bf16.msra.mxu0 %v1971
        %2784 = vmatprep.subr.bf16.mxu0 %v1988
        %2785 = vmatpush1.bf16.msra.mxu0 %v1987
        %2786 = vmatprep.subr.bf16.mxu0 %v2004
        %2787 = vmatpush1.bf16.msra.mxu0 %v2003
        %2788 = vmatprep.subr.bf16.mxu0 %v2020
        %2789 = vmatpush1.bf16.msra.mxu0 %v2019
        %2790 = vmatprep.subr.bf16.mxu0 %v2036
        %2791 = vmatpush1.bf16.msra.mxu0 %v2035
        %2792 = vmatprep.subr.bf16.mxu0 %v2052
        %2793 = vmatpush1.bf16.msra.mxu0 %v2051
        %2794 = vmatprep.subr.bf16.mxu0 %v2068
        %2795 = vmatpush1.bf16.msra.mxu0 %v2067
        %2796 = vmatprep.subr.bf16.mxu0 %v2084
        %2797 = vmatpush1.bf16.msra.mxu0 %v2083
        %2798 = vmatprep.subr.bf16.mxu0 0
        %2799 = vmatpush1.bf16.msra.mxu0 0
        %2800 = vmatprep.subr.bf16.mxu0 0
        %2801 = vmatpush1.bf16.msra.mxu0 0
        %2802 = vmatprep.subr.bf16.mxu0 0
        %2803 = vmatpush1.bf16.msra.mxu0 0
        %2804 = vmatprep.subr.bf16.mxu0 0
        %2805 = vmatpush1.bf16.msra.mxu0 0
        %2806 = vmatprep.subr.bf16.mxu0 0
        %2807 = vmatpush1.bf16.msra.mxu0 0
        %2808 = vmatprep.subr.bf16.mxu0 0
        %2809 = vmatpush1.bf16.msra.mxu0 0
        %2810 = vmatprep.subr.bf16.mxu0 0
        %2811 = vmatpush1.bf16.msra.mxu0 0
        %2812 = vmatprep.subr.bf16.mxu0 0
        %2813 = vmatpush1.bf16.msra.mxu0 0
        %2814 = vmatprep.mubr.bf16.mxu0 0
        %2815 = vmatmul.mubr.bf16.gmra.mrb[0].mxu0 %v1357
        %v2816 = vpop.f32.mrb[0].mxu0
        %v2817 = vadd.f32 %v1540, %v2816
        %v2818 = vpop.f32.mrb[0].mxu0
        %v2819 = vadd.f32 %v1544, %v2818
        %v2820 = vpop.f32.mrb[0].mxu0
        %v2821 = vadd.f32 %v1540, %v2820
        %v2822 = vpop.f32.mrb[0].mxu0
        %v2823 = vadd.f32 %v1544, %v2822
        %2824 = vmatprep.mubr.bf16.mxu0 0
        %2825 = vmatmul.mubr.bf16.gmra.mrb[0].mxu0 %v1358
        %v2826 = vpop.f32.mrb[0].mxu0
        %v2827 = vadd.f32 %v1540, %v2826
        %v2828 = vpop.f32.mrb[0].mxu0
        %v2829 = vadd.f32 %v1544, %v2828
        %v2830 = vpop.f32.mrb[0].mxu0
        %v2831 = vadd.f32 %v1540, %v2830
        %v2832 = vpop.f32.mrb[0].mxu0
        %v2833 = vadd.f32 %v1544, %v2832
        %2834 = vmatprep.mubr.bf16.mxu0 0
        %2835 = vmatmul.mubr.bf16.gmra.mrb[0].mxu0 %v1359
        %v2836 = vpop.f32.mrb[0].mxu0
        %v2837 = vadd.f32 %v1540, %v2836
        %v2838 = vpop.f32.mrb[0].mxu0
        %v2839 = vadd.f32 %v1544, %v2838
        %v2840 = vpop.f32.mrb[0].mxu0
        %v2841 = vadd.f32 %v1540, %v2840
        %v2842 = vpop.f32.mrb[0].mxu0
        %v2843 = vadd.f32 %v1544, %v2842
        %2844 = vmatprep.mubr.bf16.mxu0 0
        %2845 = vmatmul.mubr.bf16.gmra.mrb[0].mxu0 %v1360
        %v2846 = vpop.f32.mrb[0].mxu0
        %v2847 = vadd.f32 %v1540, %v2846
        %v2848 = vpop.f32.mrb[0].mxu0
        %v2849 = vadd.f32 %v1544, %v2848
        %v2850 = vpop.f32.mrb[0].mxu0
        %v2851 = vadd.f32 %v1540, %v2850
        %v2852 = vpop.f32.mrb[0].mxu0
        %v2853 = vadd.f32 %v1544, %v2852
        %2854 = vmatprep.mubr.bf16.mxu0 0
        %2855 = vmatmul.mubr.bf16.gmra.mrb[0].mxu0 %v1361
        %v2856 = vpop.f32.mrb[0].mxu0
        %v2857 = vadd.f32 %v1540, %v2856
        %v2858 = vpop.f32.mrb[0].mxu0
        %v2859 = vadd.f32 %v1544, %v2858
        %v2860 = vpop.f32.mrb[0].mxu0
        %v2861 = vadd.f32 %v1540, %v2860
        %v2862 = vpop.f32.mrb[0].mxu0
        %v2863 = vadd.f32 %v1544, %v2862
        %2864 = vmatprep.mubr.bf16.mxu0 0
        %2865 = vmatmul.mubr.bf16.gmra.mrb[0].mxu0 %v1362
        %v2866 = vpop.f32.mrb[0].mxu0
        %v2867 = vadd.f32 %v1540, %v2866
        %v2868 = vpop.f32.mrb[0].mxu0
        %v2869 = vadd.f32 %v1544, %v2868
        %v2870 = vpop.f32.mrb[0].mxu0
        %v2871 = vadd.f32 %v1540, %v2870
        %v2872 = vpop.f32.mrb[0].mxu0
        %v2873 = vadd.f32 %v1544, %v2872
        %2874 = vmatprep.mubr.bf16.mxu0 0
        %2875 = vmatmul.mubr.bf16.gmra.mrb[0].mxu0 %v1363
        %v2876 = vpop.f32.mrb[0].mxu0
        %v2877 = vadd.f32 %v1540, %v2876
        %v2878 = vpop.f32.mrb[0].mxu0
        %v2879 = vadd.f32 %v1544, %v2878
        %v2880 = vpop.f32.mrb[0].mxu0
        %v2881 = vadd.f32 %v1540, %v2880
        %v2882 = vpop.f32.mrb[0].mxu0
        %v2883 = vadd.f32 %v1544, %v2882
        %2884 = vmatprep.mubr.bf16.mxu0 0
        %2885 = vmatmul.mubr.bf16.gmra.mrb[0].mxu0 %v1364
        %v2886 = vpop.f32.mrb[0].mxu0
        %v2887 = vadd.f32 %v1540, %v2886
        %v2888 = vpop.f32.mrb[0].mxu0
        %v2889 = vadd.f32 %v1544, %v2888
        %v2890 = vpop.f32.mrb[0].mxu0
        %v2891 = vadd.f32 %v1540, %v2890
        %v2892 = vpop.f32.mrb[0].mxu0
        %v2893 = vadd.f32 %v1544, %v2892
        %2894 = vdwg.mxu0
        %2895 = vmatprep.subr.bf16.mxu0 %v1974
        %2896 = vmatpush1.bf16.msra.mxu0 %v1973
        %2897 = vmatprep.subr.bf16.mxu0 %v1990
        %2898 = vmatpush1.bf16.msra.mxu0 %v1989
        %2899 = vmatprep.subr.bf16.mxu0 %v2006
        %2900 = vmatpush1.bf16.msra.mxu0 %v2005
        %2901 = vmatprep.subr.bf16.mxu0 %v2022
        %2902 = vmatpush1.bf16.msra.mxu0 %v2021
        %2903 = vmatprep.subr.bf16.mxu0 %v2038
        %2904 = vmatpush1.bf16.msra.mxu0 %v2037
        %2905 = vmatprep.subr.bf16.mxu0 %v2054
        %2906 = vmatpush1.bf16.msra.mxu0 %v2053
        %2907 = vmatprep.subr.bf16.mxu0 %v2070
        %2908 = vmatpush1.bf16.msra.mxu0 %v2069
        %2909 = vmatprep.subr.bf16.mxu0 %v2086
        %2910 = vmatpush1.bf16.msra.mxu0 %v2085
        %2911 = vmatprep.subr.bf16.mxu0 0
        %2912 = vmatpush1.bf16.msra.mxu0 0
        %2913 = vmatprep.subr.bf16.mxu0 0
        %2914 = vmatpush1.bf16.msra.mxu0 0
        %2915 = vmatprep.subr.bf16.mxu0 0
        %2916 = vmatpush1.bf16.msra.mxu0 0
        %2917 = vmatprep.subr.bf16.mxu0 0
        %2918 = vmatpush1.bf16.msra.mxu0 0
        %2919 = vmatprep.subr.bf16.mxu0 0
        %2920 = vmatpush1.bf16.msra.mxu0 0
        %2921 = vmatprep.subr.bf16.mxu0 0
        %2922 = vmatpush1.bf16.msra.mxu0 0
        %2923 = vmatprep.subr.bf16.mxu0 0
        %2924 = vmatpush1.bf16.msra.mxu0 0
        %2925 = vmatprep.subr.bf16.mxu0 0
        %2926 = vmatpush1.bf16.msra.mxu0 0
        %2927 = vmatprep.mubr.bf16.mxu0 0
        %2928 = vmatmul.mubr.bf16.gmra.mrb[0].mxu0 %v1357
        %v2929 = vpop.f32.mrb[0].mxu0
        %v2930 = vadd.f32 %v1548, %v2929
        %v2931 = vpop.f32.mrb[0].mxu0
        %v2932 = vadd.f32 %v1552, %v2931
        %v2933 = vpop.f32.mrb[0].mxu0
        %v2934 = vadd.f32 %v1548, %v2933
        %v2935 = vpop.f32.mrb[0].mxu0
        %v2936 = vadd.f32 %v1552, %v2935
        %2937 = vmatprep.mubr.bf16.mxu0 0
        %2938 = vmatmul.mubr.bf16.gmra.mrb[0].mxu0 %v1358
        %v2939 = vpop.f32.mrb[0].mxu0
        %v2940 = vadd.f32 %v1548, %v2939
        %v2941 = vpop.f32.mrb[0].mxu0
        %v2942 = vadd.f32 %v1552, %v2941
        %v2943 = vpop.f32.mrb[0].mxu0
        %v2944 = vadd.f32 %v1548, %v2943
        %v2945 = vpop.f32.mrb[0].mxu0
        %v2946 = vadd.f32 %v1552, %v2945
        %2947 = vmatprep.mubr.bf16.mxu0 0
        %2948 = vmatmul.mubr.bf16.gmra.mrb[0].mxu0 %v1359
        %v2949 = vpop.f32.mrb[0].mxu0
        %v2950 = vadd.f32 %v1548, %v2949
        %v2951 = vpop.f32.mrb[0].mxu0
        %v2952 = vadd.f32 %v1552, %v2951
        %v2953 = vpop.f32.mrb[0].mxu0
        %v2954 = vadd.f32 %v1548, %v2953
        %v2955 = vpop.f32.mrb[0].mxu0
        %v2956 = vadd.f32 %v1552, %v2955
        %2957 = vmatprep.mubr.bf16.mxu0 0
        %2958 = vmatmul.mubr.bf16.gmra.mrb[0].mxu0 %v1360
        %v2959 = vpop.f32.mrb[0].mxu0
        %v2960 = vadd.f32 %v1548, %v2959
        %v2961 = vpop.f32.mrb[0].mxu0
        %v2962 = vadd.f32 %v1552, %v2961
        %v2963 = vpop.f32.mrb[0].mxu0
        %v2964 = vadd.f32 %v1548, %v2963
        %v2965 = vpop.f32.mrb[0].mxu0
        %v2966 = vadd.f32 %v1552, %v2965
        %2967 = vmatprep.mubr.bf16.mxu0 0
        %2968 = vmatmul.mubr.bf16.gmra.mrb[0].mxu0 %v1361
        %v2969 = vpop.f32.mrb[0].mxu0
        %v2970 = vadd.f32 %v1548, %v2969
        %v2971 = vpop.f32.mrb[0].mxu0
        %v2972 = vadd.f32 %v1552, %v2971
        %v2973 = vpop.f32.mrb[0].mxu0
        %v2974 = vadd.f32 %v1548, %v2973
        %v2975 = vpop.f32.mrb[0].mxu0
        %v2976 = vadd.f32 %v1552, %v2975
        %2977 = vmatprep.mubr.bf16.mxu0 0
        %2978 = vmatmul.mubr.bf16.gmra.mrb[0].mxu0 %v1362
        %v2979 = vpop.f32.mrb[0].mxu0
        %v2980 = vadd.f32 %v1548, %v2979
        %v2981 = vpop.f32.mrb[0].mxu0
        %v2982 = vadd.f32 %v1552, %v2981
        %v2983 = vpop.f32.mrb[0].mxu0
        %v2984 = vadd.f32 %v1548, %v2983
        %v2985 = vpop.f32.mrb[0].mxu0
        %v2986 = vadd.f32 %v1552, %v2985
        %2987 = vmatprep.mubr.bf16.mxu0 0
        %2988 = vmatmul.mubr.bf16.gmra.mrb[0].mxu0 %v1363
        %v2989 = vpop.f32.mrb[0].mxu0
        %v2990 = vadd.f32 %v1548, %v2989
        %v2991 = vpop.f32.mrb[0].mxu0
        %v2992 = vadd.f32 %v1552, %v2991
        %v2993 = vpop.f32.mrb[0].mxu0
        %v2994 = vadd.f32 %v1548, %v2993
        %v2995 = vpop.f32.mrb[0].mxu0
        %v2996 = vadd.f32 %v1552, %v2995
        %2997 = vmatprep.mubr.bf16.mxu0 0
        %2998 = vmatmul.mubr.bf16.gmra.mrb[0].mxu0 %v1364
        %v2999 = vpop.f32.mrb[0].mxu0
        %v3000 = vadd.f32 %v1548, %v2999
        %v3001 = vpop.f32.mrb[0].mxu0
        %v3002 = vadd.f32 %v1552, %v3001
        %v3003 = vpop.f32.mrb[0].mxu0
        %v3004 = vadd.f32 %v1548, %v3003
        %v3005 = vpop.f32.mrb[0].mxu0
        %v3006 = vadd.f32 %v1552, %v3005
        %3007 = vdwg.mxu0
        %3008 = vmatprep.subr.bf16.mxu0 %v1976
        %3009 = vmatpush1.bf16.msra.mxu0 %v1975
        %3010 = vmatprep.subr.bf16.mxu0 %v1992
        %3011 = vmatpush1.bf16.msra.mxu0 %v1991
        %3012 = vmatprep.subr.bf16.mxu0 %v2008
        %3013 = vmatpush1.bf16.msra.mxu0 %v2007
        %3014 = vmatprep.subr.bf16.mxu0 %v2024
        %3015 = vmatpush1.bf16.msra.mxu0 %v2023
        %3016 = vmatprep.subr.bf16.mxu0 %v2040
        %3017 = vmatpush1.bf16.msra.mxu0 %v2039
        %3018 = vmatprep.subr.bf16.mxu0 %v2056
        %3019 = vmatpush1.bf16.msra.mxu0 %v2055
        %3020 = vmatprep.subr.bf16.mxu0 %v2072
        %3021 = vmatpush1.bf16.msra.mxu0 %v2071
        %3022 = vmatprep.subr.bf16.mxu0 %v2088
        %3023 = vmatpush1.bf16.msra.mxu0 %v2087
        %3024 = vmatprep.subr.bf16.mxu0 0
        %3025 = vmatpush1.bf16.msra.mxu0 0
        %3026 = vmatprep.subr.bf16.mxu0 0
        %3027 = vmatpush1.bf16.msra.mxu0 0
        %3028 = vmatprep.subr.bf16.mxu0 0
        %3029 = vmatpush1.bf16.msra.mxu0 0
        %3030 = vmatprep.subr.bf16.mxu0 0
        %3031 = vmatpush1.bf16.msra.mxu0 0
        %3032 = vmatprep.subr.bf16.mxu0 0
        %3033 = vmatpush1.bf16.msra.mxu0 0
        %3034 = vmatprep.subr.bf16.mxu0 0
        %3035 = vmatpush1.bf16.msra.mxu0 0
        %3036 = vmatprep.subr.bf16.mxu0 0
        %3037 = vmatpush1.bf16.msra.mxu0 0
        %3038 = vmatprep.subr.bf16.mxu0 0
        %3039 = vmatpush1.bf16.msra.mxu0 0
        %3040 = vmatprep.mubr.bf16.mxu0 0
        %3041 = vmatmul.mubr.bf16.gmra.mrb[0].mxu0 %v1357
        %v3042 = vpop.f32.mrb[0].mxu0
        %v3043 = vadd.f32 %v1556, %v3042
        %v3044 = vpop.f32.mrb[0].mxu0
        %v3045 = vadd.f32 %v1560, %v3044
        %v3046 = vpop.f32.mrb[0].mxu0
        %v3047 = vadd.f32 %v1556, %v3046
        %v3048 = vpop.f32.mrb[0].mxu0
        %v3049 = vadd.f32 %v1560, %v3048
        %3050 = vmatprep.mubr.bf16.mxu0 0
        %3051 = vmatmul.mubr.bf16.gmra.mrb[0].mxu0 %v1358
        %v3052 = vpop.f32.mrb[0].mxu0
        %v3053 = vadd.f32 %v1556, %v3052
        %v3054 = vpop.f32.mrb[0].mxu0
        %v3055 = vadd.f32 %v1560, %v3054
        %v3056 = vpop.f32.mrb[0].mxu0
        %v3057 = vadd.f32 %v1556, %v3056
        %v3058 = vpop.f32.mrb[0].mxu0
        %v3059 = vadd.f32 %v1560, %v3058
        %3060 = vmatprep.mubr.bf16.mxu0 0
        %3061 = vmatmul.mubr.bf16.gmra.mrb[0].mxu0 %v1359
        %v3062 = vpop.f32.mrb[0].mxu0
        %v3063 = vadd.f32 %v1556, %v3062
        %v3064 = vpop.f32.mrb[0].mxu0
        %v3065 = vadd.f32 %v1560, %v3064
        %v3066 = vpop.f32.mrb[0].mxu0
        %v3067 = vadd.f32 %v1556, %v3066
        %v3068 = vpop.f32.mrb[0].mxu0
        %v3069 = vadd.f32 %v1560, %v3068
        %3070 = vmatprep.mubr.bf16.mxu0 0
        %3071 = vmatmul.mubr.bf16.gmra.mrb[0].mxu0 %v1360
        %v3072 = vpop.f32.mrb[0].mxu0
        %v3073 = vadd.f32 %v1556, %v3072
        %v3074 = vpop.f32.mrb[0].mxu0
        %v3075 = vadd.f32 %v1560, %v3074
        %v3076 = vpop.f32.mrb[0].mxu0
        %v3077 = vadd.f32 %v1556, %v3076
        %v3078 = vpop.f32.mrb[0].mxu0
        %v3079 = vadd.f32 %v1560, %v3078
        %3080 = vmatprep.mubr.bf16.mxu0 0
        %3081 = vmatmul.mubr.bf16.gmra.mrb[0].mxu0 %v1361
        %v3082 = vpop.f32.mrb[0].mxu0
        %v3083 = vadd.f32 %v1556, %v3082
        %v3084 = vpop.f32.mrb[0].mxu0
        %v3085 = vadd.f32 %v1560, %v3084
        %v3086 = vpop.f32.mrb[0].mxu0
        %v3087 = vadd.f32 %v1556, %v3086
        %v3088 = vpop.f32.mrb[0].mxu0
        %v3089 = vadd.f32 %v1560, %v3088
        %3090 = vmatprep.mubr.bf16.mxu0 0
        %3091 = vmatmul.mubr.bf16.gmra.mrb[0].mxu0 %v1362
        %v3092 = vpop.f32.mrb[0].mxu0
        %v3093 = vadd.f32 %v1556, %v3092
        %v3094 = vpop.f32.mrb[0].mxu0
        %v3095 = vadd.f32 %v1560, %v3094
        %v3096 = vpop.f32.mrb[0].mxu0
        %v3097 = vadd.f32 %v1556, %v3096
        %v3098 = vpop.f32.mrb[0].mxu0
        %v3099 = vadd.f32 %v1560, %v3098
        %3100 = vmatprep.mubr.bf16.mxu0 0
        %3101 = vmatmul.mubr.bf16.gmra.mrb[0].mxu0 %v1363
        %v3102 = vpop.f32.mrb[0].mxu0
        %v3103 = vadd.f32 %v1556, %v3102
        %v3104 = vpop.f32.mrb[0].mxu0
        %v3105 = vadd.f32 %v1560, %v3104
        %v3106 = vpop.f32.mrb[0].mxu0
        %v3107 = vadd.f32 %v1556, %v3106
        %v3108 = vpop.f32.mrb[0].mxu0
        %v3109 = vadd.f32 %v1560, %v3108
        %3110 = vmatprep.mubr.bf16.mxu0 0
        %3111 = vmatmul.mubr.bf16.gmra.mrb[0].mxu0 %v1364
        %v3112 = vpop.f32.mrb[0].mxu0
        %v3113 = vadd.f32 %v1556, %v3112
        %v3114 = vpop.f32.mrb[0].mxu0
        %v3115 = vadd.f32 %v1560, %v3114
        %v3116 = vpop.f32.mrb[0].mxu0
        %v3117 = vadd.f32 %v1556, %v3116
        %v3118 = vpop.f32.mrb[0].mxu0
        %v3119 = vadd.f32 %v1560, %v3118
        %3120 = vdwg.mxu0
        %v3121 = vmax.f32 %v2252, 0.0
        %v3122 = vmax.f32 %v2254, 0.0
        %v3123 = vmax.f32 %v2365, 0.0
        %v3124 = vmax.f32 %v2367, 0.0
        %v3125 = vmax.f32 %v2478, 0.0
        %v3126 = vmax.f32 %v2480, 0.0
        %v3127 = vmax.f32 %v2591, 0.0
        %v3128 = vmax.f32 %v2593, 0.0
        %v3129 = vmax.f32 %v2704, 0.0
        %v3130 = vmax.f32 %v2706, 0.0
        %v3131 = vmax.f32 %v2817, 0.0
        %v3132 = vmax.f32 %v2819, 0.0
        %v3133 = vmax.f32 %v2930, 0.0
        %v3134 = vmax.f32 %v2932, 0.0
        %v3135 = vmax.f32 %v3043, 0.0
        %v3136 = vmax.f32 %v3045, 0.0
        %v3137 = vmax.f32 %v2256, 0.0
        %v3138 = vmax.f32 %v2258, 0.0
        %v3139 = vmax.f32 %v2369, 0.0
        %v3140 = vmax.f32 %v2371, 0.0
        %v3141 = vmax.f32 %v2482, 0.0
        %v3142 = vmax.f32 %v2484, 0.0
        %v3143 = vmax.f32 %v2595, 0.0
        %v3144 = vmax.f32 %v2597, 0.0
        %v3145 = vmax.f32 %v2708, 0.0
        %v3146 = vmax.f32 %v2710, 0.0
        %v3147 = vmax.f32 %v2821, 0.0
        %v3148 = vmax.f32 %v2823, 0.0
        %v3149 = vmax.f32 %v2934, 0.0
        %v3150 = vmax.f32 %v2936, 0.0
        %v3151 = vmax.f32 %v3047, 0.0
        %v3152 = vmax.f32 %v3049, 0.0
        %v3153 = vmax.f32 %v2262, 0.0
        %v3154 = vmax.f32 %v2264, 0.0
        %v3155 = vmax.f32 %v2375, 0.0
        %v3156 = vmax.f32 %v2377, 0.0
        %v3157 = vmax.f32 %v2488, 0.0
        %v3158 = vmax.f32 %v2490, 0.0
        %v3159 = vmax.f32 %v2601, 0.0
        %v3160 = vmax.f32 %v2603, 0.0
        %v3161 = vmax.f32 %v2714, 0.0
        %v3162 = vmax.f32 %v2716, 0.0
        %v3163 = vmax.f32 %v2827, 0.0
        %v3164 = vmax.f32 %v2829, 0.0
        %v3165 = vmax.f32 %v2940, 0.0
        %v3166 = vmax.f32 %v2942, 0.0
        %v3167 = vmax.f32 %v3053, 0.0
        %v3168 = vmax.f32 %v3055, 0.0
        %v3169 = vmax.f32 %v2266, 0.0
        %v3170 = vmax.f32 %v2268, 0.0
        %v3171 = vmax.f32 %v2379, 0.0
        %v3172 = vmax.f32 %v2381, 0.0
        %v3173 = vmax.f32 %v2492, 0.0
        %v3174 = vmax.f32 %v2494, 0.0
        %v3175 = vmax.f32 %v2605, 0.0
        %v3176 = vmax.f32 %v2607, 0.0
        %v3177 = vmax.f32 %v2718, 0.0
        %v3178 = vmax.f32 %v2720, 0.0
        %v3179 = vmax.f32 %v2831, 0.0
        %v3180 = vmax.f32 %v2833, 0.0
        %v3181 = vmax.f32 %v2944, 0.0
        %v3182 = vmax.f32 %v2946, 0.0
        %v3183 = vmax.f32 %v3057, 0.0
        %v3184 = vmax.f32 %v3059, 0.0
        %v3185 = vmax.f32 %v2272, 0.0
        %v3186 = vmax.f32 %v2274, 0.0
        %v3187 = vmax.f32 %v2385, 0.0
        %v3188 = vmax.f32 %v2387, 0.0
        %v3189 = vmax.f32 %v2498, 0.0
        %v3190 = vmax.f32 %v2500, 0.0
        %v3191 = vmax.f32 %v2611, 0.0
        %v3192 = vmax.f32 %v2613, 0.0
        %v3193 = vmax.f32 %v2724, 0.0
        %v3194 = vmax.f32 %v2726, 0.0
        %v3195 = vmax.f32 %v2837, 0.0
        %v3196 = vmax.f32 %v2839, 0.0
        %v3197 = vmax.f32 %v2950, 0.0
        %v3198 = vmax.f32 %v2952, 0.0
        %v3199 = vmax.f32 %v3063, 0.0
        %v3200 = vmax.f32 %v3065, 0.0
        %v3201 = vmax.f32 %v2276, 0.0
        %v3202 = vmax.f32 %v2278, 0.0
        %v3203 = vmax.f32 %v2389, 0.0
        %v3204 = vmax.f32 %v2391, 0.0
        %v3205 = vmax.f32 %v2502, 0.0
        %v3206 = vmax.f32 %v2504, 0.0
        %v3207 = vmax.f32 %v2615, 0.0
        %v3208 = vmax.f32 %v2617, 0.0
        %v3209 = vmax.f32 %v2728, 0.0
        %v3210 = vmax.f32 %v2730, 0.0
        %v3211 = vmax.f32 %v2841, 0.0
        %v3212 = vmax.f32 %v2843, 0.0
        %v3213 = vmax.f32 %v2954, 0.0
        %v3214 = vmax.f32 %v2956, 0.0
        %v3215 = vmax.f32 %v3067, 0.0
        %v3216 = vmax.f32 %v3069, 0.0
        %v3217 = vmax.f32 %v2282, 0.0
        %v3218 = vmax.f32 %v2284, 0.0
        %v3219 = vmax.f32 %v2395, 0.0
        %v3220 = vmax.f32 %v2397, 0.0
        %v3221 = vmax.f32 %v2508, 0.0
        %v3222 = vmax.f32 %v2510, 0.0
        %v3223 = vmax.f32 %v2621, 0.0
        %v3224 = vmax.f32 %v2623, 0.0
        %v3225 = vmax.f32 %v2734, 0.0
        %v3226 = vmax.f32 %v2736, 0.0
        %v3227 = vmax.f32 %v2847, 0.0
        %v3228 = vmax.f32 %v2849, 0.0
        %v3229 = vmax.f32 %v2960, 0.0
        %v3230 = vmax.f32 %v2962, 0.0
        %v3231 = vmax.f32 %v3073, 0.0
        %v3232 = vmax.f32 %v3075, 0.0
        %v3233 = vmax.f32 %v2286, 0.0
        %v3234 = vmax.f32 %v2288, 0.0
        %v3235 = vmax.f32 %v2399, 0.0
        %v3236 = vmax.f32 %v2401, 0.0
        %v3237 = vmax.f32 %v2512, 0.0
        %v3238 = vmax.f32 %v2514, 0.0
        %v3239 = vmax.f32 %v2625, 0.0
        %v3240 = vmax.f32 %v2627, 0.0
        %v3241 = vmax.f32 %v2738, 0.0
        %v3242 = vmax.f32 %v2740, 0.0
        %v3243 = vmax.f32 %v2851, 0.0
        %v3244 = vmax.f32 %v2853, 0.0
        %v3245 = vmax.f32 %v2964, 0.0
        %v3246 = vmax.f32 %v2966, 0.0
        %v3247 = vmax.f32 %v3077, 0.0
        %v3248 = vmax.f32 %v3079, 0.0
        %v3249 = vmax.f32 %v2292, 0.0
        %v3250 = vmax.f32 %v2294, 0.0
        %v3251 = vmax.f32 %v2405, 0.0
        %v3252 = vmax.f32 %v2407, 0.0
        %v3253 = vmax.f32 %v2518, 0.0
        %v3254 = vmax.f32 %v2520, 0.0
        %v3255 = vmax.f32 %v2631, 0.0
        %v3256 = vmax.f32 %v2633, 0.0
        %v3257 = vmax.f32 %v2744, 0.0
        %v3258 = vmax.f32 %v2746, 0.0
        %v3259 = vmax.f32 %v2857, 0.0
        %v3260 = vmax.f32 %v2859, 0.0
        %v3261 = vmax.f32 %v2970, 0.0
        %v3262 = vmax.f32 %v2972, 0.0
        %v3263 = vmax.f32 %v3083, 0.0
        %v3264 = vmax.f32 %v3085, 0.0
        %v3265 = vmax.f32 %v2296, 0.0
        %v3266 = vmax.f32 %v2298, 0.0
        %v3267 = vmax.f32 %v2409, 0.0
        %v3268 = vmax.f32 %v2411, 0.0
        %v3269 = vmax.f32 %v2522, 0.0
        %v3270 = vmax.f32 %v2524, 0.0
        %v3271 = vmax.f32 %v2635, 0.0
        %v3272 = vmax.f32 %v2637, 0.0
        %v3273 = vmax.f32 %v2748, 0.0
        %v3274 = vmax.f32 %v2750, 0.0
        %v3275 = vmax.f32 %v2861, 0.0
        %v3276 = vmax.f32 %v2863, 0.0
        %v3277 = vmax.f32 %v2974, 0.0
        %v3278 = vmax.f32 %v2976, 0.0
        %v3279 = vmax.f32 %v3087, 0.0
        %v3280 = vmax.f32 %v3089, 0.0
        %v3281 = vmax.f32 %v2302, 0.0
        %v3282 = vmax.f32 %v2304, 0.0
        %v3283 = vmax.f32 %v2415, 0.0
        %v3284 = vmax.f32 %v2417, 0.0
        %v3285 = vmax.f32 %v2528, 0.0
        %v3286 = vmax.f32 %v2530, 0.0
        %v3287 = vmax.f32 %v2641, 0.0
        %v3288 = vmax.f32 %v2643, 0.0
        %v3289 = vmax.f32 %v2754, 0.0
        %v3290 = vmax.f32 %v2756, 0.0
        %v3291 = vmax.f32 %v2867, 0.0
        %v3292 = vmax.f32 %v2869, 0.0
        %v3293 = vmax.f32 %v2980, 0.0
        %v3294 = vmax.f32 %v2982, 0.0
        %v3295 = vmax.f32 %v3093, 0.0
        %v3296 = vmax.f32 %v3095, 0.0
        %v3297 = vmax.f32 %v2306, 0.0
        %v3298 = vmax.f32 %v2308, 0.0
        %v3299 = vmax.f32 %v2419, 0.0
        %v3300 = vmax.f32 %v2421, 0.0
        %v3301 = vmax.f32 %v2532, 0.0
        %v3302 = vmax.f32 %v2534, 0.0
        %v3303 = vmax.f32 %v2645, 0.0
        %v3304 = vmax.f32 %v2647, 0.0
        %v3305 = vmax.f32 %v2758, 0.0
        %v3306 = vmax.f32 %v2760, 0.0
        %v3307 = vmax.f32 %v2871, 0.0
        %v3308 = vmax.f32 %v2873, 0.0
        %v3309 = vmax.f32 %v2984, 0.0
        %v3310 = vmax.f32 %v2986, 0.0
        %v3311 = vmax.f32 %v3097, 0.0
        %v3312 = vmax.f32 %v3099, 0.0
        %v3313 = vmax.f32 %v2312, 0.0
        %v3314 = vmax.f32 %v2314, 0.0
        %v3315 = vmax.f32 %v2425, 0.0
        %v3316 = vmax.f32 %v2427, 0.0
        %v3317 = vmax.f32 %v2538, 0.0
        %v3318 = vmax.f32 %v2540, 0.0
        %v3319 = vmax.f32 %v2651, 0.0
        %v3320 = vmax.f32 %v2653, 0.0
        %v3321 = vmax.f32 %v2764, 0.0
        %v3322 = vmax.f32 %v2766, 0.0
        %v3323 = vmax.f32 %v2877, 0.0
        %v3324 = vmax.f32 %v2879, 0.0
        %v3325 = vmax.f32 %v2990, 0.0
        %v3326 = vmax.f32 %v2992, 0.0
        %v3327 = vmax.f32 %v3103, 0.0
        %v3328 = vmax.f32 %v3105, 0.0
        %v3329 = vmax.f32 %v2316, 0.0
        %v3330 = vmax.f32 %v2318, 0.0
        %v3331 = vmax.f32 %v2429, 0.0
        %v3332 = vmax.f32 %v2431, 0.0
        %v3333 = vmax.f32 %v2542, 0.0
        %v3334 = vmax.f32 %v2544, 0.0
        %v3335 = vmax.f32 %v2655, 0.0
        %v3336 = vmax.f32 %v2657, 0.0
        %v3337 = vmax.f32 %v2768, 0.0
        %v3338 = vmax.f32 %v2770, 0.0
        %v3339 = vmax.f32 %v2881, 0.0
        %v3340 = vmax.f32 %v2883, 0.0
        %v3341 = vmax.f32 %v2994, 0.0
        %v3342 = vmax.f32 %v2996, 0.0
        %v3343 = vmax.f32 %v3107, 0.0
        %v3344 = vmax.f32 %v3109, 0.0
        %v3345 = vmax.f32 %v2322, 0.0
        %v3346 = vmax.f32 %v2324, 0.0
        %v3347 = vmax.f32 %v2435, 0.0
        %v3348 = vmax.f32 %v2437, 0.0
        %v3349 = vmax.f32 %v2548, 0.0
        %v3350 = vmax.f32 %v2550, 0.0
        %v3351 = vmax.f32 %v2661, 0.0
        %v3352 = vmax.f32 %v2663, 0.0
        %v3353 = vmax.f32 %v2774, 0.0
        %v3354 = vmax.f32 %v2776, 0.0
        %v3355 = vmax.f32 %v2887, 0.0
        %v3356 = vmax.f32 %v2889, 0.0
        %v3357 = vmax.f32 %v3000, 0.0
        %v3358 = vmax.f32 %v3002, 0.0
        %v3359 = vmax.f32 %v3113, 0.0
        %v3360 = vmax.f32 %v3115, 0.0
        %v3361 = vmax.f32 %v2326, 0.0
        %v3362 = vmax.f32 %v2328, 0.0
        %v3363 = vmax.f32 %v2439, 0.0
        %v3364 = vmax.f32 %v2441, 0.0
        %v3365 = vmax.f32 %v2552, 0.0
        %v3366 = vmax.f32 %v2554, 0.0
        %v3367 = vmax.f32 %v2665, 0.0
        %v3368 = vmax.f32 %v2667, 0.0
        %v3369 = vmax.f32 %v2778, 0.0
        %v3370 = vmax.f32 %v2780, 0.0
        %v3371 = vmax.f32 %v2891, 0.0
        %v3372 = vmax.f32 %v2893, 0.0
        %v3373 = vmax.f32 %v3004, 0.0
        %v3374 = vmax.f32 %v3006, 0.0
        %v3375 = vmax.f32 %v3117, 0.0
        %v3376 = vmax.f32 %v3119, 0.0
        %v3377 = vpack.c.bf16 %v3137, %v3121
        %v3378 = vpack.c.bf16 %v3138, %v3122
        %v3379 = vpack.c.bf16 %v3139, %v3123
        %v3380 = vpack.c.bf16 %v3140, %v3124
        %v3381 = vpack.c.bf16 %v3141, %v3125
        %v3382 = vpack.c.bf16 %v3142, %v3126
        %v3383 = vpack.c.bf16 %v3143, %v3127
        %v3384 = vpack.c.bf16 %v3144, %v3128
        %v3385 = vpack.c.bf16 %v3145, %v3129
        %v3386 = vpack.c.bf16 %v3146, %v3130
        %v3387 = vpack.c.bf16 %v3147, %v3131
        %v3388 = vpack.c.bf16 %v3148, %v3132
        %v3389 = vpack.c.bf16 %v3149, %v3133
        %v3390 = vpack.c.bf16 %v3150, %v3134
        %v3391 = vpack.c.bf16 %v3151, %v3135
        %v3392 = vpack.c.bf16 %v3152, %v3136
        %v3393 = vpack.c.bf16 %v3169, %v3153
        %v3394 = vpack.c.bf16 %v3170, %v3154
        %v3395 = vpack.c.bf16 %v3171, %v3155
        %v3396 = vpack.c.bf16 %v3172, %v3156
        %v3397 = vpack.c.bf16 %v3173, %v3157
        %v3398 = vpack.c.bf16 %v3174, %v3158
        %v3399 = vpack.c.bf16 %v3175, %v3159
        %v3400 = vpack.c.bf16 %v3176, %v3160
        %v3401 = vpack.c.bf16 %v3177, %v3161
        %v3402 = vpack.c.bf16 %v3178, %v3162
        %v3403 = vpack.c.bf16 %v3179, %v3163
        %v3404 = vpack.c.bf16 %v3180, %v3164
        %v3405 = vpack.c.bf16 %v3181, %v3165
        %v3406 = vpack.c.bf16 %v3182, %v3166
        %v3407 = vpack.c.bf16 %v3183, %v3167
        %v3408 = vpack.c.bf16 %v3184, %v3168
        %v3409 = vpack.c.bf16 %v3201, %v3185
        %v3410 = vpack.c.bf16 %v3202, %v3186
        %v3411 = vpack.c.bf16 %v3203, %v3187
        %v3412 = vpack.c.bf16 %v3204, %v3188
        %v3413 = vpack.c.bf16 %v3205, %v3189
        %v3414 = vpack.c.bf16 %v3206, %v3190
        %v3415 = vpack.c.bf16 %v3207, %v3191
        %v3416 = vpack.c.bf16 %v3208, %v3192
        %v3417 = vpack.c.bf16 %v3209, %v3193
        %v3418 = vpack.c.bf16 %v3210, %v3194
        %v3419 = vpack.c.bf16 %v3211, %v3195
        %v3420 = vpack.c.bf16 %v3212, %v3196
        %v3421 = vpack.c.bf16 %v3213, %v3197
        %v3422 = vpack.c.bf16 %v3214, %v3198
        %v3423 = vpack.c.bf16 %v3215, %v3199
        %v3424 = vpack.c.bf16 %v3216, %v3200
        %v3425 = vpack.c.bf16 %v3233, %v3217
        %v3426 = vpack.c.bf16 %v3234, %v3218
        %v3427 = vpack.c.bf16 %v3235, %v3219
        %v3428 = vpack.c.bf16 %v3236, %v3220
        %v3429 = vpack.c.bf16 %v3237, %v3221
        %v3430 = vpack.c.bf16 %v3238, %v3222
        %v3431 = vpack.c.bf16 %v3239, %v3223
        %v3432 = vpack.c.bf16 %v3240, %v3224
        %v3433 = vpack.c.bf16 %v3241, %v3225
        %v3434 = vpack.c.bf16 %v3242, %v3226
        %v3435 = vpack.c.bf16 %v3243, %v3227
        %v3436 = vpack.c.bf16 %v3244, %v3228
        %v3437 = vpack.c.bf16 %v3245, %v3229
        %v3438 = vpack.c.bf16 %v3246, %v3230
        %v3439 = vpack.c.bf16 %v3247, %v3231
        %v3440 = vpack.c.bf16 %v3248, %v3232
        %v3441 = vpack.c.bf16 %v3265, %v3249
        %v3442 = vpack.c.bf16 %v3266, %v3250
        %v3443 = vpack.c.bf16 %v3267, %v3251
        %v3444 = vpack.c.bf16 %v3268, %v3252
        %v3445 = vpack.c.bf16 %v3269, %v3253
        %v3446 = vpack.c.bf16 %v3270, %v3254
        %v3447 = vpack.c.bf16 %v3271, %v3255
        %v3448 = vpack.c.bf16 %v3272, %v3256
        %v3449 = vpack.c.bf16 %v3273, %v3257
        %v3450 = vpack.c.bf16 %v3274, %v3258
        %v3451 = vpack.c.bf16 %v3275, %v3259
        %v3452 = vpack.c.bf16 %v3276, %v3260
        %v3453 = vpack.c.bf16 %v3277, %v3261
        %v3454 = vpack.c.bf16 %v3278, %v3262
        %v3455 = vpack.c.bf16 %v3279, %v3263
        %v3456 = vpack.c.bf16 %v3280, %v3264
        %v3457 = vpack.c.bf16 %v3297, %v3281
        %v3458 = vpack.c.bf16 %v3298, %v3282
        %v3459 = vpack.c.bf16 %v3299, %v3283
        %v3460 = vpack.c.bf16 %v3300, %v3284
        %v3461 = vpack.c.bf16 %v3301, %v3285
        %v3462 = vpack.c.bf16 %v3302, %v3286
        %v3463 = vpack.c.bf16 %v3303, %v3287
        %v3464 = vpack.c.bf16 %v3304, %v3288
        %v3465 = vpack.c.bf16 %v3305, %v3289
        %v3466 = vpack.c.bf16 %v3306, %v3290
        %v3467 = vpack.c.bf16 %v3307, %v3291
        %v3468 = vpack.c.bf16 %v3308, %v3292
        %v3469 = vpack.c.bf16 %v3309, %v3293
        %v3470 = vpack.c.bf16 %v3310, %v3294
        %v3471 = vpack.c.bf16 %v3311, %v3295
        %v3472 = vpack.c.bf16 %v3312, %v3296
        %v3473 = vpack.c.bf16 %v3329, %v3313
        %v3474 = vpack.c.bf16 %v3330, %v3314
        %v3475 = vpack.c.bf16 %v3331, %v3315
        %v3476 = vpack.c.bf16 %v3332, %v3316
        %v3477 = vpack.c.bf16 %v3333, %v3317
        %v3478 = vpack.c.bf16 %v3334, %v3318
        %v3479 = vpack.c.bf16 %v3335, %v3319
        %v3480 = vpack.c.bf16 %v3336, %v3320
        %v3481 = vpack.c.bf16 %v3337, %v3321
        %v3482 = vpack.c.bf16 %v3338, %v3322
        %v3483 = vpack.c.bf16 %v3339, %v3323
        %v3484 = vpack.c.bf16 %v3340, %v3324
        %v3485 = vpack.c.bf16 %v3341, %v3325
        %v3486 = vpack.c.bf16 %v3342, %v3326
        %v3487 = vpack.c.bf16 %v3343, %v3327
        %v3488 = vpack.c.bf16 %v3344, %v3328
        %v3489 = vpack.c.bf16 %v3361, %v3345
        %v3490 = vpack.c.bf16 %v3362, %v3346
        %v3491 = vpack.c.bf16 %v3363, %v3347
        %v3492 = vpack.c.bf16 %v3364, %v3348
        %v3493 = vpack.c.bf16 %v3365, %v3349
        %v3494 = vpack.c.bf16 %v3366, %v3350
        %v3495 = vpack.c.bf16 %v3367, %v3351
        %v3496 = vpack.c.bf16 %v3368, %v3352
        %v3497 = vpack.c.bf16 %v3369, %v3353
        %v3498 = vpack.c.bf16 %v3370, %v3354
        %v3499 = vpack.c.bf16 %v3371, %v3355
        %v3500 = vpack.c.bf16 %v3372, %v3356
        %v3501 = vpack.c.bf16 %v3373, %v3357
        %v3502 = vpack.c.bf16 %v3374, %v3358
        %v3503 = vpack.c.bf16 %v3375, %v3359
        %v3504 = vpack.c.bf16 %v3376, %v3360
        %v3505 = vld [vmem:[#allocation4] sm:$0xf]
        %v3506 = vld [vmem:[#allocation4 + $0x4] sm:$0xf]
        %v3507 = vld [vmem:[#allocation4 + $0x8] sm:$0xf]
        %v3508 = vld [vmem:[#allocation4 + $0xc] sm:$0xf]
        %v3509 = vld [vmem:[#allocation4 + $0x10] sm:$0xf]
        %v3510 = vld [vmem:[#allocation4 + $0x14] sm:$0xf]
        %v3511 = vld [vmem:[#allocation4 + $0x18] sm:$0xf]
        %v3512 = vld [vmem:[#allocation4 + $0x1c] sm:$0xf]
        %v3513 = vld [vmem:[#allocation4 + $0x20] sm:$0xf]
        %v3514 = vld [vmem:[#allocation4 + $0x24] sm:$0xf]
        %v3515 = vld [vmem:[#allocation4 + $0x28] sm:$0xf]
        %v3516 = vld [vmem:[#allocation4 + $0x2c] sm:$0xf]
        %v3517 = vld [vmem:[#allocation4 + $0x30] sm:$0xf]
        %v3518 = vld [vmem:[#allocation4 + $0x34] sm:$0xf]
        %v3519 = vld [vmem:[#allocation4 + $0x38] sm:$0xf]
        %v3520 = vld [vmem:[#allocation4 + $0x3c] sm:$0xf]
        %v3521 = vld [vmem:[#allocation4 + $0x40] sm:$0xf]
        %v3522 = vld [vmem:[#allocation4 + $0x44] sm:$0xf]
        %v3523 = vld [vmem:[#allocation4 + $0x48] sm:$0xf]
        %v3524 = vld [vmem:[#allocation4 + $0x4c] sm:$0xf]
        %v3525 = vld [vmem:[#allocation4 + $0x50] sm:$0xf]
        %v3526 = vld [vmem:[#allocation4 + $0x54] sm:$0xf]
        %v3527 = vld [vmem:[#allocation4 + $0x58] sm:$0xf]
        %v3528 = vld [vmem:[#allocation4 + $0x5c] sm:$0xf]
        %v3529 = vld [vmem:[#allocation4 + $0x60] sm:$0xf]
        %v3530 = vld [vmem:[#allocation4 + $0x64] sm:$0xf]
        %v3531 = vld [vmem:[#allocation4 + $0x68] sm:$0xf]
        %v3532 = vld [vmem:[#allocation4 + $0x6c] sm:$0xf]
        %v3533 = vld [vmem:[#allocation4 + $0x70] sm:$0xf]
        %v3534 = vld [vmem:[#allocation4 + $0x74] sm:$0xf]
        %v3535 = vld [vmem:[#allocation4 + $0x78] sm:$0xf]
        %v3536 = vld [vmem:[#allocation4 + $0x7c] sm:$0xf]
        %v3537 = vld [vmem:[#allocation4 + $0x80] sm:$0xf]
        %v3538 = vld [vmem:[#allocation4 + $0x84] sm:$0xf]
        %v3539 = vld [vmem:[#allocation4 + $0x88] sm:$0xf]
        %v3540 = vld [vmem:[#allocation4 + $0x8c] sm:$0xf]
        %v3541 = vld [vmem:[#allocation4 + $0x90] sm:$0xf]
        %v3542 = vld [vmem:[#allocation4 + $0x94] sm:$0xf]
        %v3543 = vld [vmem:[#allocation4 + $0x98] sm:$0xf]
        %v3544 = vld [vmem:[#allocation4 + $0x9c] sm:$0xf]
        %v3545 = vld [vmem:[#allocation4 + $0xa0] sm:$0xf]
        %v3546 = vld [vmem:[#allocation4 + $0xa4] sm:$0xf]
        %v3547 = vld [vmem:[#allocation4 + $0xa8] sm:$0xf]
        %v3548 = vld [vmem:[#allocation4 + $0xac] sm:$0xf]
        %v3549 = vld [vmem:[#allocation4 + $0xb0] sm:$0xf]
        %v3550 = vld [vmem:[#allocation4 + $0xb4] sm:$0xf]
        %v3551 = vld [vmem:[#allocation4 + $0xb8] sm:$0xf]
        %v3552 = vld [vmem:[#allocation4 + $0xbc] sm:$0xf]
        %v3553 = vld [vmem:[#allocation4 + $0xc0] sm:$0xf]
        %v3554 = vld [vmem:[#allocation4 + $0xc4] sm:$0xf]
        %v3555 = vld [vmem:[#allocation4 + $0xc8] sm:$0xf]
        %v3556 = vld [vmem:[#allocation4 + $0xcc] sm:$0xf]
        %v3557 = vld [vmem:[#allocation4 + $0xd0] sm:$0xf]
        %v3558 = vld [vmem:[#allocation4 + $0xd4] sm:$0xf]
        %v3559 = vld [vmem:[#allocation4 + $0xd8] sm:$0xf]
        %v3560 = vld [vmem:[#allocation4 + $0xdc] sm:$0xf]
        %v3561 = vld [vmem:[#allocation4 + $0xe0] sm:$0xf]
        %v3562 = vld [vmem:[#allocation4 + $0xe4] sm:$0xf]
        %v3563 = vld [vmem:[#allocation4 + $0xe8] sm:$0xf]
        %v3564 = vld [vmem:[#allocation4 + $0xec] sm:$0xf]
        %v3565 = vld [vmem:[#allocation4 + $0xf0] sm:$0xf]
        %v3566 = vld [vmem:[#allocation4 + $0xf4] sm:$0xf]
        %v3567 = vld [vmem:[#allocation4 + $0xf8] sm:$0xf]
        %v3568 = vld [vmem:[#allocation4 + $0xfc] sm:$0xf]
        %v3569 = vld [vmem:[#allocation4 + $0x100] sm:$0xf]
        %v3570 = vld [vmem:[#allocation4 + $0x104] sm:$0xf]
        %v3571 = vld [vmem:[#allocation4 + $0x108] sm:$0xf]
        %v3572 = vld [vmem:[#allocation4 + $0x10c] sm:$0xf]
        %v3573 = vld [vmem:[#allocation4 + $0x110] sm:$0xf]
        %v3574 = vld [vmem:[#allocation4 + $0x114] sm:$0xf]
        %v3575 = vld [vmem:[#allocation4 + $0x118] sm:$0xf]
        %v3576 = vld [vmem:[#allocation4 + $0x11c] sm:$0xf]
        %v3577 = vld [vmem:[#allocation4 + $0x120] sm:$0xf]
        %v3578 = vld [vmem:[#allocation4 + $0x124] sm:$0xf]
        %v3579 = vld [vmem:[#allocation4 + $0x128] sm:$0xf]
        %v3580 = vld [vmem:[#allocation4 + $0x12c] sm:$0xf]
        %v3581 = vld [vmem:[#allocation4 + $0x130] sm:$0xf]
        %v3582 = vld [vmem:[#allocation4 + $0x134] sm:$0xf]
        %v3583 = vld [vmem:[#allocation4 + $0x138] sm:$0xf]
        %v3584 = vld [vmem:[#allocation4 + $0x13c] sm:$0xf]
        %v3585 = vld [vmem:[#allocation4 + $0x140] sm:$0xf]
        %v3586 = vld [vmem:[#allocation4 + $0x144] sm:$0xf]
        %v3587 = vld [vmem:[#allocation4 + $0x148] sm:$0xf]
        %v3588 = vld [vmem:[#allocation4 + $0x14c] sm:$0xf]
        %v3589 = vld [vmem:[#allocation4 + $0x150] sm:$0xf]
        %v3590 = vld [vmem:[#allocation4 + $0x154] sm:$0xf]
        %v3591 = vld [vmem:[#allocation4 + $0x158] sm:$0xf]
        %v3592 = vld [vmem:[#allocation4 + $0x15c] sm:$0xf]
        %v3593 = vld [vmem:[#allocation4 + $0x160] sm:$0xf]
        %v3594 = vld [vmem:[#allocation4 + $0x164] sm:$0xf]
        %v3595 = vld [vmem:[#allocation4 + $0x168] sm:$0xf]
        %v3596 = vld [vmem:[#allocation4 + $0x16c] sm:$0xf]
        %v3597 = vld [vmem:[#allocation4 + $0x170] sm:$0xf]
        %v3598 = vld [vmem:[#allocation4 + $0x174] sm:$0xf]
        %v3599 = vld [vmem:[#allocation4 + $0x178] sm:$0xf]
        %v3600 = vld [vmem:[#allocation4 + $0x17c] sm:$0xf]
        %v3601 = vld [vmem:[#allocation4 + $0x180] sm:$0xf]
        %v3602 = vld [vmem:[#allocation4 + $0x184] sm:$0xf]
        %v3603 = vld [vmem:[#allocation4 + $0x188] sm:$0xf]
        %v3604 = vld [vmem:[#allocation4 + $0x18c] sm:$0xf]
        %v3605 = vld [vmem:[#allocation4 + $0x190] sm:$0xf]
        %v3606 = vld [vmem:[#allocation4 + $0x194] sm:$0xf]
        %v3607 = vld [vmem:[#allocation4 + $0x198] sm:$0xf]
        %v3608 = vld [vmem:[#allocation4 + $0x19c] sm:$0xf]
        %v3609 = vld [vmem:[#allocation4 + $0x1a0] sm:$0xf]
        %v3610 = vld [vmem:[#allocation4 + $0x1a4] sm:$0xf]
        %v3611 = vld [vmem:[#allocation4 + $0x1a8] sm:$0xf]
        %v3612 = vld [vmem:[#allocation4 + $0x1ac] sm:$0xf]
        %v3613 = vld [vmem:[#allocation4 + $0x1b0] sm:$0xf]
        %v3614 = vld [vmem:[#allocation4 + $0x1b4] sm:$0xf]
        %v3615 = vld [vmem:[#allocation4 + $0x1b8] sm:$0xf]
        %v3616 = vld [vmem:[#allocation4 + $0x1bc] sm:$0xf]
        %v3617 = vld [vmem:[#allocation4 + $0x1c0] sm:$0xf]
        %v3618 = vld [vmem:[#allocation4 + $0x1c4] sm:$0xf]
        %v3619 = vld [vmem:[#allocation4 + $0x1c8] sm:$0xf]
        %v3620 = vld [vmem:[#allocation4 + $0x1cc] sm:$0xf]
        %v3621 = vld [vmem:[#allocation4 + $0x1d0] sm:$0xf]
        %v3622 = vld [vmem:[#allocation4 + $0x1d4] sm:$0xf]
        %v3623 = vld [vmem:[#allocation4 + $0x1d8] sm:$0xf]
        %v3624 = vld [vmem:[#allocation4 + $0x1dc] sm:$0xf]
        %v3625 = vld [vmem:[#allocation4 + $0x1e0] sm:$0xf]
        %v3626 = vld [vmem:[#allocation4 + $0x1e4] sm:$0xf]
        %v3627 = vld [vmem:[#allocation4 + $0x1e8] sm:$0xf]
        %v3628 = vld [vmem:[#allocation4 + $0x1ec] sm:$0xf]
        %v3629 = vld [vmem:[#allocation4 + $0x1f0] sm:$0xf]
        %v3630 = vld [vmem:[#allocation4 + $0x1f4] sm:$0xf]
        %v3631 = vld [vmem:[#allocation4 + $0x1f8] sm:$0xf]
        %v3632 = vld [vmem:[#allocation4 + $0x1fc] sm:$0xf]
        %v3633 = vld [vmem:[#allocation4 + $0x200] sm:$0xf]
        %v3634 = vld [vmem:[#allocation4 + $0x204] sm:$0xf]
        %v3635 = vld [vmem:[#allocation4 + $0x208] sm:$0xf]
        %v3636 = vld [vmem:[#allocation4 + $0x20c] sm:$0xf]
        %v3637 = vld [vmem:[#allocation4 + $0x210] sm:$0xf]
        %v3638 = vld [vmem:[#allocation4 + $0x214] sm:$0xf]
        %v3639 = vld [vmem:[#allocation4 + $0x218] sm:$0xf]
        %v3640 = vld [vmem:[#allocation4 + $0x21c] sm:$0xf]
        %v3641 = vld [vmem:[#allocation4 + $0x220] sm:$0xf]
        %v3642 = vld [vmem:[#allocation4 + $0x224] sm:$0xf]
        %v3643 = vld [vmem:[#allocation4 + $0x228] sm:$0xf]
        %v3644 = vld [vmem:[#allocation4 + $0x22c] sm:$0xf]
        %v3645 = vld [vmem:[#allocation4 + $0x230] sm:$0xf]
        %v3646 = vld [vmem:[#allocation4 + $0x234] sm:$0xf]
        %v3647 = vld [vmem:[#allocation4 + $0x238] sm:$0xf]
        %v3648 = vld [vmem:[#allocation4 + $0x23c] sm:$0xf]
        %v3649 = vld [vmem:[#allocation4 + $0x240] sm:$0xf]
        %v3650 = vld [vmem:[#allocation4 + $0x244] sm:$0xf]
        %v3651 = vld [vmem:[#allocation4 + $0x248] sm:$0xf]
        %v3652 = vld [vmem:[#allocation4 + $0x24c] sm:$0xf]
        %v3653 = vld [vmem:[#allocation4 + $0x250] sm:$0xf]
        %v3654 = vld [vmem:[#allocation4 + $0x254] sm:$0xf]
        %v3655 = vld [vmem:[#allocation4 + $0x258] sm:$0xf]
        %v3656 = vld [vmem:[#allocation4 + $0x25c] sm:$0xf]
        %v3657 = vld [vmem:[#allocation4 + $0x260] sm:$0xf]
        %v3658 = vld [vmem:[#allocation4 + $0x264] sm:$0xf]
        %v3659 = vld [vmem:[#allocation4 + $0x268] sm:$0xf]
        %v3660 = vld [vmem:[#allocation4 + $0x26c] sm:$0xf]
        %v3661 = vld [vmem:[#allocation4 + $0x270] sm:$0xf]
        %v3662 = vld [vmem:[#allocation4 + $0x274] sm:$0xf]
        %v3663 = vld [vmem:[#allocation4 + $0x278] sm:$0xf]
        %v3664 = vld [vmem:[#allocation4 + $0x27c] sm:$0xf]
        %v3665 = vld [vmem:[#allocation4 + $0x280] sm:$0xf]
        %v3666 = vld [vmem:[#allocation4 + $0x284] sm:$0xf]
        %v3667 = vld [vmem:[#allocation4 + $0x288] sm:$0xf]
        %v3668 = vld [vmem:[#allocation4 + $0x28c] sm:$0xf]
        %v3669 = vld [vmem:[#allocation4 + $0x290] sm:$0xf]
        %v3670 = vld [vmem:[#allocation4 + $0x294] sm:$0xf]
        %v3671 = vld [vmem:[#allocation4 + $0x298] sm:$0xf]
        %v3672 = vld [vmem:[#allocation4 + $0x29c] sm:$0xf]
        %v3673 = vld [vmem:[#allocation4 + $0x2a0] sm:$0xf]
        %v3674 = vld [vmem:[#allocation4 + $0x2a4] sm:$0xf]
        %v3675 = vld [vmem:[#allocation4 + $0x2a8] sm:$0xf]
        %v3676 = vld [vmem:[#allocation4 + $0x2ac] sm:$0xf]
        %v3677 = vld [vmem:[#allocation4 + $0x2b0] sm:$0xf]
        %v3678 = vld [vmem:[#allocation4 + $0x2b4] sm:$0xf]
        %v3679 = vld [vmem:[#allocation4 + $0x2b8] sm:$0xf]
        %v3680 = vld [vmem:[#allocation4 + $0x2bc] sm:$0xf]
        %v3681 = vld [vmem:[#allocation4 + $0x2c0] sm:$0xf]
        %v3682 = vld [vmem:[#allocation4 + $0x2c4] sm:$0xf]
        %v3683 = vld [vmem:[#allocation4 + $0x2c8] sm:$0xf]
        %v3684 = vld [vmem:[#allocation4 + $0x2cc] sm:$0xf]
        %v3685 = vld [vmem:[#allocation4 + $0x2d0] sm:$0xf]
        %v3686 = vld [vmem:[#allocation4 + $0x2d4] sm:$0xf]
        %v3687 = vld [vmem:[#allocation4 + $0x2d8] sm:$0xf]
        %v3688 = vld [vmem:[#allocation4 + $0x2dc] sm:$0xf]
        %v3689 = vld [vmem:[#allocation4 + $0x2e0] sm:$0xf]
        %v3690 = vld [vmem:[#allocation4 + $0x2e4] sm:$0xf]
        %v3691 = vld [vmem:[#allocation4 + $0x2e8] sm:$0xf]
        %v3692 = vld [vmem:[#allocation4 + $0x2ec] sm:$0xf]
        %v3693 = vld [vmem:[#allocation4 + $0x2f0] sm:$0xf]
        %v3694 = vld [vmem:[#allocation4 + $0x2f4] sm:$0xf]
        %v3695 = vld [vmem:[#allocation4 + $0x2f8] sm:$0xf]
        %v3696 = vld [vmem:[#allocation4 + $0x2fc] sm:$0xf]
        %v3697 = vld [vmem:[#allocation4 + $0x300] sm:$0xf]
        %v3698 = vld [vmem:[#allocation4 + $0x304] sm:$0xf]
        %v3699 = vld [vmem:[#allocation4 + $0x308] sm:$0xf]
        %v3700 = vld [vmem:[#allocation4 + $0x30c] sm:$0xf]
        %v3701 = vld [vmem:[#allocation4 + $0x310] sm:$0xf]
        %v3702 = vld [vmem:[#allocation4 + $0x314] sm:$0xf]
        %v3703 = vld [vmem:[#allocation4 + $0x318] sm:$0xf]
        %v3704 = vld [vmem:[#allocation4 + $0x31c] sm:$0xf]
        %v3705 = vld [vmem:[#allocation4 + $0x320] sm:$0xf]
        %v3706 = vld [vmem:[#allocation4 + $0x324] sm:$0xf]
        %v3707 = vld [vmem:[#allocation4 + $0x328] sm:$0xf]
        %v3708 = vld [vmem:[#allocation4 + $0x32c] sm:$0xf]
        %v3709 = vld [vmem:[#allocation4 + $0x330] sm:$0xf]
        %v3710 = vld [vmem:[#allocation4 + $0x334] sm:$0xf]
        %v3711 = vld [vmem:[#allocation4 + $0x338] sm:$0xf]
        %v3712 = vld [vmem:[#allocation4 + $0x33c] sm:$0xf]
        %v3713 = vld [vmem:[#allocation4 + $0x340] sm:$0xf]
        %v3714 = vld [vmem:[#allocation4 + $0x344] sm:$0xf]
        %v3715 = vld [vmem:[#allocation4 + $0x348] sm:$0xf]
        %v3716 = vld [vmem:[#allocation4 + $0x34c] sm:$0xf]
        %v3717 = vld [vmem:[#allocation4 + $0x350] sm:$0xf]
        %v3718 = vld [vmem:[#allocation4 + $0x354] sm:$0xf]
        %v3719 = vld [vmem:[#allocation4 + $0x358] sm:$0xf]
        %v3720 = vld [vmem:[#allocation4 + $0x35c] sm:$0xf]
        %v3721 = vld [vmem:[#allocation4 + $0x360] sm:$0xf]
        %v3722 = vld [vmem:[#allocation4 + $0x364] sm:$0xf]
        %v3723 = vld [vmem:[#allocation4 + $0x368] sm:$0xf]
        %v3724 = vld [vmem:[#allocation4 + $0x36c] sm:$0xf]
        %v3725 = vld [vmem:[#allocation4 + $0x370] sm:$0xf]
        %v3726 = vld [vmem:[#allocation4 + $0x374] sm:$0xf]
        %v3727 = vld [vmem:[#allocation4 + $0x378] sm:$0xf]
        %v3728 = vld [vmem:[#allocation4 + $0x37c] sm:$0xf]
        %v3729 = vld [vmem:[#allocation4 + $0x380] sm:$0xf]
        %v3730 = vld [vmem:[#allocation4 + $0x384] sm:$0xf]
        %v3731 = vld [vmem:[#allocation4 + $0x388] sm:$0xf]
        %v3732 = vld [vmem:[#allocation4 + $0x38c] sm:$0xf]
        %v3733 = vld [vmem:[#allocation4 + $0x390] sm:$0xf]
        %v3734 = vld [vmem:[#allocation4 + $0x394] sm:$0xf]
        %v3735 = vld [vmem:[#allocation4 + $0x398] sm:$0xf]
        %v3736 = vld [vmem:[#allocation4 + $0x39c] sm:$0xf]
        %v3737 = vld [vmem:[#allocation4 + $0x3a0] sm:$0xf]
        %v3738 = vld [vmem:[#allocation4 + $0x3a4] sm:$0xf]
        %v3739 = vld [vmem:[#allocation4 + $0x3a8] sm:$0xf]
        %v3740 = vld [vmem:[#allocation4 + $0x3ac] sm:$0xf]
        %v3741 = vld [vmem:[#allocation4 + $0x3b0] sm:$0xf]
        %v3742 = vld [vmem:[#allocation4 + $0x3b4] sm:$0xf]
        %v3743 = vld [vmem:[#allocation4 + $0x3b8] sm:$0xf]
        %v3744 = vld [vmem:[#allocation4 + $0x3bc] sm:$0xf]
        %v3745 = vld [vmem:[#allocation4 + $0x3c0] sm:$0xf]
        %v3746 = vld [vmem:[#allocation4 + $0x3c4] sm:$0xf]
        %v3747 = vld [vmem:[#allocation4 + $0x3c8] sm:$0xf]
        %v3748 = vld [vmem:[#allocation4 + $0x3cc] sm:$0xf]
        %v3749 = vld [vmem:[#allocation4 + $0x3d0] sm:$0xf]
        %v3750 = vld [vmem:[#allocation4 + $0x3d4] sm:$0xf]
        %v3751 = vld [vmem:[#allocation4 + $0x3d8] sm:$0xf]
        %v3752 = vld [vmem:[#allocation4 + $0x3dc] sm:$0xf]
        %v3753 = vld [vmem:[#allocation4 + $0x3e0] sm:$0xf]
        %v3754 = vld [vmem:[#allocation4 + $0x3e4] sm:$0xf]
        %v3755 = vld [vmem:[#allocation4 + $0x3e8] sm:$0xf]
        %v3756 = vld [vmem:[#allocation4 + $0x3ec] sm:$0xf]
        %v3757 = vld [vmem:[#allocation4 + $0x3f0] sm:$0xf]
        %v3758 = vld [vmem:[#allocation4 + $0x3f4] sm:$0xf]
        %v3759 = vld [vmem:[#allocation4 + $0x3f8] sm:$0xf]
        %v3760 = vld [vmem:[#allocation4 + $0x3fc] sm:$0xf]
        %v3761 = vlaneseq
        %v3762 = vshrl.u32 %v3761, 7
        %v3763 = vsub.s32 7, %v3762
        %v3764 = vrot.slane %v394, %v3763
        %v4021 = vunpack.c.l.b16 %v3505
        %v4022 = vunpack.c.l.b16 %v3506
        %v4023 = vunpack.c.l.b16 %v3507
        %v4024 = vunpack.c.l.b16 %v3508
        %v4025 = vunpack.c.l.b16 %v3509
        %v4026 = vunpack.c.l.b16 %v3510
        %v4027 = vunpack.c.l.b16 %v3511
        %v4028 = vunpack.c.l.b16 %v3512
        %v4029 = vunpack.c.l.b16 %v3513
        %v4030 = vunpack.c.l.b16 %v3514
        %v4031 = vunpack.c.l.b16 %v3515
        %v4032 = vunpack.c.l.b16 %v3516
        %v4033 = vunpack.c.l.b16 %v3517
        %v4034 = vunpack.c.l.b16 %v3518
        %v4035 = vunpack.c.l.b16 %v3519
        %v4036 = vunpack.c.l.b16 %v3520
        %v4037 = vunpack.c.l.b16 %v3521
        %v4038 = vunpack.c.l.b16 %v3522
        %v4039 = vunpack.c.l.b16 %v3523
        %v4040 = vunpack.c.l.b16 %v3524
        %v4041 = vunpack.c.l.b16 %v3525
        %v4042 = vunpack.c.l.b16 %v3526
        %v4043 = vunpack.c.l.b16 %v3527
        %v4044 = vunpack.c.l.b16 %v3528
        %v4045 = vunpack.c.l.b16 %v3529
        %v4046 = vunpack.c.l.b16 %v3530
        %v4047 = vunpack.c.l.b16 %v3531
        %v4048 = vunpack.c.l.b16 %v3532
        %v4049 = vunpack.c.l.b16 %v3533
        %v4050 = vunpack.c.l.b16 %v3534
        %v4051 = vunpack.c.l.b16 %v3535
        %v4052 = vunpack.c.l.b16 %v3536
        %v4053 = vunpack.c.l.b16 %v3537
        %v4054 = vunpack.c.l.b16 %v3538
        %v4055 = vunpack.c.l.b16 %v3539
        %v4056 = vunpack.c.l.b16 %v3540
        %v4057 = vunpack.c.l.b16 %v3541
        %v4058 = vunpack.c.l.b16 %v3542
        %v4059 = vunpack.c.l.b16 %v3543
        %v4060 = vunpack.c.l.b16 %v3544
        %v4061 = vunpack.c.l.b16 %v3545
        %v4062 = vunpack.c.l.b16 %v3546
        %v4063 = vunpack.c.l.b16 %v3547
        %v4064 = vunpack.c.l.b16 %v3548
        %v4065 = vunpack.c.l.b16 %v3549
        %v4066 = vunpack.c.l.b16 %v3550
        %v4067 = vunpack.c.l.b16 %v3551
        %v4068 = vunpack.c.l.b16 %v3552
        %v4069 = vunpack.c.l.b16 %v3553
        %v4070 = vunpack.c.l.b16 %v3554
        %v4071 = vunpack.c.l.b16 %v3555
        %v4072 = vunpack.c.l.b16 %v3556
        %v4073 = vunpack.c.l.b16 %v3557
        %v4074 = vunpack.c.l.b16 %v3558
        %v4075 = vunpack.c.l.b16 %v3559
        %v4076 = vunpack.c.l.b16 %v3560
        %v4077 = vunpack.c.l.b16 %v3561
        %v4078 = vunpack.c.l.b16 %v3562
        %v4079 = vunpack.c.l.b16 %v3563
        %v4080 = vunpack.c.l.b16 %v3564
        %v4081 = vunpack.c.l.b16 %v3565
        %v4082 = vunpack.c.l.b16 %v3566
        %v4083 = vunpack.c.l.b16 %v3567
        %v4084 = vunpack.c.l.b16 %v3568
        %v4085 = vunpack.c.l.b16 %v3569
        %v4086 = vunpack.c.l.b16 %v3570
        %v4087 = vunpack.c.l.b16 %v3571
        %v4088 = vunpack.c.l.b16 %v3572
        %v4089 = vunpack.c.l.b16 %v3573
        %v4090 = vunpack.c.l.b16 %v3574
        %v4091 = vunpack.c.l.b16 %v3575
        %v4092 = vunpack.c.l.b16 %v3576
        %v4093 = vunpack.c.l.b16 %v3577
        %v4094 = vunpack.c.l.b16 %v3578
        %v4095 = vunpack.c.l.b16 %v3579
        %v4096 = vunpack.c.l.b16 %v3580
        %v4097 = vunpack.c.l.b16 %v3581
        %v4098 = vunpack.c.l.b16 %v3582
        %v4099 = vunpack.c.l.b16 %v3583
        %v4100 = vunpack.c.l.b16 %v3584
        %v4101 = vunpack.c.l.b16 %v3585
        %v4102 = vunpack.c.l.b16 %v3586
        %v4103 = vunpack.c.l.b16 %v3587
        %v4104 = vunpack.c.l.b16 %v3588
        %v4105 = vunpack.c.l.b16 %v3589
        %v4106 = vunpack.c.l.b16 %v3590
        %v4107 = vunpack.c.l.b16 %v3591
        %v4108 = vunpack.c.l.b16 %v3592
        %v4109 = vunpack.c.l.b16 %v3593
        %v4110 = vunpack.c.l.b16 %v3594
        %v4111 = vunpack.c.l.b16 %v3595
        %v4112 = vunpack.c.l.b16 %v3596
        %v4113 = vunpack.c.l.b16 %v3597
        %v4114 = vunpack.c.l.b16 %v3598
        %v4115 = vunpack.c.l.b16 %v3599
        %v4116 = vunpack.c.l.b16 %v3600
        %v4117 = vunpack.c.l.b16 %v3601
        %v4118 = vunpack.c.l.b16 %v3602
        %v4119 = vunpack.c.l.b16 %v3603
        %v4120 = vunpack.c.l.b16 %v3604
        %v4121 = vunpack.c.l.b16 %v3605
        %v4122 = vunpack.c.l.b16 %v3606
        %v4123 = vunpack.c.l.b16 %v3607
        %v4124 = vunpack.c.l.b16 %v3608
        %v4125 = vunpack.c.l.b16 %v3609
        %v4126 = vunpack.c.l.b16 %v3610
        %v4127 = vunpack.c.l.b16 %v3611
        %v4128 = vunpack.c.l.b16 %v3612
        %v4129 = vunpack.c.l.b16 %v3613
        %v4130 = vunpack.c.l.b16 %v3614
        %v4131 = vunpack.c.l.b16 %v3615
        %v4132 = vunpack.c.l.b16 %v3616
        %v4133 = vunpack.c.l.b16 %v3617
        %v4134 = vunpack.c.l.b16 %v3618
        %v4135 = vunpack.c.l.b16 %v3619
        %v4136 = vunpack.c.l.b16 %v3620
        %v4137 = vunpack.c.l.b16 %v3621
        %v4138 = vunpack.c.l.b16 %v3622
        %v4139 = vunpack.c.l.b16 %v3623
        %v4140 = vunpack.c.l.b16 %v3624
        %v4141 = vunpack.c.l.b16 %v3625
        %v4142 = vunpack.c.l.b16 %v3626
        %v4143 = vunpack.c.l.b16 %v3627
        %v4144 = vunpack.c.l.b16 %v3628
        %v4145 = vunpack.c.l.b16 %v3629
        %v4146 = vunpack.c.l.b16 %v3630
        %v4147 = vunpack.c.l.b16 %v3631
        %v4148 = vunpack.c.l.b16 %v3632
        %v4149 = vunpack.c.l.b16 %v3633
        %v4150 = vunpack.c.l.b16 %v3634
        %v4151 = vunpack.c.l.b16 %v3635
        %v4152 = vunpack.c.l.b16 %v3636
        %v4153 = vunpack.c.l.b16 %v3637
        %v4154 = vunpack.c.l.b16 %v3638
        %v4155 = vunpack.c.l.b16 %v3639
        %v4156 = vunpack.c.l.b16 %v3640
        %v4157 = vunpack.c.l.b16 %v3641
        %v4158 = vunpack.c.l.b16 %v3642
        %v4159 = vunpack.c.l.b16 %v3643
        %v4160 = vunpack.c.l.b16 %v3644
        %v4161 = vunpack.c.l.b16 %v3645
        %v4162 = vunpack.c.l.b16 %v3646
        %v4163 = vunpack.c.l.b16 %v3647
        %v4164 = vunpack.c.l.b16 %v3648
        %v4165 = vunpack.c.l.b16 %v3649
        %v4166 = vunpack.c.l.b16 %v3650
        %v4167 = vunpack.c.l.b16 %v3651
        %v4168 = vunpack.c.l.b16 %v3652
        %v4169 = vunpack.c.l.b16 %v3653
        %v4170 = vunpack.c.l.b16 %v3654
        %v4171 = vunpack.c.l.b16 %v3655
        %v4172 = vunpack.c.l.b16 %v3656
        %v4173 = vunpack.c.l.b16 %v3657
        %v4174 = vunpack.c.l.b16 %v3658
        %v4175 = vunpack.c.l.b16 %v3659
        %v4176 = vunpack.c.l.b16 %v3660
        %v4177 = vunpack.c.l.b16 %v3661
        %v4178 = vunpack.c.l.b16 %v3662
        %v4179 = vunpack.c.l.b16 %v3663
        %v4180 = vunpack.c.l.b16 %v3664
        %v4181 = vunpack.c.l.b16 %v3665
        %v4182 = vunpack.c.l.b16 %v3666
        %v4183 = vunpack.c.l.b16 %v3667
        %v4184 = vunpack.c.l.b16 %v3668
        %v4185 = vunpack.c.l.b16 %v3669
        %v4186 = vunpack.c.l.b16 %v3670
        %v4187 = vunpack.c.l.b16 %v3671
        %v4188 = vunpack.c.l.b16 %v3672
        %v4189 = vunpack.c.l.b16 %v3673
        %v4190 = vunpack.c.l.b16 %v3674
        %v4191 = vunpack.c.l.b16 %v3675
        %v4192 = vunpack.c.l.b16 %v3676
        %v4193 = vunpack.c.l.b16 %v3677
        %v4194 = vunpack.c.l.b16 %v3678
        %v4195 = vunpack.c.l.b16 %v3679
        %v4196 = vunpack.c.l.b16 %v3680
        %v4197 = vunpack.c.l.b16 %v3681
        %v4198 = vunpack.c.l.b16 %v3682
        %v4199 = vunpack.c.l.b16 %v3683
        %v4200 = vunpack.c.l.b16 %v3684
        %v4201 = vunpack.c.l.b16 %v3685
        %v4202 = vunpack.c.l.b16 %v3686
        %v4203 = vunpack.c.l.b16 %v3687
        %v4204 = vunpack.c.l.b16 %v3688
        %v4205 = vunpack.c.l.b16 %v3689
        %v4206 = vunpack.c.l.b16 %v3690
        %v4207 = vunpack.c.l.b16 %v3691
        %v4208 = vunpack.c.l.b16 %v3692
        %v4209 = vunpack.c.l.b16 %v3693
        %v4210 = vunpack.c.l.b16 %v3694
        %v4211 = vunpack.c.l.b16 %v3695
        %v4212 = vunpack.c.l.b16 %v3696
        %v4213 = vunpack.c.l.b16 %v3697
        %v4214 = vunpack.c.l.b16 %v3698
        %v4215 = vunpack.c.l.b16 %v3699
        %v4216 = vunpack.c.l.b16 %v3700
        %v4217 = vunpack.c.l.b16 %v3701
        %v4218 = vunpack.c.l.b16 %v3702
        %v4219 = vunpack.c.l.b16 %v3703
        %v4220 = vunpack.c.l.b16 %v3704
        %v4221 = vunpack.c.l.b16 %v3705
        %v4222 = vunpack.c.l.b16 %v3706
        %v4223 = vunpack.c.l.b16 %v3707
        %v4224 = vunpack.c.l.b16 %v3708
        %v4225 = vunpack.c.l.b16 %v3709
        %v4226 = vunpack.c.l.b16 %v3710
        %v4227 = vunpack.c.l.b16 %v3711
        %v4228 = vunpack.c.l.b16 %v3712
        %v4229 = vunpack.c.l.b16 %v3713
        %v4230 = vunpack.c.l.b16 %v3714
        %v4231 = vunpack.c.l.b16 %v3715
        %v4232 = vunpack.c.l.b16 %v3716
        %v4233 = vunpack.c.l.b16 %v3717
        %v4234 = vunpack.c.l.b16 %v3718
        %v4235 = vunpack.c.l.b16 %v3719
        %v4236 = vunpack.c.l.b16 %v3720
        %v4237 = vunpack.c.l.b16 %v3721
        %v4238 = vunpack.c.l.b16 %v3722
        %v4239 = vunpack.c.l.b16 %v3723
        %v4240 = vunpack.c.l.b16 %v3724
        %v4241 = vunpack.c.l.b16 %v3725
        %v4242 = vunpack.c.l.b16 %v3726
        %v4243 = vunpack.c.l.b16 %v3727
        %v4244 = vunpack.c.l.b16 %v3728
        %v4245 = vunpack.c.l.b16 %v3729
        %v4246 = vunpack.c.l.b16 %v3730
        %v4247 = vunpack.c.l.b16 %v3731
        %v4248 = vunpack.c.l.b16 %v3732
        %v4249 = vunpack.c.l.b16 %v3733
        %v4250 = vunpack.c.l.b16 %v3734
        %v4251 = vunpack.c.l.b16 %v3735
        %v4252 = vunpack.c.l.b16 %v3736
        %v4253 = vunpack.c.l.b16 %v3737
        %v4254 = vunpack.c.l.b16 %v3738
        %v4255 = vunpack.c.l.b16 %v3739
        %v4256 = vunpack.c.l.b16 %v3740
        %v4257 = vunpack.c.l.b16 %v3741
        %v4258 = vunpack.c.l.b16 %v3742
        %v4259 = vunpack.c.l.b16 %v3743
        %v4260 = vunpack.c.l.b16 %v3744
        %v4261 = vunpack.c.l.b16 %v3745
        %v4262 = vunpack.c.l.b16 %v3746
        %v4263 = vunpack.c.l.b16 %v3747
        %v4264 = vunpack.c.l.b16 %v3748
        %v4265 = vunpack.c.l.b16 %v3749
        %v4266 = vunpack.c.l.b16 %v3750
        %v4267 = vunpack.c.l.b16 %v3751
        %v4268 = vunpack.c.l.b16 %v3752
        %v4269 = vunpack.c.l.b16 %v3753
        %v4270 = vunpack.c.l.b16 %v3754
        %v4271 = vunpack.c.l.b16 %v3755
        %v4272 = vunpack.c.l.b16 %v3756
        %v4273 = vunpack.c.l.b16 %v3757
        %v4274 = vunpack.c.l.b16 %v3758
        %v4275 = vunpack.c.l.b16 %v3759
        %v4276 = vunpack.c.l.b16 %v3760
        %v4277 = vpack.c.b16 %v4022, %v4021
        %v4278 = vpack.c.b16 %v4024, %v4023
        %v4279 = vpack.c.b16 %v4026, %v4025
        %v4280 = vpack.c.b16 %v4028, %v4027
        %v4281 = vpack.c.b16 %v4030, %v4029
        %v4282 = vpack.c.b16 %v4032, %v4031
        %v4283 = vpack.c.b16 %v4034, %v4033
        %v4284 = vpack.c.b16 %v4036, %v4035
        %v4285 = vpack.c.b16 %v4038, %v4037
        %v4286 = vpack.c.b16 %v4040, %v4039
        %v4287 = vpack.c.b16 %v4042, %v4041
        %v4288 = vpack.c.b16 %v4044, %v4043
        %v4289 = vpack.c.b16 %v4046, %v4045
        %v4290 = vpack.c.b16 %v4048, %v4047
        %v4291 = vpack.c.b16 %v4050, %v4049
        %v4292 = vpack.c.b16 %v4052, %v4051
        %v4293 = vpack.c.b16 %v4054, %v4053
        %v4294 = vpack.c.b16 %v4056, %v4055
        %v4295 = vpack.c.b16 %v4058, %v4057
        %v4296 = vpack.c.b16 %v4060, %v4059
        %v4297 = vpack.c.b16 %v4062, %v4061
        %v4298 = vpack.c.b16 %v4064, %v4063
        %v4299 = vpack.c.b16 %v4066, %v4065
        %v4300 = vpack.c.b16 %v4068, %v4067
        %v4301 = vpack.c.b16 %v4070, %v4069
        %v4302 = vpack.c.b16 %v4072, %v4071
        %v4303 = vpack.c.b16 %v4074, %v4073
        %v4304 = vpack.c.b16 %v4076, %v4075
        %v4305 = vpack.c.b16 %v4078, %v4077
        %v4306 = vpack.c.b16 %v4080, %v4079
        %v4307 = vpack.c.b16 %v4082, %v4081
        %v4308 = vpack.c.b16 %v4084, %v4083
        %v4309 = vpack.c.b16 %v4086, %v4085
        %v4310 = vpack.c.b16 %v4088, %v4087
        %v4311 = vpack.c.b16 %v4090, %v4089
        %v4312 = vpack.c.b16 %v4092, %v4091
        %v4313 = vpack.c.b16 %v4094, %v4093
        %v4314 = vpack.c.b16 %v4096, %v4095
        %v4315 = vpack.c.b16 %v4098, %v4097
        %v4316 = vpack.c.b16 %v4100, %v4099
        %v4317 = vpack.c.b16 %v4102, %v4101
        %v4318 = vpack.c.b16 %v4104, %v4103
        %v4319 = vpack.c.b16 %v4106, %v4105
        %v4320 = vpack.c.b16 %v4108, %v4107
        %v4321 = vpack.c.b16 %v4110, %v4109
        %v4322 = vpack.c.b16 %v4112, %v4111
        %v4323 = vpack.c.b16 %v4114, %v4113
        %v4324 = vpack.c.b16 %v4116, %v4115
        %v4325 = vpack.c.b16 %v4118, %v4117
        %v4326 = vpack.c.b16 %v4120, %v4119
        %v4327 = vpack.c.b16 %v4122, %v4121
        %v4328 = vpack.c.b16 %v4124, %v4123
        %v4329 = vpack.c.b16 %v4126, %v4125
        %v4330 = vpack.c.b16 %v4128, %v4127
        %v4331 = vpack.c.b16 %v4130, %v4129
        %v4332 = vpack.c.b16 %v4132, %v4131
        %v4333 = vpack.c.b16 %v4134, %v4133
        %v4334 = vpack.c.b16 %v4136, %v4135
        %v4335 = vpack.c.b16 %v4138, %v4137
        %v4336 = vpack.c.b16 %v4140, %v4139
        %v4337 = vpack.c.b16 %v4142, %v4141
        %v4338 = vpack.c.b16 %v4144, %v4143
        %v4339 = vpack.c.b16 %v4146, %v4145
        %v4340 = vpack.c.b16 %v4148, %v4147
        %v4341 = vpack.c.b16 %v4150, %v4149
        %v4342 = vpack.c.b16 %v4152, %v4151
        %v4343 = vpack.c.b16 %v4154, %v4153
        %v4344 = vpack.c.b16 %v4156, %v4155
        %v4345 = vpack.c.b16 %v4158, %v4157
        %v4346 = vpack.c.b16 %v4160, %v4159
        %v4347 = vpack.c.b16 %v4162, %v4161
        %v4348 = vpack.c.b16 %v4164, %v4163
        %v4349 = vpack.c.b16 %v4166, %v4165
        %v4350 = vpack.c.b16 %v4168, %v4167
        %v4351 = vpack.c.b16 %v4170, %v4169
        %v4352 = vpack.c.b16 %v4172, %v4171
        %v4353 = vpack.c.b16 %v4174, %v4173
        %v4354 = vpack.c.b16 %v4176, %v4175
        %v4355 = vpack.c.b16 %v4178, %v4177
        %v4356 = vpack.c.b16 %v4180, %v4179
        %v4357 = vpack.c.b16 %v4182, %v4181
        %v4358 = vpack.c.b16 %v4184, %v4183
        %v4359 = vpack.c.b16 %v4186, %v4185
        %v4360 = vpack.c.b16 %v4188, %v4187
        %v4361 = vpack.c.b16 %v4190, %v4189
        %v4362 = vpack.c.b16 %v4192, %v4191
        %v4363 = vpack.c.b16 %v4194, %v4193
        %v4364 = vpack.c.b16 %v4196, %v4195
        %v4365 = vpack.c.b16 %v4198, %v4197
        %v4366 = vpack.c.b16 %v4200, %v4199
        %v4367 = vpack.c.b16 %v4202, %v4201
        %v4368 = vpack.c.b16 %v4204, %v4203
        %v4369 = vpack.c.b16 %v4206, %v4205
        %v4370 = vpack.c.b16 %v4208, %v4207
        %v4371 = vpack.c.b16 %v4210, %v4209
        %v4372 = vpack.c.b16 %v4212, %v4211
        %v4373 = vpack.c.b16 %v4214, %v4213
        %v4374 = vpack.c.b16 %v4216, %v4215
        %v4375 = vpack.c.b16 %v4218, %v4217
        %v4376 = vpack.c.b16 %v4220, %v4219
        %v4377 = vpack.c.b16 %v4222, %v4221
        %v4378 = vpack.c.b16 %v4224, %v4223
        %v4379 = vpack.c.b16 %v4226, %v4225
        %v4380 = vpack.c.b16 %v4228, %v4227
        %v4381 = vpack.c.b16 %v4230, %v4229
        %v4382 = vpack.c.b16 %v4232, %v4231
        %v4383 = vpack.c.b16 %v4234, %v4233
        %v4384 = vpack.c.b16 %v4236, %v4235
        %v4385 = vpack.c.b16 %v4238, %v4237
        %v4386 = vpack.c.b16 %v4240, %v4239
        %v4387 = vpack.c.b16 %v4242, %v4241
        %v4388 = vpack.c.b16 %v4244, %v4243
        %v4389 = vpack.c.b16 %v4246, %v4245
        %v4390 = vpack.c.b16 %v4248, %v4247
        %v4391 = vpack.c.b16 %v4250, %v4249
        %v4392 = vpack.c.b16 %v4252, %v4251
        %v4393 = vpack.c.b16 %v4254, %v4253
        %v4394 = vpack.c.b16 %v4256, %v4255
        %v4395 = vpack.c.b16 %v4258, %v4257
        %v4396 = vpack.c.b16 %v4260, %v4259
        %v4397 = vpack.c.b16 %v4262, %v4261
        %v4398 = vpack.c.b16 %v4264, %v4263
        %v4399 = vpack.c.b16 %v4266, %v4265
        %v4400 = vpack.c.b16 %v4268, %v4267
        %v4401 = vpack.c.b16 %v4270, %v4269
        %v4402 = vpack.c.b16 %v4272, %v4271
        %v4403 = vpack.c.b16 %v4274, %v4273
        %v4404 = vpack.c.b16 %v4276, %v4275
        %4533 = vmatprep.subr.bf16.mxu0 0
        %4534 = vmatpush1.bf16.msra.mxu0 %v4277
        %4535 = vmatprep.subr.bf16.mxu0 0
        %4536 = vmatpush1.bf16.msra.mxu0 %v4278
        %4537 = vmatprep.subr.bf16.mxu0 0
        %4538 = vmatpush1.bf16.msra.mxu0 %v4279
        %4539 = vmatprep.subr.bf16.mxu0 0
        %4540 = vmatpush1.bf16.msra.mxu0 %v4280
        %4541 = vmatprep.subr.bf16.mxu0 0
        %4542 = vmatpush1.bf16.msra.mxu0 %v4281
        %4543 = vmatprep.subr.bf16.mxu0 0
        %4544 = vmatpush1.bf16.msra.mxu0 %v4282
        %4545 = vmatprep.subr.bf16.mxu0 0
        %4546 = vmatpush1.bf16.msra.mxu0 %v4283
        %4547 = vmatprep.subr.bf16.mxu0 0
        %4548 = vmatpush1.bf16.msra.mxu0 %v4284
        %4549 = vmatprep.subr.bf16.mxu0 0
        %4550 = vmatpush1.bf16.msra.mxu0 %v4285
        %4551 = vmatprep.subr.bf16.mxu0 0
        %4552 = vmatpush1.bf16.msra.mxu0 %v4286
        %4553 = vmatprep.subr.bf16.mxu0 0
        %4554 = vmatpush1.bf16.msra.mxu0 %v4287
        %4555 = vmatprep.subr.bf16.mxu0 0
        %4556 = vmatpush1.bf16.msra.mxu0 %v4288
        %4557 = vmatprep.subr.bf16.mxu0 0
        %4558 = vmatpush1.bf16.msra.mxu0 %v4289
        %4559 = vmatprep.subr.bf16.mxu0 0
        %4560 = vmatpush1.bf16.msra.mxu0 %v4290
        %4561 = vmatprep.subr.bf16.mxu0 0
        %4562 = vmatpush1.bf16.msra.mxu0 %v4291
        %4563 = vmatprep.subr.bf16.mxu0 0
        %4564 = vmatpush1.bf16.msra.mxu0 %v4292
        %4565 = vmatprep.mubr.bf16.mxu0 %v3378
        %4566 = vmatmul.mubr.bf16.gmra.mrb[0].mxu0 %v3377
        %v4567 = vpop.f32.mrb[0].mxu0
        %v4568 = vadd.f32 %v3764, %v4567
        %v4569 = vpop.f32.mrb[0].mxu0
        %v4570 = vpop.f32.mrb[0].mxu0
        %v4571 = vadd.f32 %v3764, %v4570
        %v4572 = vpop.f32.mrb[0].mxu0
        %4573 = vmatprep.mubr.bf16.mxu0 %v3394
        %4574 = vmatmul.mubr.bf16.gmra.mrb[0].mxu0 %v3393
        %v4575 = vpop.f32.mrb[0].mxu0
        %v4576 = vadd.f32 %v3764, %v4575
        %v4577 = vpop.f32.mrb[0].mxu0
        %v4578 = vpop.f32.mrb[0].mxu0
        %v4579 = vadd.f32 %v3764, %v4578
        %v4580 = vpop.f32.mrb[0].mxu0
        %4581 = vmatprep.mubr.bf16.mxu0 %v3410
        %4582 = vmatmul.mubr.bf16.gmra.mrb[0].mxu0 %v3409
        %v4583 = vpop.f32.mrb[0].mxu0
        %v4584 = vadd.f32 %v3764, %v4583
        %v4585 = vpop.f32.mrb[0].mxu0
        %v4586 = vpop.f32.mrb[0].mxu0
        %v4587 = vadd.f32 %v3764, %v4586
        %v4588 = vpop.f32.mrb[0].mxu0
        %4589 = vmatprep.mubr.bf16.mxu0 %v3426
        %4590 = vmatmul.mubr.bf16.gmra.mrb[0].mxu0 %v3425
        %v4591 = vpop.f32.mrb[0].mxu0
        %v4592 = vadd.f32 %v3764, %v4591
        %v4593 = vpop.f32.mrb[0].mxu0
        %v4594 = vpop.f32.mrb[0].mxu0
        %v4595 = vadd.f32 %v3764, %v4594
        %v4596 = vpop.f32.mrb[0].mxu0
        %4597 = vmatprep.mubr.bf16.mxu0 %v3442
        %4598 = vmatmul.mubr.bf16.gmra.mrb[0].mxu0 %v3441
        %v4599 = vpop.f32.mrb[0].mxu0
        %v4600 = vadd.f32 %v3764, %v4599
        %v4601 = vpop.f32.mrb[0].mxu0
        %v4602 = vpop.f32.mrb[0].mxu0
        %v4603 = vadd.f32 %v3764, %v4602
        %v4604 = vpop.f32.mrb[0].mxu0
        %4605 = vmatprep.mubr.bf16.mxu0 %v3458
        %4606 = vmatmul.mubr.bf16.gmra.mrb[0].mxu0 %v3457
        %v4607 = vpop.f32.mrb[0].mxu0
        %v4608 = vadd.f32 %v3764, %v4607
        %v4609 = vpop.f32.mrb[0].mxu0
        %v4610 = vpop.f32.mrb[0].mxu0
        %v4611 = vadd.f32 %v3764, %v4610
        %v4612 = vpop.f32.mrb[0].mxu0
        %4613 = vmatprep.mubr.bf16.mxu0 %v3474
        %4614 = vmatmul.mubr.bf16.gmra.mrb[0].mxu0 %v3473
        %v4615 = vpop.f32.mrb[0].mxu0
        %v4616 = vadd.f32 %v3764, %v4615
        %v4617 = vpop.f32.mrb[0].mxu0
        %v4618 = vpop.f32.mrb[0].mxu0
        %v4619 = vadd.f32 %v3764, %v4618
        %v4620 = vpop.f32.mrb[0].mxu0
        %4621 = vmatprep.mubr.bf16.mxu0 %v3490
        %4622 = vmatmul.mubr.bf16.gmra.mrb[0].mxu0 %v3489
        %v4623 = vpop.f32.mrb[0].mxu0
        %v4624 = vadd.f32 %v3764, %v4623
        %v4625 = vpop.f32.mrb[0].mxu0
        %v4626 = vpop.f32.mrb[0].mxu0
        %v4627 = vadd.f32 %v3764, %v4626
        %v4628 = vpop.f32.mrb[0].mxu0
        %4629 = vdwg.mxu0
        %4630 = vmatprep.subr.bf16.mxu0 0
        %4631 = vmatpush1.bf16.msra.mxu0 %v4293
        %4632 = vmatprep.subr.bf16.mxu0 0
        %4633 = vmatpush1.bf16.msra.mxu0 %v4294
        %4634 = vmatprep.subr.bf16.mxu0 0
        %4635 = vmatpush1.bf16.msra.mxu0 %v4295
        %4636 = vmatprep.subr.bf16.mxu0 0
        %4637 = vmatpush1.bf16.msra.mxu0 %v4296
        %4638 = vmatprep.subr.bf16.mxu0 0
        %4639 = vmatpush1.bf16.msra.mxu0 %v4297
        %4640 = vmatprep.subr.bf16.mxu0 0
        %4641 = vmatpush1.bf16.msra.mxu0 %v4298
        %4642 = vmatprep.subr.bf16.mxu0 0
        %4643 = vmatpush1.bf16.msra.mxu0 %v4299
        %4644 = vmatprep.subr.bf16.mxu0 0
        %4645 = vmatpush1.bf16.msra.mxu0 %v4300
        %4646 = vmatprep.subr.bf16.mxu0 0
        %4647 = vmatpush1.bf16.msra.mxu0 %v4301
        %4648 = vmatprep.subr.bf16.mxu0 0
        %4649 = vmatpush1.bf16.msra.mxu0 %v4302
        %4650 = vmatprep.subr.bf16.mxu0 0
        %4651 = vmatpush1.bf16.msra.mxu0 %v4303
        %4652 = vmatprep.subr.bf16.mxu0 0
        %4653 = vmatpush1.bf16.msra.mxu0 %v4304
        %4654 = vmatprep.subr.bf16.mxu0 0
        %4655 = vmatpush1.bf16.msra.mxu0 %v4305
        %4656 = vmatprep.subr.bf16.mxu0 0
        %4657 = vmatpush1.bf16.msra.mxu0 %v4306
        %4658 = vmatprep.subr.bf16.mxu0 0
        %4659 = vmatpush1.bf16.msra.mxu0 %v4307
        %4660 = vmatprep.subr.bf16.mxu0 0
        %4661 = vmatpush1.bf16.msra.mxu0 %v4308
        %4662 = vmatprep.mubr.bf16.mxu0 %v3380
        %4663 = vmatmul.mubr.bf16.gmra.mrb[0].mxu0 %v3379
        %v4664 = vpop.f32.mrb[0].mxu0
        %v4665 = vadd.f32 %v4568, %v4664
        %v4666 = vpop.f32.mrb[0].mxu0
        %v4667 = vpop.f32.mrb[0].mxu0
        %v4668 = vadd.f32 %v4571, %v4667
        %v4669 = vpop.f32.mrb[0].mxu0
        %4670 = vmatprep.mubr.bf16.mxu0 %v3396
        %4671 = vmatmul.mubr.bf16.gmra.mrb[0].mxu0 %v3395
        %v4672 = vpop.f32.mrb[0].mxu0
        %v4673 = vadd.f32 %v4576, %v4672
        %v4674 = vpop.f32.mrb[0].mxu0
        %v4675 = vpop.f32.mrb[0].mxu0
        %v4676 = vadd.f32 %v4579, %v4675
        %v4677 = vpop.f32.mrb[0].mxu0
        %4678 = vmatprep.mubr.bf16.mxu0 %v3412
        %4679 = vmatmul.mubr.bf16.gmra.mrb[0].mxu0 %v3411
        %v4680 = vpop.f32.mrb[0].mxu0
        %v4681 = vadd.f32 %v4584, %v4680
        %v4682 = vpop.f32.mrb[0].mxu0
        %v4683 = vpop.f32.mrb[0].mxu0
        %v4684 = vadd.f32 %v4587, %v4683
        %v4685 = vpop.f32.mrb[0].mxu0
        %4686 = vmatprep.mubr.bf16.mxu0 %v3428
        %4687 = vmatmul.mubr.bf16.gmra.mrb[0].mxu0 %v3427
        %v4688 = vpop.f32.mrb[0].mxu0
        %v4689 = vadd.f32 %v4592, %v4688
        %v4690 = vpop.f32.mrb[0].mxu0
        %v4691 = vpop.f32.mrb[0].mxu0
        %v4692 = vadd.f32 %v4595, %v4691
        %v4693 = vpop.f32.mrb[0].mxu0
        %4694 = vmatprep.mubr.bf16.mxu0 %v3444
        %4695 = vmatmul.mubr.bf16.gmra.mrb[0].mxu0 %v3443
        %v4696 = vpop.f32.mrb[0].mxu0
        %v4697 = vadd.f32 %v4600, %v4696
        %v4698 = vpop.f32.mrb[0].mxu0
        %v4699 = vpop.f32.mrb[0].mxu0
        %v4700 = vadd.f32 %v4603, %v4699
        %v4701 = vpop.f32.mrb[0].mxu0
        %4702 = vmatprep.mubr.bf16.mxu0 %v3460
        %4703 = vmatmul.mubr.bf16.gmra.mrb[0].mxu0 %v3459
        %v4704 = vpop.f32.mrb[0].mxu0
        %v4705 = vadd.f32 %v4608, %v4704
        %v4706 = vpop.f32.mrb[0].mxu0
        %v4707 = vpop.f32.mrb[0].mxu0
        %v4708 = vadd.f32 %v4611, %v4707
        %v4709 = vpop.f32.mrb[0].mxu0
        %4710 = vmatprep.mubr.bf16.mxu0 %v3476
        %4711 = vmatmul.mubr.bf16.gmra.mrb[0].mxu0 %v3475
        %v4712 = vpop.f32.mrb[0].mxu0
        %v4713 = vadd.f32 %v4616, %v4712
        %v4714 = vpop.f32.mrb[0].mxu0
        %v4715 = vpop.f32.mrb[0].mxu0
        %v4716 = vadd.f32 %v4619, %v4715
        %v4717 = vpop.f32.mrb[0].mxu0
        %4718 = vmatprep.mubr.bf16.mxu0 %v3492
        %4719 = vmatmul.mubr.bf16.gmra.mrb[0].mxu0 %v3491
        %v4720 = vpop.f32.mrb[0].mxu0
        %v4721 = vadd.f32 %v4624, %v4720
        %v4722 = vpop.f32.mrb[0].mxu0
        %v4723 = vpop.f32.mrb[0].mxu0
        %v4724 = vadd.f32 %v4627, %v4723
        %v4725 = vpop.f32.mrb[0].mxu0
        %4726 = vdwg.mxu0
        %4727 = vmatprep.subr.bf16.mxu0 0
        %4728 = vmatpush1.bf16.msra.mxu0 %v4309
        %4729 = vmatprep.subr.bf16.mxu0 0
        %4730 = vmatpush1.bf16.msra.mxu0 %v4310
        %4731 = vmatprep.subr.bf16.mxu0 0
        %4732 = vmatpush1.bf16.msra.mxu0 %v4311
        %4733 = vmatprep.subr.bf16.mxu0 0
        %4734 = vmatpush1.bf16.msra.mxu0 %v4312
        %4735 = vmatprep.subr.bf16.mxu0 0
        %4736 = vmatpush1.bf16.msra.mxu0 %v4313
        %4737 = vmatprep.subr.bf16.mxu0 0
        %4738 = vmatpush1.bf16.msra.mxu0 %v4314
        %4739 = vmatprep.subr.bf16.mxu0 0
        %4740 = vmatpush1.bf16.msra.mxu0 %v4315
        %4741 = vmatprep.subr.bf16.mxu0 0
        %4742 = vmatpush1.bf16.msra.mxu0 %v4316
        %4743 = vmatprep.subr.bf16.mxu0 0
        %4744 = vmatpush1.bf16.msra.mxu0 %v4317
        %4745 = vmatprep.subr.bf16.mxu0 0
        %4746 = vmatpush1.bf16.msra.mxu0 %v4318
        %4747 = vmatprep.subr.bf16.mxu0 0
        %4748 = vmatpush1.bf16.msra.mxu0 %v4319
        %4749 = vmatprep.subr.bf16.mxu0 0
        %4750 = vmatpush1.bf16.msra.mxu0 %v4320
        %4751 = vmatprep.subr.bf16.mxu0 0
        %4752 = vmatpush1.bf16.msra.mxu0 %v4321
        %4753 = vmatprep.subr.bf16.mxu0 0
        %4754 = vmatpush1.bf16.msra.mxu0 %v4322
        %4755 = vmatprep.subr.bf16.mxu0 0
        %4756 = vmatpush1.bf16.msra.mxu0 %v4323
        %4757 = vmatprep.subr.bf16.mxu0 0
        %4758 = vmatpush1.bf16.msra.mxu0 %v4324
        %4759 = vmatprep.mubr.bf16.mxu0 %v3382
        %4760 = vmatmul.mubr.bf16.gmra.mrb[0].mxu0 %v3381
        %v4761 = vpop.f32.mrb[0].mxu0
        %v4762 = vadd.f32 %v4665, %v4761
        %v4763 = vpop.f32.mrb[0].mxu0
        %v4764 = vpop.f32.mrb[0].mxu0
        %v4765 = vadd.f32 %v4668, %v4764
        %v4766 = vpop.f32.mrb[0].mxu0
        %4767 = vmatprep.mubr.bf16.mxu0 %v3398
        %4768 = vmatmul.mubr.bf16.gmra.mrb[0].mxu0 %v3397
        %v4769 = vpop.f32.mrb[0].mxu0
        %v4770 = vadd.f32 %v4673, %v4769
        %v4771 = vpop.f32.mrb[0].mxu0
        %v4772 = vpop.f32.mrb[0].mxu0
        %v4773 = vadd.f32 %v4676, %v4772
        %v4774 = vpop.f32.mrb[0].mxu0
        %4775 = vmatprep.mubr.bf16.mxu0 %v3414
        %4776 = vmatmul.mubr.bf16.gmra.mrb[0].mxu0 %v3413
        %v4777 = vpop.f32.mrb[0].mxu0
        %v4778 = vadd.f32 %v4681, %v4777
        %v4779 = vpop.f32.mrb[0].mxu0
        %v4780 = vpop.f32.mrb[0].mxu0
        %v4781 = vadd.f32 %v4684, %v4780
        %v4782 = vpop.f32.mrb[0].mxu0
        %4783 = vmatprep.mubr.bf16.mxu0 %v3430
        %4784 = vmatmul.mubr.bf16.gmra.mrb[0].mxu0 %v3429
        %v4785 = vpop.f32.mrb[0].mxu0
        %v4786 = vadd.f32 %v4689, %v4785
        %v4787 = vpop.f32.mrb[0].mxu0
        %v4788 = vpop.f32.mrb[0].mxu0
        %v4789 = vadd.f32 %v4692, %v4788
        %v4790 = vpop.f32.mrb[0].mxu0
        %4791 = vmatprep.mubr.bf16.mxu0 %v3446
        %4792 = vmatmul.mubr.bf16.gmra.mrb[0].mxu0 %v3445
        %v4793 = vpop.f32.mrb[0].mxu0
        %v4794 = vadd.f32 %v4697, %v4793
        %v4795 = vpop.f32.mrb[0].mxu0
        %v4796 = vpop.f32.mrb[0].mxu0
        %v4797 = vadd.f32 %v4700, %v4796
        %v4798 = vpop.f32.mrb[0].mxu0
        %4799 = vmatprep.mubr.bf16.mxu0 %v3462
        %4800 = vmatmul.mubr.bf16.gmra.mrb[0].mxu0 %v3461
        %v4801 = vpop.f32.mrb[0].mxu0
        %v4802 = vadd.f32 %v4705, %v4801
        %v4803 = vpop.f32.mrb[0].mxu0
        %v4804 = vpop.f32.mrb[0].mxu0
        %v4805 = vadd.f32 %v4708, %v4804
        %v4806 = vpop.f32.mrb[0].mxu0
        %4807 = vmatprep.mubr.bf16.mxu0 %v3478
        %4808 = vmatmul.mubr.bf16.gmra.mrb[0].mxu0 %v3477
        %v4809 = vpop.f32.mrb[0].mxu0
        %v4810 = vadd.f32 %v4713, %v4809
        %v4811 = vpop.f32.mrb[0].mxu0
        %v4812 = vpop.f32.mrb[0].mxu0
        %v4813 = vadd.f32 %v4716, %v4812
        %v4814 = vpop.f32.mrb[0].mxu0
        %4815 = vmatprep.mubr.bf16.mxu0 %v3494
        %4816 = vmatmul.mubr.bf16.gmra.mrb[0].mxu0 %v3493
        %v4817 = vpop.f32.mrb[0].mxu0
        %v4818 = vadd.f32 %v4721, %v4817
        %v4819 = vpop.f32.mrb[0].mxu0
        %v4820 = vpop.f32.mrb[0].mxu0
        %v4821 = vadd.f32 %v4724, %v4820
        %v4822 = vpop.f32.mrb[0].mxu0
        %4823 = vdwg.mxu0
        %4824 = vmatprep.subr.bf16.mxu0 0
        %4825 = vmatpush1.bf16.msra.mxu0 %v4325
        %4826 = vmatprep.subr.bf16.mxu0 0
        %4827 = vmatpush1.bf16.msra.mxu0 %v4326
        %4828 = vmatprep.subr.bf16.mxu0 0
        %4829 = vmatpush1.bf16.msra.mxu0 %v4327
        %4830 = vmatprep.subr.bf16.mxu0 0
        %4831 = vmatpush1.bf16.msra.mxu0 %v4328
        %4832 = vmatprep.subr.bf16.mxu0 0
        %4833 = vmatpush1.bf16.msra.mxu0 %v4329
        %4834 = vmatprep.subr.bf16.mxu0 0
        %4835 = vmatpush1.bf16.msra.mxu0 %v4330
        %4836 = vmatprep.subr.bf16.mxu0 0
        %4837 = vmatpush1.bf16.msra.mxu0 %v4331
        %4838 = vmatprep.subr.bf16.mxu0 0
        %4839 = vmatpush1.bf16.msra.mxu0 %v4332
        %4840 = vmatprep.subr.bf16.mxu0 0
        %4841 = vmatpush1.bf16.msra.mxu0 %v4333
        %4842 = vmatprep.subr.bf16.mxu0 0
        %4843 = vmatpush1.bf16.msra.mxu0 %v4334
        %4844 = vmatprep.subr.bf16.mxu0 0
        %4845 = vmatpush1.bf16.msra.mxu0 %v4335
        %4846 = vmatprep.subr.bf16.mxu0 0
        %4847 = vmatpush1.bf16.msra.mxu0 %v4336
        %4848 = vmatprep.subr.bf16.mxu0 0
        %4849 = vmatpush1.bf16.msra.mxu0 %v4337
        %4850 = vmatprep.subr.bf16.mxu0 0
        %4851 = vmatpush1.bf16.msra.mxu0 %v4338
        %4852 = vmatprep.subr.bf16.mxu0 0
        %4853 = vmatpush1.bf16.msra.mxu0 %v4339
        %4854 = vmatprep.subr.bf16.mxu0 0
        %4855 = vmatpush1.bf16.msra.mxu0 %v4340
        %4856 = vmatprep.mubr.bf16.mxu0 %v3384
        %4857 = vmatmul.mubr.bf16.gmra.mrb[0].mxu0 %v3383
        %v4858 = vpop.f32.mrb[0].mxu0
        %v4859 = vadd.f32 %v4762, %v4858
        %v4860 = vpop.f32.mrb[0].mxu0
        %v4861 = vpop.f32.mrb[0].mxu0
        %v4862 = vadd.f32 %v4765, %v4861
        %v4863 = vpop.f32.mrb[0].mxu0
        %4864 = vmatprep.mubr.bf16.mxu0 %v3400
        %4865 = vmatmul.mubr.bf16.gmra.mrb[0].mxu0 %v3399
        %v4866 = vpop.f32.mrb[0].mxu0
        %v4867 = vadd.f32 %v4770, %v4866
        %v4868 = vpop.f32.mrb[0].mxu0
        %v4869 = vpop.f32.mrb[0].mxu0
        %v4870 = vadd.f32 %v4773, %v4869
        %v4871 = vpop.f32.mrb[0].mxu0
        %4872 = vmatprep.mubr.bf16.mxu0 %v3416
        %4873 = vmatmul.mubr.bf16.gmra.mrb[0].mxu0 %v3415
        %v4874 = vpop.f32.mrb[0].mxu0
        %v4875 = vadd.f32 %v4778, %v4874
        %v4876 = vpop.f32.mrb[0].mxu0
        %v4877 = vpop.f32.mrb[0].mxu0
        %v4878 = vadd.f32 %v4781, %v4877
        %v4879 = vpop.f32.mrb[0].mxu0
        %4880 = vmatprep.mubr.bf16.mxu0 %v3432
        %4881 = vmatmul.mubr.bf16.gmra.mrb[0].mxu0 %v3431
        %v4882 = vpop.f32.mrb[0].mxu0
        %v4883 = vadd.f32 %v4786, %v4882
        %v4884 = vpop.f32.mrb[0].mxu0
        %v4885 = vpop.f32.mrb[0].mxu0
        %v4886 = vadd.f32 %v4789, %v4885
        %v4887 = vpop.f32.mrb[0].mxu0
        %4888 = vmatprep.mubr.bf16.mxu0 %v3448
        %4889 = vmatmul.mubr.bf16.gmra.mrb[0].mxu0 %v3447
        %v4890 = vpop.f32.mrb[0].mxu0
        %v4891 = vadd.f32 %v4794, %v4890
        %v4892 = vpop.f32.mrb[0].mxu0
        %v4893 = vpop.f32.mrb[0].mxu0
        %v4894 = vadd.f32 %v4797, %v4893
        %v4895 = vpop.f32.mrb[0].mxu0
        %4896 = vmatprep.mubr.bf16.mxu0 %v3464
        %4897 = vmatmul.mubr.bf16.gmra.mrb[0].mxu0 %v3463
        %v4898 = vpop.f32.mrb[0].mxu0
        %v4899 = vadd.f32 %v4802, %v4898
        %v4900 = vpop.f32.mrb[0].mxu0
        %v4901 = vpop.f32.mrb[0].mxu0
        %v4902 = vadd.f32 %v4805, %v4901
        %v4903 = vpop.f32.mrb[0].mxu0
        %4904 = vmatprep.mubr.bf16.mxu0 %v3480
        %4905 = vmatmul.mubr.bf16.gmra.mrb[0].mxu0 %v3479
        %v4906 = vpop.f32.mrb[0].mxu0
        %v4907 = vadd.f32 %v4810, %v4906
        %v4908 = vpop.f32.mrb[0].mxu0
        %v4909 = vpop.f32.mrb[0].mxu0
        %v4910 = vadd.f32 %v4813, %v4909
        %v4911 = vpop.f32.mrb[0].mxu0
        %4912 = vmatprep.mubr.bf16.mxu0 %v3496
        %4913 = vmatmul.mubr.bf16.gmra.mrb[0].mxu0 %v3495
        %v4914 = vpop.f32.mrb[0].mxu0
        %v4915 = vadd.f32 %v4818, %v4914
        %v4916 = vpop.f32.mrb[0].mxu0
        %v4917 = vpop.f32.mrb[0].mxu0
        %v4918 = vadd.f32 %v4821, %v4917
        %v4919 = vpop.f32.mrb[0].mxu0
        %4920 = vdwg.mxu0
        %4921 = vmatprep.subr.bf16.mxu0 0
        %4922 = vmatpush1.bf16.msra.mxu0 %v4341
        %4923 = vmatprep.subr.bf16.mxu0 0
        %4924 = vmatpush1.bf16.msra.mxu0 %v4342
        %4925 = vmatprep.subr.bf16.mxu0 0
        %4926 = vmatpush1.bf16.msra.mxu0 %v4343
        %4927 = vmatprep.subr.bf16.mxu0 0
        %4928 = vmatpush1.bf16.msra.mxu0 %v4344
        %4929 = vmatprep.subr.bf16.mxu0 0
        %4930 = vmatpush1.bf16.msra.mxu0 %v4345
        %4931 = vmatprep.subr.bf16.mxu0 0
        %4932 = vmatpush1.bf16.msra.mxu0 %v4346
        %4933 = vmatprep.subr.bf16.mxu0 0
        %4934 = vmatpush1.bf16.msra.mxu0 %v4347
        %4935 = vmatprep.subr.bf16.mxu0 0
        %4936 = vmatpush1.bf16.msra.mxu0 %v4348
        %4937 = vmatprep.subr.bf16.mxu0 0
        %4938 = vmatpush1.bf16.msra.mxu0 %v4349
        %4939 = vmatprep.subr.bf16.mxu0 0
        %4940 = vmatpush1.bf16.msra.mxu0 %v4350
        %4941 = vmatprep.subr.bf16.mxu0 0
        %4942 = vmatpush1.bf16.msra.mxu0 %v4351
        %4943 = vmatprep.subr.bf16.mxu0 0
        %4944 = vmatpush1.bf16.msra.mxu0 %v4352
        %4945 = vmatprep.subr.bf16.mxu0 0
        %4946 = vmatpush1.bf16.msra.mxu0 %v4353
        %4947 = vmatprep.subr.bf16.mxu0 0
        %4948 = vmatpush1.bf16.msra.mxu0 %v4354
        %4949 = vmatprep.subr.bf16.mxu0 0
        %4950 = vmatpush1.bf16.msra.mxu0 %v4355
        %4951 = vmatprep.subr.bf16.mxu0 0
        %4952 = vmatpush1.bf16.msra.mxu0 %v4356
        %4953 = vmatprep.mubr.bf16.mxu0 %v3386
        %4954 = vmatmul.mubr.bf16.gmra.mrb[0].mxu0 %v3385
        %v4955 = vpop.f32.mrb[0].mxu0
        %v4956 = vadd.f32 %v4859, %v4955
        %v4957 = vpop.f32.mrb[0].mxu0
        %v4958 = vpop.f32.mrb[0].mxu0
        %v4959 = vadd.f32 %v4862, %v4958
        %v4960 = vpop.f32.mrb[0].mxu0
        %4961 = vmatprep.mubr.bf16.mxu0 %v3402
        %4962 = vmatmul.mubr.bf16.gmra.mrb[0].mxu0 %v3401
        %v4963 = vpop.f32.mrb[0].mxu0
        %v4964 = vadd.f32 %v4867, %v4963
        %v4965 = vpop.f32.mrb[0].mxu0
        %v4966 = vpop.f32.mrb[0].mxu0
        %v4967 = vadd.f32 %v4870, %v4966
        %v4968 = vpop.f32.mrb[0].mxu0
        %4969 = vmatprep.mubr.bf16.mxu0 %v3418
        %4970 = vmatmul.mubr.bf16.gmra.mrb[0].mxu0 %v3417
        %v4971 = vpop.f32.mrb[0].mxu0
        %v4972 = vadd.f32 %v4875, %v4971
        %v4973 = vpop.f32.mrb[0].mxu0
        %v4974 = vpop.f32.mrb[0].mxu0
        %v4975 = vadd.f32 %v4878, %v4974
        %v4976 = vpop.f32.mrb[0].mxu0
        %4977 = vmatprep.mubr.bf16.mxu0 %v3434
        %4978 = vmatmul.mubr.bf16.gmra.mrb[0].mxu0 %v3433
        %v4979 = vpop.f32.mrb[0].mxu0
        %v4980 = vadd.f32 %v4883, %v4979
        %v4981 = vpop.f32.mrb[0].mxu0
        %v4982 = vpop.f32.mrb[0].mxu0
        %v4983 = vadd.f32 %v4886, %v4982
        %v4984 = vpop.f32.mrb[0].mxu0
        %4985 = vmatprep.mubr.bf16.mxu0 %v3450
        %4986 = vmatmul.mubr.bf16.gmra.mrb[0].mxu0 %v3449
        %v4987 = vpop.f32.mrb[0].mxu0
        %v4988 = vadd.f32 %v4891, %v4987
        %v4989 = vpop.f32.mrb[0].mxu0
        %v4990 = vpop.f32.mrb[0].mxu0
        %v4991 = vadd.f32 %v4894, %v4990
        %v4992 = vpop.f32.mrb[0].mxu0
        %4993 = vmatprep.mubr.bf16.mxu0 %v3466
        %4994 = vmatmul.mubr.bf16.gmra.mrb[0].mxu0 %v3465
        %v4995 = vpop.f32.mrb[0].mxu0
        %v4996 = vadd.f32 %v4899, %v4995
        %v4997 = vpop.f32.mrb[0].mxu0
        %v4998 = vpop.f32.mrb[0].mxu0
        %v4999 = vadd.f32 %v4902, %v4998
        %v5000 = vpop.f32.mrb[0].mxu0
        %5001 = vmatprep.mubr.bf16.mxu0 %v3482
        %5002 = vmatmul.mubr.bf16.gmra.mrb[0].mxu0 %v3481
        %v5003 = vpop.f32.mrb[0].mxu0
        %v5004 = vadd.f32 %v4907, %v5003
        %v5005 = vpop.f32.mrb[0].mxu0
        %v5006 = vpop.f32.mrb[0].mxu0
        %v5007 = vadd.f32 %v4910, %v5006
        %v5008 = vpop.f32.mrb[0].mxu0
        %5009 = vmatprep.mubr.bf16.mxu0 %v3498
        %5010 = vmatmul.mubr.bf16.gmra.mrb[0].mxu0 %v3497
        %v5011 = vpop.f32.mrb[0].mxu0
        %v5012 = vadd.f32 %v4915, %v5011
        %v5013 = vpop.f32.mrb[0].mxu0
        %v5014 = vpop.f32.mrb[0].mxu0
        %v5015 = vadd.f32 %v4918, %v5014
        %v5016 = vpop.f32.mrb[0].mxu0
        %5017 = vdwg.mxu0
        %5018 = vmatprep.subr.bf16.mxu0 0
        %5019 = vmatpush1.bf16.msra.mxu0 %v4357
        %5020 = vmatprep.subr.bf16.mxu0 0
        %5021 = vmatpush1.bf16.msra.mxu0 %v4358
        %5022 = vmatprep.subr.bf16.mxu0 0
        %5023 = vmatpush1.bf16.msra.mxu0 %v4359
        %5024 = vmatprep.subr.bf16.mxu0 0
        %5025 = vmatpush1.bf16.msra.mxu0 %v4360
        %5026 = vmatprep.subr.bf16.mxu0 0
        %5027 = vmatpush1.bf16.msra.mxu0 %v4361
        %5028 = vmatprep.subr.bf16.mxu0 0
        %5029 = vmatpush1.bf16.msra.mxu0 %v4362
        %5030 = vmatprep.subr.bf16.mxu0 0
        %5031 = vmatpush1.bf16.msra.mxu0 %v4363
        %5032 = vmatprep.subr.bf16.mxu0 0
        %5033 = vmatpush1.bf16.msra.mxu0 %v4364
        %5034 = vmatprep.subr.bf16.mxu0 0
        %5035 = vmatpush1.bf16.msra.mxu0 %v4365
        %5036 = vmatprep.subr.bf16.mxu0 0
        %5037 = vmatpush1.bf16.msra.mxu0 %v4366
        %5038 = vmatprep.subr.bf16.mxu0 0
        %5039 = vmatpush1.bf16.msra.mxu0 %v4367
        %5040 = vmatprep.subr.bf16.mxu0 0
        %5041 = vmatpush1.bf16.msra.mxu0 %v4368
        %5042 = vmatprep.subr.bf16.mxu0 0
        %5043 = vmatpush1.bf16.msra.mxu0 %v4369
        %5044 = vmatprep.subr.bf16.mxu0 0
        %5045 = vmatpush1.bf16.msra.mxu0 %v4370
        %5046 = vmatprep.subr.bf16.mxu0 0
        %5047 = vmatpush1.bf16.msra.mxu0 %v4371
        %5048 = vmatprep.subr.bf16.mxu0 0
        %5049 = vmatpush1.bf16.msra.mxu0 %v4372
        %5050 = vmatprep.mubr.bf16.mxu0 %v3388
        %5051 = vmatmul.mubr.bf16.gmra.mrb[0].mxu0 %v3387
        %v5052 = vpop.f32.mrb[0].mxu0
        %v5053 = vadd.f32 %v4956, %v5052
        %v5054 = vpop.f32.mrb[0].mxu0
        %v5055 = vpop.f32.mrb[0].mxu0
        %v5056 = vadd.f32 %v4959, %v5055
        %v5057 = vpop.f32.mrb[0].mxu0
        %5058 = vmatprep.mubr.bf16.mxu0 %v3404
        %5059 = vmatmul.mubr.bf16.gmra.mrb[0].mxu0 %v3403
        %v5060 = vpop.f32.mrb[0].mxu0
        %v5061 = vadd.f32 %v4964, %v5060
        %v5062 = vpop.f32.mrb[0].mxu0
        %v5063 = vpop.f32.mrb[0].mxu0
        %v5064 = vadd.f32 %v4967, %v5063
        %v5065 = vpop.f32.mrb[0].mxu0
        %5066 = vmatprep.mubr.bf16.mxu0 %v3420
        %5067 = vmatmul.mubr.bf16.gmra.mrb[0].mxu0 %v3419
        %v5068 = vpop.f32.mrb[0].mxu0
        %v5069 = vadd.f32 %v4972, %v5068
        %v5070 = vpop.f32.mrb[0].mxu0
        %v5071 = vpop.f32.mrb[0].mxu0
        %v5072 = vadd.f32 %v4975, %v5071
        %v5073 = vpop.f32.mrb[0].mxu0
        %5074 = vmatprep.mubr.bf16.mxu0 %v3436
        %5075 = vmatmul.mubr.bf16.gmra.mrb[0].mxu0 %v3435
        %v5076 = vpop.f32.mrb[0].mxu0
        %v5077 = vadd.f32 %v4980, %v5076
        %v5078 = vpop.f32.mrb[0].mxu0
        %v5079 = vpop.f32.mrb[0].mxu0
        %v5080 = vadd.f32 %v4983, %v5079
        %v5081 = vpop.f32.mrb[0].mxu0
        %5082 = vmatprep.mubr.bf16.mxu0 %v3452
        %5083 = vmatmul.mubr.bf16.gmra.mrb[0].mxu0 %v3451
        %v5084 = vpop.f32.mrb[0].mxu0
        %v5085 = vadd.f32 %v4988, %v5084
        %v5086 = vpop.f32.mrb[0].mxu0
        %v5087 = vpop.f32.mrb[0].mxu0
        %v5088 = vadd.f32 %v4991, %v5087
        %v5089 = vpop.f32.mrb[0].mxu0
        %5090 = vmatprep.mubr.bf16.mxu0 %v3468
        %5091 = vmatmul.mubr.bf16.gmra.mrb[0].mxu0 %v3467
        %v5092 = vpop.f32.mrb[0].mxu0
        %v5093 = vadd.f32 %v4996, %v5092
        %v5094 = vpop.f32.mrb[0].mxu0
        %v5095 = vpop.f32.mrb[0].mxu0
        %v5096 = vadd.f32 %v4999, %v5095
        %v5097 = vpop.f32.mrb[0].mxu0
        %5098 = vmatprep.mubr.bf16.mxu0 %v3484
        %5099 = vmatmul.mubr.bf16.gmra.mrb[0].mxu0 %v3483
        %v5100 = vpop.f32.mrb[0].mxu0
        %v5101 = vadd.f32 %v5004, %v5100
        %v5102 = vpop.f32.mrb[0].mxu0
        %v5103 = vpop.f32.mrb[0].mxu0
        %v5104 = vadd.f32 %v5007, %v5103
        %v5105 = vpop.f32.mrb[0].mxu0
        %5106 = vmatprep.mubr.bf16.mxu0 %v3500
        %5107 = vmatmul.mubr.bf16.gmra.mrb[0].mxu0 %v3499
        %v5108 = vpop.f32.mrb[0].mxu0
        %v5109 = vadd.f32 %v5012, %v5108
        %v5110 = vpop.f32.mrb[0].mxu0
        %v5111 = vpop.f32.mrb[0].mxu0
        %v5112 = vadd.f32 %v5015, %v5111
        %v5113 = vpop.f32.mrb[0].mxu0
        %5114 = vdwg.mxu0
        %5115 = vmatprep.subr.bf16.mxu0 0
        %5116 = vmatpush1.bf16.msra.mxu0 %v4373
        %5117 = vmatprep.subr.bf16.mxu0 0
        %5118 = vmatpush1.bf16.msra.mxu0 %v4374
        %5119 = vmatprep.subr.bf16.mxu0 0
        %5120 = vmatpush1.bf16.msra.mxu0 %v4375
        %5121 = vmatprep.subr.bf16.mxu0 0
        %5122 = vmatpush1.bf16.msra.mxu0 %v4376
        %5123 = vmatprep.subr.bf16.mxu0 0
        %5124 = vmatpush1.bf16.msra.mxu0 %v4377
        %5125 = vmatprep.subr.bf16.mxu0 0
        %5126 = vmatpush1.bf16.msra.mxu0 %v4378
        %5127 = vmatprep.subr.bf16.mxu0 0
        %5128 = vmatpush1.bf16.msra.mxu0 %v4379
        %5129 = vmatprep.subr.bf16.mxu0 0
        %5130 = vmatpush1.bf16.msra.mxu0 %v4380
        %5131 = vmatprep.subr.bf16.mxu0 0
        %5132 = vmatpush1.bf16.msra.mxu0 %v4381
        %5133 = vmatprep.subr.bf16.mxu0 0
        %5134 = vmatpush1.bf16.msra.mxu0 %v4382
        %5135 = vmatprep.subr.bf16.mxu0 0
        %5136 = vmatpush1.bf16.msra.mxu0 %v4383
        %5137 = vmatprep.subr.bf16.mxu0 0
        %5138 = vmatpush1.bf16.msra.mxu0 %v4384
        %5139 = vmatprep.subr.bf16.mxu0 0
        %5140 = vmatpush1.bf16.msra.mxu0 %v4385
        %5141 = vmatprep.subr.bf16.mxu0 0
        %5142 = vmatpush1.bf16.msra.mxu0 %v4386
        %5143 = vmatprep.subr.bf16.mxu0 0
        %5144 = vmatpush1.bf16.msra.mxu0 %v4387
        %5145 = vmatprep.subr.bf16.mxu0 0
        %5146 = vmatpush1.bf16.msra.mxu0 %v4388
        %5147 = vmatprep.mubr.bf16.mxu0 %v3390
        %5148 = vmatmul.mubr.bf16.gmra.mrb[0].mxu0 %v3389
        %v5149 = vpop.f32.mrb[0].mxu0
        %v5150 = vadd.f32 %v5053, %v5149
        %v5151 = vpop.f32.mrb[0].mxu0
        %v5152 = vpop.f32.mrb[0].mxu0
        %v5153 = vadd.f32 %v5056, %v5152
        %v5154 = vpop.f32.mrb[0].mxu0
        %5155 = vmatprep.mubr.bf16.mxu0 %v3406
        %5156 = vmatmul.mubr.bf16.gmra.mrb[0].mxu0 %v3405
        %v5157 = vpop.f32.mrb[0].mxu0
        %v5158 = vadd.f32 %v5061, %v5157
        %v5159 = vpop.f32.mrb[0].mxu0
        %v5160 = vpop.f32.mrb[0].mxu0
        %v5161 = vadd.f32 %v5064, %v5160
        %v5162 = vpop.f32.mrb[0].mxu0
        %5163 = vmatprep.mubr.bf16.mxu0 %v3422
        %5164 = vmatmul.mubr.bf16.gmra.mrb[0].mxu0 %v3421
        %v5165 = vpop.f32.mrb[0].mxu0
        %v5166 = vadd.f32 %v5069, %v5165
        %v5167 = vpop.f32.mrb[0].mxu0
        %v5168 = vpop.f32.mrb[0].mxu0
        %v5169 = vadd.f32 %v5072, %v5168
        %v5170 = vpop.f32.mrb[0].mxu0
        %5171 = vmatprep.mubr.bf16.mxu0 %v3438
        %5172 = vmatmul.mubr.bf16.gmra.mrb[0].mxu0 %v3437
        %v5173 = vpop.f32.mrb[0].mxu0
        %v5174 = vadd.f32 %v5077, %v5173
        %v5175 = vpop.f32.mrb[0].mxu0
        %v5176 = vpop.f32.mrb[0].mxu0
        %v5177 = vadd.f32 %v5080, %v5176
        %v5178 = vpop.f32.mrb[0].mxu0
        %5179 = vmatprep.mubr.bf16.mxu0 %v3454
        %5180 = vmatmul.mubr.bf16.gmra.mrb[0].mxu0 %v3453
        %v5181 = vpop.f32.mrb[0].mxu0
        %v5182 = vadd.f32 %v5085, %v5181
        %v5183 = vpop.f32.mrb[0].mxu0
        %v5184 = vpop.f32.mrb[0].mxu0
        %v5185 = vadd.f32 %v5088, %v5184
        %v5186 = vpop.f32.mrb[0].mxu0
        %5187 = vmatprep.mubr.bf16.mxu0 %v3470
        %5188 = vmatmul.mubr.bf16.gmra.mrb[0].mxu0 %v3469
        %v5189 = vpop.f32.mrb[0].mxu0
        %v5190 = vadd.f32 %v5093, %v5189
        %v5191 = vpop.f32.mrb[0].mxu0
        %v5192 = vpop.f32.mrb[0].mxu0
        %v5193 = vadd.f32 %v5096, %v5192
        %v5194 = vpop.f32.mrb[0].mxu0
        %5195 = vmatprep.mubr.bf16.mxu0 %v3486
        %5196 = vmatmul.mubr.bf16.gmra.mrb[0].mxu0 %v3485
        %v5197 = vpop.f32.mrb[0].mxu0
        %v5198 = vadd.f32 %v5101, %v5197
        %v5199 = vpop.f32.mrb[0].mxu0
        %v5200 = vpop.f32.mrb[0].mxu0
        %v5201 = vadd.f32 %v5104, %v5200
        %v5202 = vpop.f32.mrb[0].mxu0
        %5203 = vmatprep.mubr.bf16.mxu0 %v3502
        %5204 = vmatmul.mubr.bf16.gmra.mrb[0].mxu0 %v3501
        %v5205 = vpop.f32.mrb[0].mxu0
        %v5206 = vadd.f32 %v5109, %v5205
        %v5207 = vpop.f32.mrb[0].mxu0
        %v5208 = vpop.f32.mrb[0].mxu0
        %v5209 = vadd.f32 %v5112, %v5208
        %v5210 = vpop.f32.mrb[0].mxu0
        %5211 = vdwg.mxu0
        %5212 = vmatprep.subr.bf16.mxu0 0
        %5213 = vmatpush1.bf16.msra.mxu0 %v4389
        %5214 = vmatprep.subr.bf16.mxu0 0
        %5215 = vmatpush1.bf16.msra.mxu0 %v4390
        %5216 = vmatprep.subr.bf16.mxu0 0
        %5217 = vmatpush1.bf16.msra.mxu0 %v4391
        %5218 = vmatprep.subr.bf16.mxu0 0
        %5219 = vmatpush1.bf16.msra.mxu0 %v4392
        %5220 = vmatprep.subr.bf16.mxu0 0
        %5221 = vmatpush1.bf16.msra.mxu0 %v4393
        %5222 = vmatprep.subr.bf16.mxu0 0
        %5223 = vmatpush1.bf16.msra.mxu0 %v4394
        %5224 = vmatprep.subr.bf16.mxu0 0
        %5225 = vmatpush1.bf16.msra.mxu0 %v4395
        %5226 = vmatprep.subr.bf16.mxu0 0
        %5227 = vmatpush1.bf16.msra.mxu0 %v4396
        %5228 = vmatprep.subr.bf16.mxu0 0
        %5229 = vmatpush1.bf16.msra.mxu0 %v4397
        %5230 = vmatprep.subr.bf16.mxu0 0
        %5231 = vmatpush1.bf16.msra.mxu0 %v4398
        %5232 = vmatprep.subr.bf16.mxu0 0
        %5233 = vmatpush1.bf16.msra.mxu0 %v4399
        %5234 = vmatprep.subr.bf16.mxu0 0
        %5235 = vmatpush1.bf16.msra.mxu0 %v4400
        %5236 = vmatprep.subr.bf16.mxu0 0
        %5237 = vmatpush1.bf16.msra.mxu0 %v4401
        %5238 = vmatprep.subr.bf16.mxu0 0
        %5239 = vmatpush1.bf16.msra.mxu0 %v4402
        %5240 = vmatprep.subr.bf16.mxu0 0
        %5241 = vmatpush1.bf16.msra.mxu0 %v4403
        %5242 = vmatprep.subr.bf16.mxu0 0
        %5243 = vmatpush1.bf16.msra.mxu0 %v4404
        %5244 = vmatprep.mubr.bf16.mxu0 %v3392
        %5245 = vmatmul.mubr.bf16.gmra.mrb[0].mxu0 %v3391
        %v5246 = vpop.f32.mrb[0].mxu0
        %v5247 = vadd.f32 %v5150, %v5246
        %v5248 = vpop.f32.mrb[0].mxu0
        %v5249 = vpop.f32.mrb[0].mxu0
        %v5250 = vadd.f32 %v5153, %v5249
        %v5251 = vpop.f32.mrb[0].mxu0
        %5252 = vmatprep.mubr.bf16.mxu0 %v3408
        %5253 = vmatmul.mubr.bf16.gmra.mrb[0].mxu0 %v3407
        %v5254 = vpop.f32.mrb[0].mxu0
        %v5255 = vadd.f32 %v5158, %v5254
        %v5256 = vpop.f32.mrb[0].mxu0
        %v5257 = vpop.f32.mrb[0].mxu0
        %v5258 = vadd.f32 %v5161, %v5257
        %v5259 = vpop.f32.mrb[0].mxu0
        %5260 = vmatprep.mubr.bf16.mxu0 %v3424
        %5261 = vmatmul.mubr.bf16.gmra.mrb[0].mxu0 %v3423
        %v5262 = vpop.f32.mrb[0].mxu0
        %v5263 = vadd.f32 %v5166, %v5262
        %v5264 = vpop.f32.mrb[0].mxu0
        %v5265 = vpop.f32.mrb[0].mxu0
        %v5266 = vadd.f32 %v5169, %v5265
        %v5267 = vpop.f32.mrb[0].mxu0
        %5268 = vmatprep.mubr.bf16.mxu0 %v3440
        %5269 = vmatmul.mubr.bf16.gmra.mrb[0].mxu0 %v3439
        %v5270 = vpop.f32.mrb[0].mxu0
        %v5271 = vadd.f32 %v5174, %v5270
        %v5272 = vpop.f32.mrb[0].mxu0
        %v5273 = vpop.f32.mrb[0].mxu0
        %v5274 = vadd.f32 %v5177, %v5273
        %v5275 = vpop.f32.mrb[0].mxu0
        %5276 = vmatprep.mubr.bf16.mxu0 %v3456
        %5277 = vmatmul.mubr.bf16.gmra.mrb[0].mxu0 %v3455
        %v5278 = vpop.f32.mrb[0].mxu0
        %v5279 = vadd.f32 %v5182, %v5278
        %v5280 = vpop.f32.mrb[0].mxu0
        %v5281 = vpop.f32.mrb[0].mxu0
        %v5282 = vadd.f32 %v5185, %v5281
        %v5283 = vpop.f32.mrb[0].mxu0
        %5284 = vmatprep.mubr.bf16.mxu0 %v3472
        %5285 = vmatmul.mubr.bf16.gmra.mrb[0].mxu0 %v3471
        %v5286 = vpop.f32.mrb[0].mxu0
        %v5287 = vadd.f32 %v5190, %v5286
        %v5288 = vpop.f32.mrb[0].mxu0
        %v5289 = vpop.f32.mrb[0].mxu0
        %v5290 = vadd.f32 %v5193, %v5289
        %v5291 = vpop.f32.mrb[0].mxu0
        %5292 = vmatprep.mubr.bf16.mxu0 %v3488
        %5293 = vmatmul.mubr.bf16.gmra.mrb[0].mxu0 %v3487
        %v5294 = vpop.f32.mrb[0].mxu0
        %v5295 = vadd.f32 %v5198, %v5294
        %v5296 = vpop.f32.mrb[0].mxu0
        %v5297 = vpop.f32.mrb[0].mxu0
        %v5298 = vadd.f32 %v5201, %v5297
        %v5299 = vpop.f32.mrb[0].mxu0
        %5300 = vmatprep.mubr.bf16.mxu0 %v3504
        %5301 = vmatmul.mubr.bf16.gmra.mrb[0].mxu0 %v3503
        %v5302 = vpop.f32.mrb[0].mxu0
        %v5303 = vadd.f32 %v5206, %v5302
        %v5304 = vpop.f32.mrb[0].mxu0
        %v5305 = vpop.f32.mrb[0].mxu0
        %v5306 = vadd.f32 %v5209, %v5305
        %v5307 = vpop.f32.mrb[0].mxu0
        %5308 = vdwg.mxu0
        %v5309 = vadd.f32 %v1341, %v5247
        %v5310 = vadd.f32 %v1342, %v5250
        %v5311 = vadd.f32 %v1343, %v5255
        %v5312 = vadd.f32 %v1344, %v5258
        %v5313 = vadd.f32 %v1345, %v5263
        %v5314 = vadd.f32 %v1346, %v5266
        %v5315 = vadd.f32 %v1347, %v5271
        %v5316 = vadd.f32 %v1348, %v5274
        %v5317 = vadd.f32 %v1349, %v5279
        %v5318 = vadd.f32 %v1350, %v5282
        %v5319 = vadd.f32 %v1351, %v5287
        %v5320 = vadd.f32 %v1352, %v5290
        %v5321 = vadd.f32 %v1353, %v5295
        %v5322 = vadd.f32 %v1354, %v5298
        %v5323 = vadd.f32 %v1355, %v5303
        %v5324 = vadd.f32 %v1356, %v5306
        %5325 = vadd.xlane.f32.xlu0 %v5309
        %v5326 = vpop.xlane.xlu0 %5325
        %5327 = vadd.xlane.f32.xlu0 %v5310
        %v5328 = vpop.xlane.xlu0 %5327
        %5329 = vadd.xlane.f32.xlu0 %v5311
        %v5330 = vpop.xlane.xlu0 %5329
        %5331 = vadd.xlane.f32.xlu0 %v5312
        %v5332 = vpop.xlane.xlu0 %5331
        %5333 = vadd.xlane.f32.xlu0 %v5313
        %v5334 = vpop.xlane.xlu0 %5333
        %5335 = vadd.xlane.f32.xlu0 %v5314
        %v5336 = vpop.xlane.xlu0 %5335
        %5337 = vadd.xlane.f32.xlu0 %v5315
        %v5338 = vpop.xlane.xlu0 %5337
        %5339 = vadd.xlane.f32.xlu0 %v5316
        %v5340 = vpop.xlane.xlu0 %5339
        %5341 = vadd.xlane.f32.xlu0 %v5317
        %v5342 = vpop.xlane.xlu0 %5341
        %5343 = vadd.xlane.f32.xlu0 %v5318
        %v5344 = vpop.xlane.xlu0 %5343
        %5345 = vadd.xlane.f32.xlu0 %v5319
        %v5346 = vpop.xlane.xlu0 %5345
        %5347 = vadd.xlane.f32.xlu0 %v5320
        %v5348 = vpop.xlane.xlu0 %5347
        %5349 = vadd.xlane.f32.xlu0 %v5321
        %v5350 = vpop.xlane.xlu0 %5349
        %5351 = vadd.xlane.f32.xlu0 %v5322
        %v5352 = vpop.xlane.xlu0 %5351
        %5353 = vadd.xlane.f32.xlu0 %v5323
        %v5354 = vpop.xlane.xlu0 %5353
        %5355 = vadd.xlane.f32.xlu0 %v5324
        %v5356 = vpop.xlane.xlu0 %5355
        %v5357 = vmul.f32 %v5326, %v775
        %v5358 = vmul.f32 %v5328, %v775
        %v5359 = vmul.f32 %v5330, %v775
        %v5360 = vmul.f32 %v5332, %v775
        %v5361 = vmul.f32 %v5334, %v775
        %v5362 = vmul.f32 %v5336, %v775
        %v5363 = vmul.f32 %v5338, %v775
        %v5364 = vmul.f32 %v5340, %v775
        %v5365 = vmul.f32 %v5342, %v775
        %v5366 = vmul.f32 %v5344, %v775
        %v5367 = vmul.f32 %v5346, %v775
        %v5368 = vmul.f32 %v5348, %v775
        %v5369 = vmul.f32 %v5350, %v775
        %v5370 = vmul.f32 %v5352, %v775
        %v5371 = vmul.f32 %v5354, %v775
        %v5372 = vmul.f32 %v5356, %v775
        %v5373 = vsub.f32 %v5309, %v5357
        %v5374 = vsub.f32 %v5310, %v5358
        %v5375 = vsub.f32 %v5311, %v5359
        %v5376 = vsub.f32 %v5312, %v5360
        %v5377 = vsub.f32 %v5313, %v5361
        %v5378 = vsub.f32 %v5314, %v5362
        %v5379 = vsub.f32 %v5315, %v5363
        %v5380 = vsub.f32 %v5316, %v5364
        %v5381 = vsub.f32 %v5317, %v5365
        %v5382 = vsub.f32 %v5318, %v5366
        %v5383 = vsub.f32 %v5319, %v5367
        %v5384 = vsub.f32 %v5320, %v5368
        %v5385 = vsub.f32 %v5321, %v5369
        %v5386 = vsub.f32 %v5322, %v5370
        %v5387 = vsub.f32 %v5323, %v5371
        %v5388 = vsub.f32 %v5324, %v5372
        %v5389 = vmul.f32 %v5373, %v5373
        %v5390 = vmul.f32 %v5374, %v5374
        %v5391 = vmul.f32 %v5375, %v5375
        %v5392 = vmul.f32 %v5376, %v5376
        %v5393 = vmul.f32 %v5377, %v5377
        %v5394 = vmul.f32 %v5378, %v5378
        %v5395 = vmul.f32 %v5379, %v5379
        %v5396 = vmul.f32 %v5380, %v5380
        %v5397 = vmul.f32 %v5381, %v5381
        %v5398 = vmul.f32 %v5382, %v5382
        %v5399 = vmul.f32 %v5383, %v5383
        %v5400 = vmul.f32 %v5384, %v5384
        %v5401 = vmul.f32 %v5385, %v5385
        %v5402 = vmul.f32 %v5386, %v5386
        %v5403 = vmul.f32 %v5387, %v5387
        %v5404 = vmul.f32 %v5388, %v5388
        %5405 = vadd.xlane.f32.xlu0 %v5389
        %v5406 = vpop.xlane.xlu0 %5405
        %5407 = vadd.xlane.f32.xlu0 %v5390
        %v5408 = vpop.xlane.xlu0 %5407
        %5409 = vadd.xlane.f32.xlu0 %v5391
        %v5410 = vpop.xlane.xlu0 %5409
        %5411 = vadd.xlane.f32.xlu0 %v5392
        %v5412 = vpop.xlane.xlu0 %5411
        %5413 = vadd.xlane.f32.xlu0 %v5393
        %v5414 = vpop.xlane.xlu0 %5413
        %5415 = vadd.xlane.f32.xlu0 %v5394
        %v5416 = vpop.xlane.xlu0 %5415
        %5417 = vadd.xlane.f32.xlu0 %v5395
        %v5418 = vpop.xlane.xlu0 %5417
        %5419 = vadd.xlane.f32.xlu0 %v5396
        %v5420 = vpop.xlane.xlu0 %5419
        %5421 = vadd.xlane.f32.xlu0 %v5397
        %v5422 = vpop.xlane.xlu0 %5421
        %5423 = vadd.xlane.f32.xlu0 %v5398
        %v5424 = vpop.xlane.xlu0 %5423
        %5425 = vadd.xlane.f32.xlu0 %v5399
        %v5426 = vpop.xlane.xlu0 %5425
        %5427 = vadd.xlane.f32.xlu0 %v5400
        %v5428 = vpop.xlane.xlu0 %5427
        %5429 = vadd.xlane.f32.xlu0 %v5401
        %v5430 = vpop.xlane.xlu0 %5429
        %5431 = vadd.xlane.f32.xlu0 %v5402
        %v5432 = vpop.xlane.xlu0 %5431
        %5433 = vadd.xlane.f32.xlu0 %v5403
        %v5434 = vpop.xlane.xlu0 %5433
        %5435 = vadd.xlane.f32.xlu0 %v5404
        %v5436 = vpop.xlane.xlu0 %5435
        %v5437 = vmul.f32 %v5406, %v775
        %v5438 = vmul.f32 %v5408, %v775
        %v5439 = vmul.f32 %v5410, %v775
        %v5440 = vmul.f32 %v5412, %v775
        %v5441 = vmul.f32 %v5414, %v775
        %v5442 = vmul.f32 %v5416, %v775
        %v5443 = vmul.f32 %v5418, %v775
        %v5444 = vmul.f32 %v5420, %v775
        %v5445 = vmul.f32 %v5422, %v775
        %v5446 = vmul.f32 %v5424, %v775
        %v5447 = vmul.f32 %v5426, %v775
        %v5448 = vmul.f32 %v5428, %v775
        %v5449 = vmul.f32 %v5430, %v775
        %v5450 = vmul.f32 %v5432, %v775
        %v5451 = vmul.f32 %v5434, %v775
        %v5452 = vmul.f32 %v5436, %v775
        %v5453 = vadd.f32 %v5437, 1e-05
        %v5454 = vadd.f32 %v5438, 1e-05
        %v5455 = vadd.f32 %v5439, 1e-05
        %v5456 = vadd.f32 %v5440, 1e-05
        %v5457 = vadd.f32 %v5441, 1e-05
        %v5458 = vadd.f32 %v5442, 1e-05
        %v5459 = vadd.f32 %v5443, 1e-05
        %v5460 = vadd.f32 %v5444, 1e-05
        %v5461 = vadd.f32 %v5445, 1e-05
        %v5462 = vadd.f32 %v5446, 1e-05
        %v5463 = vadd.f32 %v5447, 1e-05
        %v5464 = vadd.f32 %v5448, 1e-05
        %v5465 = vadd.f32 %v5449, 1e-05
        %v5466 = vadd.f32 %v5450, 1e-05
        %v5467 = vadd.f32 %v5451, 1e-05
        %v5468 = vadd.f32 %v5452, 1e-05
        %v5469 = vrsqrt.pop %v5453
        %v5470 = vrsqrt.pop %v5454
        %v5471 = vrsqrt.pop %v5455
        %v5472 = vrsqrt.pop %v5456
        %v5473 = vrsqrt.pop %v5457
        %v5474 = vrsqrt.pop %v5458
        %v5475 = vrsqrt.pop %v5459
        %v5476 = vrsqrt.pop %v5460
        %v5477 = vrsqrt.pop %v5461
        %v5478 = vrsqrt.pop %v5462
        %v5479 = vrsqrt.pop %v5463
        %v5480 = vrsqrt.pop %v5464
        %v5481 = vrsqrt.pop %v5465
        %v5482 = vrsqrt.pop %v5466
        %v5483 = vrsqrt.pop %v5467
        %v5484 = vrsqrt.pop %v5468
        %v5485 = vmul.f32 %v5373, %v5469
        %v5486 = vmul.f32 %v5374, %v5470
        %v5487 = vmul.f32 %v5375, %v5471
        %v5488 = vmul.f32 %v5376, %v5472
        %v5489 = vmul.f32 %v5377, %v5473
        %v5490 = vmul.f32 %v5378, %v5474
        %v5491 = vmul.f32 %v5379, %v5475
        %v5492 = vmul.f32 %v5380, %v5476
        %v5493 = vmul.f32 %v5381, %v5477
        %v5494 = vmul.f32 %v5382, %v5478
        %v5495 = vmul.f32 %v5383, %v5479
        %v5496 = vmul.f32 %v5384, %v5480
        %v5497 = vmul.f32 %v5385, %v5481
        %v5498 = vmul.f32 %v5386, %v5482
        %v5499 = vmul.f32 %v5387, %v5483
        %v5500 = vmul.f32 %v5388, %v5484
        %v5501 = vlaneseq
        %v5502 = vshrl.u32 %v5501, 7
        %v5503 = vsub.s32 0, %v5502
        %v5504 = vrot.slane %v395, %v5503
        %v5505 = vmul.f32 %v5485, %v5504
        %v5506 = vmul.f32 %v5486, %v5504
        %v5507 = vmul.f32 %v5487, %v5504
        %v5508 = vmul.f32 %v5488, %v5504
        %v5509 = vmul.f32 %v5489, %v5504
        %v5510 = vmul.f32 %v5490, %v5504
        %v5511 = vmul.f32 %v5491, %v5504
        %v5512 = vmul.f32 %v5492, %v5504
        %v5513 = vmul.f32 %v5493, %v5504
        %v5514 = vmul.f32 %v5494, %v5504
        %v5515 = vmul.f32 %v5495, %v5504
        %v5516 = vmul.f32 %v5496, %v5504
        %v5517 = vmul.f32 %v5497, %v5504
        %v5518 = vmul.f32 %v5498, %v5504
        %v5519 = vmul.f32 %v5499, %v5504
        %v5520 = vmul.f32 %v5500, %v5504
        %v5521 = vlaneseq
        %v5522 = vshrl.u32 %v5521, 7
        %v5523 = vsub.s32 1, %v5522
        %v5524 = vrot.slane %v395, %v5523
        %v5525 = vadd.f32 %v5505, %v5524
        %v5526 = vadd.f32 %v5506, %v5524
        %v5527 = vadd.f32 %v5507, %v5524
        %v5528 = vadd.f32 %v5508, %v5524
        %v5529 = vadd.f32 %v5509, %v5524
        %v5530 = vadd.f32 %v5510, %v5524
        %v5531 = vadd.f32 %v5511, %v5524
        %v5532 = vadd.f32 %v5512, %v5524
        %v5533 = vadd.f32 %v5513, %v5524
        %v5534 = vadd.f32 %v5514, %v5524
        %v5535 = vadd.f32 %v5515, %v5524
        %v5536 = vadd.f32 %v5516, %v5524
        %v5537 = vadd.f32 %v5517, %v5524
        %v5538 = vadd.f32 %v5518, %v5524
        %v5539 = vadd.f32 %v5519, %v5524
        %v5540 = vadd.f32 %v5520, %v5524
        %v5541 = vpack.c.bf16 %v5526, %v5525
        %v5542 = vpack.c.bf16 %v5528, %v5527
        %v5543 = vpack.c.bf16 %v5530, %v5529
        %v5544 = vpack.c.bf16 %v5532, %v5531
        %v5545 = vpack.c.bf16 %v5534, %v5533
        %v5546 = vpack.c.bf16 %v5536, %v5535
        %v5547 = vpack.c.bf16 %v5538, %v5537
        %v5548 = vpack.c.bf16 %v5540, %v5539
        %v5549 = vld [vmem:[%s6] sm:$0xf]
        %v5550 = vld [vmem:[%s6 + $0x4] sm:$0xf]
        %v5551 = vld [vmem:[%s6 + $0x8] sm:$0xf]
        %v5552 = vld [vmem:[%s6 + $0xc] sm:$0xf]
        %v5553 = vld [vmem:[%s6 + $0x10] sm:$0xf]
        %v5554 = vld [vmem:[%s6 + $0x14] sm:$0xf]
        %v5555 = vld [vmem:[%s6 + $0x18] sm:$0xf]
        %v5556 = vld [vmem:[%s6 + $0x1c] sm:$0xf]
        %v5557 = vld [vmem:[%s6 + $0x20] sm:$0xf]
        %v5558 = vld [vmem:[%s6 + $0x24] sm:$0xf]
        %v5559 = vld [vmem:[%s6 + $0x28] sm:$0xf]
        %v5560 = vld [vmem:[%s6 + $0x2c] sm:$0xf]
        %v5561 = vld [vmem:[%s6 + $0x30] sm:$0xf]
        %v5562 = vld [vmem:[%s6 + $0x34] sm:$0xf]
        %v5563 = vld [vmem:[%s6 + $0x38] sm:$0xf]
        %v5564 = vld [vmem:[%s6 + $0x3c] sm:$0xf]
        %v5565 = vld [vmem:[%s9] sm:$0x1]
        %v5567 = vlaneseq
        %v5568 = vshrl.u32 %v5567, 7
        %v5569 = vsub.s32 0, %v5568
        %v5570 = vrot.slane %v5565, %v5569
        %v5588 = vunpack.c.l.b16 %v5549
        %v5589 = vunpack.c.l.b16 %v5550
        %v5590 = vunpack.c.l.b16 %v5551
        %v5591 = vunpack.c.l.b16 %v5552
        %v5592 = vunpack.c.l.b16 %v5553
        %v5593 = vunpack.c.l.b16 %v5554
        %v5594 = vunpack.c.l.b16 %v5555
        %v5595 = vunpack.c.l.b16 %v5556
        %v5596 = vunpack.c.l.b16 %v5557
        %v5597 = vunpack.c.l.b16 %v5558
        %v5598 = vunpack.c.l.b16 %v5559
        %v5599 = vunpack.c.l.b16 %v5560
        %v5600 = vunpack.c.l.b16 %v5561
        %v5601 = vunpack.c.l.b16 %v5562
        %v5602 = vunpack.c.l.b16 %v5563
        %v5603 = vunpack.c.l.b16 %v5564
        %v5604 = vpack.c.b16 %v5589, %v5588
        %v5605 = vpack.c.b16 %v5591, %v5590
        %v5606 = vpack.c.b16 %v5593, %v5592
        %v5607 = vpack.c.b16 %v5595, %v5594
        %v5608 = vpack.c.b16 %v5597, %v5596
        %v5609 = vpack.c.b16 %v5599, %v5598
        %v5610 = vpack.c.b16 %v5601, %v5600
        %v5611 = vpack.c.b16 %v5603, %v5602
        %5620 = vmatprep.subr.bf16.mxu0 0
        %5621 = vmatpush1.bf16.msra.mxu0 %v5604
        %5622 = vmatprep.subr.bf16.mxu0 0
        %5623 = vmatpush1.bf16.msra.mxu0 %v5605
        %5624 = vmatprep.subr.bf16.mxu0 0
        %5625 = vmatpush1.bf16.msra.mxu0 %v5606
        %5626 = vmatprep.subr.bf16.mxu0 0
        %5627 = vmatpush1.bf16.msra.mxu0 %v5607
        %5628 = vmatprep.subr.bf16.mxu0 0
        %5629 = vmatpush1.bf16.msra.mxu0 %v5608
        %5630 = vmatprep.subr.bf16.mxu0 0
        %5631 = vmatpush1.bf16.msra.mxu0 %v5609
        %5632 = vmatprep.subr.bf16.mxu0 0
        %5633 = vmatpush1.bf16.msra.mxu0 %v5610
        %5634 = vmatprep.subr.bf16.mxu0 0
        %5635 = vmatpush1.bf16.msra.mxu0 %v5611
        %5636 = vmatprep.subr.bf16.mxu0 0
        %5637 = vmatpush1.bf16.msra.mxu0 0
        %5638 = vmatprep.subr.bf16.mxu0 0
        %5639 = vmatpush1.bf16.msra.mxu0 0
        %5640 = vmatprep.subr.bf16.mxu0 0
        %5641 = vmatpush1.bf16.msra.mxu0 0
        %5642 = vmatprep.subr.bf16.mxu0 0
        %5643 = vmatpush1.bf16.msra.mxu0 0
        %5644 = vmatprep.subr.bf16.mxu0 0
        %5645 = vmatpush1.bf16.msra.mxu0 0
        %5646 = vmatprep.subr.bf16.mxu0 0
        %5647 = vmatpush1.bf16.msra.mxu0 0
        %5648 = vmatprep.subr.bf16.mxu0 0
        %5649 = vmatpush1.bf16.msra.mxu0 0
        %5650 = vmatprep.subr.bf16.mxu0 0
        %5651 = vmatpush1.bf16.msra.mxu0 0
        %5652 = vmatprep.mubr.bf16.mxu0 0
        %5653 = vmatmul.mubr.bf16.gmra.mrb[0].mxu0 %v5541
        %v5654 = vpop.f32.mrb[0].mxu0
        %v5655 = vadd.f32 %v5570, %v5654
        %v5656 = vpop.f32.mrb[0].mxu0
        %v5657 = vpop.f32.mrb[0].mxu0
        %v5658 = vadd.f32 %v5570, %v5657
        %v5659 = vpop.f32.mrb[0].mxu0
        %5660 = vmatprep.mubr.bf16.mxu0 0
        %5661 = vmatmul.mubr.bf16.gmra.mrb[0].mxu0 %v5542
        %v5662 = vpop.f32.mrb[0].mxu0
        %v5663 = vadd.f32 %v5570, %v5662
        %v5664 = vpop.f32.mrb[0].mxu0
        %v5665 = vpop.f32.mrb[0].mxu0
        %v5666 = vadd.f32 %v5570, %v5665
        %v5667 = vpop.f32.mrb[0].mxu0
        %5668 = vmatprep.mubr.bf16.mxu0 0
        %5669 = vmatmul.mubr.bf16.gmra.mrb[0].mxu0 %v5543
        %v5670 = vpop.f32.mrb[0].mxu0
        %v5671 = vadd.f32 %v5570, %v5670
        %v5672 = vpop.f32.mrb[0].mxu0
        %v5673 = vpop.f32.mrb[0].mxu0
        %v5674 = vadd.f32 %v5570, %v5673
        %v5675 = vpop.f32.mrb[0].mxu0
        %5676 = vmatprep.mubr.bf16.mxu0 0
        %5677 = vmatmul.mubr.bf16.gmra.mrb[0].mxu0 %v5544
        %v5678 = vpop.f32.mrb[0].mxu0
        %v5679 = vadd.f32 %v5570, %v5678
        %v5680 = vpop.f32.mrb[0].mxu0
        %v5681 = vpop.f32.mrb[0].mxu0
        %v5682 = vadd.f32 %v5570, %v5681
        %v5683 = vpop.f32.mrb[0].mxu0
        %5684 = vmatprep.mubr.bf16.mxu0 0
        %5685 = vmatmul.mubr.bf16.gmra.mrb[0].mxu0 %v5545
        %v5686 = vpop.f32.mrb[0].mxu0
        %v5687 = vadd.f32 %v5570, %v5686
        %v5688 = vpop.f32.mrb[0].mxu0
        %v5689 = vpop.f32.mrb[0].mxu0
        %v5690 = vadd.f32 %v5570, %v5689
        %v5691 = vpop.f32.mrb[0].mxu0
        %5692 = vmatprep.mubr.bf16.mxu0 0
        %5693 = vmatmul.mubr.bf16.gmra.mrb[0].mxu0 %v5546
        %v5694 = vpop.f32.mrb[0].mxu0
        %v5695 = vadd.f32 %v5570, %v5694
        %v5696 = vpop.f32.mrb[0].mxu0
        %v5697 = vpop.f32.mrb[0].mxu0
        %v5698 = vadd.f32 %v5570, %v5697
        %v5699 = vpop.f32.mrb[0].mxu0
        %5700 = vmatprep.mubr.bf16.mxu0 0
        %5701 = vmatmul.mubr.bf16.gmra.mrb[0].mxu0 %v5547
        %v5702 = vpop.f32.mrb[0].mxu0
        %v5703 = vadd.f32 %v5570, %v5702
        %v5704 = vpop.f32.mrb[0].mxu0
        %v5705 = vpop.f32.mrb[0].mxu0
        %v5706 = vadd.f32 %v5570, %v5705
        %v5707 = vpop.f32.mrb[0].mxu0
        %5708 = vmatprep.mubr.bf16.mxu0 0
        %5709 = vmatmul.mubr.bf16.gmra.mrb[0].mxu0 %v5548
        %v5710 = vpop.f32.mrb[0].mxu0
        %v5711 = vadd.f32 %v5570, %v5710
        %v5712 = vpop.f32.mrb[0].mxu0
        %v5713 = vpop.f32.mrb[0].mxu0
        %v5714 = vadd.f32 %v5570, %v5713
        %v5715 = vpop.f32.mrb[0].mxu0
        %5716 = vdwg.mxu0
        %5717 = vst [vmem:[%s391] sm:$0xff] %v5655
        %5718 = vst [vmem:[%s391 + $0x8] sm:$0xff] %v5658
        %5719 = vst [vmem:[%s391 + $0x10] sm:$0xff] %v5663
        %5720 = vst [vmem:[%s391 + $0x18] sm:$0xff] %v5666
        %5721 = vst [vmem:[%s391 + $0x20] sm:$0xff] %v5671
        %5722 = vst [vmem:[%s391 + $0x28] sm:$0xff] %v5674
        %5723 = vst [vmem:[%s391 + $0x30] sm:$0xff] %v5679
        %5724 = vst [vmem:[%s391 + $0x38] sm:$0xff] %v5682
        %5725 = vst [vmem:[%s391 + $0x40] sm:$0xff] %v5687
        %5726 = vst [vmem:[%s391 + $0x48] sm:$0xff] %v5690
        %5727 = vst [vmem:[%s391 + $0x50] sm:$0xff] %v5695
        %5728 = vst [vmem:[%s391 + $0x58] sm:$0xff] %v5698
        %5729 = vst [vmem:[%s391 + $0x60] sm:$0xff] %v5703
        %5730 = vst [vmem:[%s391 + $0x68] sm:$0xff] %v5706
        %5731 = vst [vmem:[%s391 + $0x70] sm:$0xff] %v5711
        %5732 = vst [vmem:[%s391 + $0x78] sm:$0xff] %v5714
        %s5733 = smul.u32 16, %s23
        %p5734 = scmp.lt.s32.totalorder %s5733, 31
        %s5735 = scalar_select %p5734, %s5733, 31
        %s5736 = smul.addr %s5735, 8
        %s5737 = scalar_lea.vmem %s10, %s5736
        // Predicated region
        $region69: #{simple_transformer_forward.1} parent=59 // pred_check
          %p5738 = pneg %p256
        $region70: #{simple_transformer_forward.1} parent=59 // pred_check_branch
          %5740 = sbr.rel (%p5738) target = $region72
        $region71: #{simple_transformer_forward.1} parent=59 // pred_region
          %s5741 = smul.u32 16, %s23
        $region72: #{simple_transformer_forward.1} parent=59 // pred_fallthru
          _
      $region60: #{simple_transformer_forward.1} parent=5 // pred_fallthru
        _
      %p5742 = scmp.le.s32.totalorder 2, %s18
      // Predicated region
      $region73: #{simple_transformer_forward.1} parent=5 // pred_check
        %p5743 = pneg %p5742
      $region74: #{simple_transformer_forward.1} parent=5 // pred_check_branch
        %5745 = sbr.rel (%p5743) target = $region76
      $region75: #{simple_transformer_forward.1} parent=5 // pred_region
        %s5746 = ssub.s32 %s18, 2
        // Predicated region
        $region77: #{simple_transformer_forward.1} parent=75 // pred_check
          %p5747 = pneg %p262
        $region78: #{simple_transformer_forward.1} parent=75 // pred_check_branch
          %5749 = sbr.rel (%p5747) target = $region80
        $region79: #{simple_transformer_forward.1} parent=75 // pred_region
          %s5750 = smul.u32 16, %s24
          %p5751 = scmp.lt.s32.totalorder %s5750, 31
          %s5752 = scalar_select %p5751, %s5750, 31
          %s5753 = smul.addr %s5752, 8
          %s5754 = scalar_lea.vmem %s10, %s5753
        $region80: #{simple_transformer_forward.1} parent=75 // pred_fallthru
          _
      $region76: #{simple_transformer_forward.1} parent=5 // pred_fallthru
        _
    $region6: #{simple_transformer_forward.1} parent=1 // loop_footer
      %s22 = sadd.s32 1, %s18
    $region7: #{simple_transformer_forward.1} parent=1 // loop_footer_branch
      %17 = sbr.rel target = $region3
    $region8: #{simple_transformer_forward.1} parent=1 // loop_exit
      _
    %5755 = vsyncpa [#allocation3], 1
    %s5756 = scalar_lea.sflag [#allocation3], 1
    %5757 = vsyncpa %s5756, 1
    %5758 = vsyncpa [#allocation5], 1

</llo_original>
